<compile_context>
chip_gen: v7x
topology: tpu7x:2x2x1
jax: 0.10.0
libtpu: 0.0.40
codegen_flags: <defaults>
</compile_context>

<pallas_src>
import functools

import jax
import jax.numpy as jnp
from jax.experimental import pallas as pl
from jax.experimental.pallas import tpu as pltpu

VOCAB = 64        # vocab_size
EMB_DIM = 128     # emb_dim
MAX_LEN = 8       # sequence length
HEADS = 4
BATCH = 2
DEPTH = 2         # Transformer depth (fixed to 2 in the module)
LN_EPS = 1e-5     # torch.nn.LayerNorm default eps
MHD = EMB_DIM // HEADS          # multi_head_dim = 32 (module quirk)
HD = MHD // HEADS               # per-head dim after 'b n (h d) -> b h n d' = 8
SCALE = float(EMB_DIM) ** -0.5  # module uses emb_dim**-0.5 (not head_dim**-0.5)


# --------------------------------------------------------------------------
# Fused kernel: one grid step per transformer layer; embedding at step 0.
# --------------------------------------------------------------------------
def _fused_kernel(ids_ref, item_ref, pos_ref,
                  ln1g, ln1b, wqkv, bqkv, wo, bo,
                  ln2g, ln2b, w1, b1, w2, b2,
                  o_ref, x_ref, *, batch, seq, dim, heads):
    B, N, D, H = batch, seq, dim, heads
    BN = B * N
    vocab = item_ref.shape[0]
    inv_d = 1.0 / float(D)
    pid = pl.program_id(0)

    # ---- prologue (layer 0 only): one-hot embedding matmul + positional ----
    @pl.when(pid == 0)
    def _():
        ids = ids_ref[...]                                          # (BN, 1) int32
        iota = jax.lax.broadcasted_iota(jnp.int32, (BN, vocab), 1)
        one_hot = (iota == ids).astype(jnp.float32)                 # (BN, VOCAB)
        x_ref[...] = jnp.dot(one_hot, item_ref[...],
                             preferred_element_type=jnp.float32) + pos_ref[...]

    def layer_norm(v, gamma, beta):
        mu = jnp.sum(v, axis=-1, keepdims=True) * inv_d
        xc = v - mu
        var = jnp.sum(xc * xc, axis=-1, keepdims=True) * inv_d
        return xc * jax.lax.rsqrt(var + LN_EPS) * gamma + beta

    def gelu(v):                                    # exact erf-based GELU
        return 0.5 * v * (1.0 + jax.lax.erf(v * 0.7071067811865476))

    x = x_ref[...]                                                  # (BN, D)

    # ------------------------------ attention ------------------------------
    xn = layer_norm(x, ln1g[...], ln1b[...])
    qkv = jnp.dot(xn, wqkv[...],
                  preferred_element_type=jnp.float32) + bqkv[...]   # (BN, 3*MHD)

    head_outs = []
    for h in range(H):                              # static unroll: 4 heads
        qh = qkv[:, h * HD:(h + 1) * HD].reshape(B, N, HD)          # scale folded
        kh = qkv[:, MHD + h * HD:MHD + (h + 1) * HD].reshape(B, N, HD)
        vh = qkv[:, 2 * MHD + h * HD:2 * MHD + (h + 1) * HD].reshape(B, N, HD)
        sim = jnp.einsum('bid,bjd->bij', qh, kh,
                         preferred_element_type=jnp.float32)        # (B, N, N)
        p = jnp.exp(sim)         # no max-sub: |sim| << 1 with folded 1/sqrt(D)
        attn = p * pl.reciprocal(jnp.sum(p, axis=-1, keepdims=True), approx=True)
        oh = jnp.einsum('bij,bjd->bid', attn, vh,
                        preferred_element_type=jnp.float32)         # (B, N, HD)
        head_outs.append(oh.reshape(BN, HD))
    heads_cat = jnp.concatenate(head_outs, axis=-1)                 # (BN, MHD)
    x = x + jnp.dot(heads_cat, wo[...],
                    preferred_element_type=jnp.float32) + bo[...]   # residual 1

    # ----------------------------- feed-forward ----------------------------
    xn2 = layer_norm(x, ln2g[...], ln2b[...])
    h1 = jnp.dot(xn2.astype(jnp.bfloat16), w1[...],                 # bf16 weights
                 preferred_element_type=jnp.float32) + b1[...]
    h1 = gelu(h1)
    x = x + jnp.dot(h1.astype(jnp.bfloat16), w2[...],
                    preferred_element_type=jnp.float32) + b2[...]   # residual 2

    x_ref[...] = x                                                  # carry to next layer

    @pl.when(pid == pl.num_programs(0) - 1)
    def _():
        o_ref[...] = x.reshape(B, N, D)


# --------------------------------------------------------------------------
# Parameter preparation (one-time JAX glue): fold scale into Q columns,
# stack per-layer weights along a leading depth axis, cast FFN weights bf16.
# --------------------------------------------------------------------------
def prepare_params(params):
    names = ["ln1g", "ln1b", "wqkv", "bqkv", "wo", "bo",
             "ln2g", "ln2b", "w1", "b1", "w2", "b2"]
    per_layer = {n: [] for n in names}
    for (g1, be1, wqkv, bqkv, wo, bo, g2, be2, w1, b1, w2, b2) in params["layers"]:
        wqkv_s = jnp.concatenate([wqkv[:, :MHD] * SCALE, wqkv[:, MHD:]], axis=1)
        bqkv_s = jnp.concatenate([bqkv[:, :MHD] * SCALE, bqkv[:, MHD:]], axis=1)
        vals = dict(ln1g=g1, ln1b=be1, wqkv=wqkv_s, bqkv=bqkv_s, wo=wo, bo=bo,
                    ln2g=g2, ln2b=be2,
                    w1=w1.astype(jnp.bfloat16), b1=b1,
                    w2=w2.astype(jnp.bfloat16), b2=b2)
        for n in names:
            per_layer[n].append(vals[n])
    weights = [jnp.stack(per_layer[n], axis=0) for n in names]      # (+depth axis)
    item_emb = params["item_emb"]                                   # (VOCAB, D)
    pos_rows = params["pos_emb"][1:MAX_LEN + 1, :]                  # positions 1..N
    return item_emb, pos_rows, weights


def bert4rec_forward(token_ids, prepared):
    item_emb, pos_rows, weights = prepared
    B, N = token_ids.shape
    D = item_emb.shape[-1]
    BN = B * N

    ids = token_ids.reshape(BN, 1).astype(jnp.int32)                # (BN, 1)
    pos_tiled = jnp.tile(pos_rows, (B, 1))                          # (BN, D)

    kernel = functools.partial(_fused_kernel, batch=B, seq=N, dim=D, heads=HEADS)

    def const_spec(a):                   # resident across all layer steps
        return pl.BlockSpec(a.shape, lambda d, nd=a.ndim: (0,) * nd)

    def layer_spec(a):                   # depth axis sliced by the layer grid index
        rest = a.shape[1:]
        return pl.BlockSpec((None,) + rest,
                            lambda d, n=len(rest): (d,) + (0,) * n)

    in_arrays = [ids, item_emb, pos_tiled] + list(weights)
    in_specs = ([const_spec(ids), const_spec(item_emb), const_spec(pos_tiled)]
                + [layer_spec(w) for w in weights])

    return pl.pallas_call(
        kernel,
        out_shape=jax.ShapeDtypeStruct((B, N, D), jnp.float32),
        grid_spec=pltpu.PrefetchScalarGridSpec(
            num_scalar_prefetch=0,
            grid=(DEPTH,),                          # one step per layer
            in_specs=in_specs,
            out_specs=pl.BlockSpec((B, N, D), lambda d: (0, 0, 0)),
            scratch_shapes=[pltpu.VMEM((BN, D), jnp.float32)],      # carried x
        ),
        compiler_params=pltpu.CompilerParams(
            dimension_semantics=("arbitrary",),     # sequential layer dependence
            vmem_limit_bytes=16 * 1024 * 1024,
        ),
    )(*in_arrays)


# --------------------------------------------------------------------------
# Raw ("torch-layout") parameter init + pure-JAX reference for validation
# --------------------------------------------------------------------------
def init_params(key):
    D, H = EMB_DIM, HEADS
    mhd = D // H
    keys = iter(jax.random.split(key, 32))

    def nrm(shape, scale=0.02):
        return (scale * jax.random.normal(next(keys), shape)).astype(jnp.float32)

    params = {
        "item_emb": nrm((VOCAB, D), 1.0),
        "pos_emb": nrm((VOCAB, D), 1.0),
        "layers": [],
    }
    for _ in range(DEPTH):
        lp = [
            jnp.ones((1, D), jnp.float32),    # attn LayerNorm gamma
            jnp.zeros((1, D), jnp.float32),   # attn LayerNorm beta
            nrm((D, 3 * mhd)),                # to_qkv weight (in, out)
            nrm((1, 3 * mhd)),                # to_qkv bias
            nrm((mhd, D)),                    # to_out weight (in, out)
            nrm((1, D)),                      # to_out bias
            jnp.ones((1, D), jnp.float32),    # ffn LayerNorm gamma
            jnp.zeros((1, D), jnp.float32),   # ffn LayerNorm beta
            nrm((D, 4 * D)),                  # ffn Linear1 weight
            nrm((1, 4 * D)),                  # ffn Linear1 bias
            nrm((4 * D, D)),                  # ffn Linear2 weight
            nrm((1, D)),                      # ffn Linear2 bias
        ]
        params["layers"].append(lp)
    return params


def _ln_ref(x, g, b):
    mu = jnp.mean(x, axis=-1, keepdims=True)
    var = jnp.mean((x - mu) ** 2, axis=-1, keepdims=True)
    return (x - mu) * jax.lax.rsqrt(var + LN_EPS) * g + b


def bert4rec_reference(token_ids, params):
    B, N = token_ids.shape
    x = params["item_emb"][token_ids]
    x = x + params["pos_emb"][jnp.arange(1, N + 1)][None]
    for (g1, be1, wqkv, bqkv, wo, bo, g2, be2, w1, b1, w2, b2) in params["layers"]:
        xn = _ln_ref(x, g1, be1)
        qkv = xn @ wqkv + bqkv
        q, k, v = qkv[..., :MHD], qkv[..., MHD:2 * MHD], qkv[..., 2 * MHD:]

        def split(t):
            return t.reshape(B, N, HEADS, HD).transpose(0, 2, 1, 3)

        q, k, v = split(q) * SCALE, split(k), split(v)
        sim = jnp.einsum('bhid,bhjd->bhij', q, k)
        attn = jax.nn.softmax(sim, axis=-1)
        out = jnp.einsum('bhij,bhjd->bhid', attn, v)
        out = out.transpose(0, 2, 1, 3).reshape(B, N, MHD)
        x = x + (out @ wo + bo)
        xn2 = _ln_ref(x, g2, be2)
        h = jax.nn.gelu(xn2 @ w1 + b1, approximate=False)
        x = x + (h @ w2 + b2)
    return x


if __name__ == "__main__":
    key = jax.random.PRNGKey(0)
    pkey, dkey = jax.random.split(key)
    params = init_params(pkey)
    token_ids = jax.random.randint(dkey, (BATCH, MAX_LEN), 0, VOCAB, dtype=jnp.int32)

    prepared = prepare_params(params)
    out = bert4rec_forward(token_ids, prepared)
    out = jax.block_until_ready(out)

    assert out.shape == (BATCH, MAX_LEN, EMB_DIM)
    assert bool(jnp.all(jnp.isfinite(out)))

    ref = bert4rec_reference(token_ids, params)
    max_err = float(jnp.max(jnp.abs(out - ref)))
    assert max_err < 5e-2, f"mismatch vs pure-JAX reference: {max_err}"
    print("KERNEL_OK")
</pallas_src>

<mosaic_0001>
module attributes {stable_mosaic.version = 11 : i64} {
  func.func @_fused_kernel(%arg0: i32, %arg1: memref<16x1xi32, #tpu.memory_space<vmem>>, %arg2: memref<64x128xf32, #tpu.memory_space<vmem>>, %arg3: memref<16x128xf32, #tpu.memory_space<vmem>>, %arg4: memref<1x1x128xf32, #tpu.memory_space<vmem>>, %arg5: memref<1x1x128xf32, #tpu.memory_space<vmem>>, %arg6: memref<1x128x96xf32, #tpu.memory_space<vmem>>, %arg7: memref<1x1x96xf32, #tpu.memory_space<vmem>>, %arg8: memref<1x32x128xf32, #tpu.memory_space<vmem>>, %arg9: memref<1x1x128xf32, #tpu.memory_space<vmem>>, %arg10: memref<1x1x128xf32, #tpu.memory_space<vmem>>, %arg11: memref<1x1x128xf32, #tpu.memory_space<vmem>>, %arg12: memref<1x128x512xbf16, #tpu.memory_space<vmem>>, %arg13: memref<1x1x512xf32, #tpu.memory_space<vmem>>, %arg14: memref<1x512x128xbf16, #tpu.memory_space<vmem>>, %arg15: memref<1x1x128xf32, #tpu.memory_space<vmem>>, %arg16: memref<2x8x128xf32, #tpu.memory_space<vmem>>, %arg17: memref<16x128xf32, #tpu.memory_space<vmem>>) attributes {dimension_semantics = [#tpu.dimension_semantics<arbitrary>], iteration_bounds = array<i64: 2>, scalar_prefetch = 0 : i64, scratch_operands = 1 : i64, tpu.core_type = #tpu.core_type<tc>, window_params = [{pipeline_mode = #tpu.pipeline_mode<synchronous>, transform_indices = @transform_0, window_bounds = array<i64: 16, 1>}, {pipeline_mode = #tpu.pipeline_mode<synchronous>, transform_indices = @transform_1, window_bounds = array<i64: 64, 128>}, {pipeline_mode = #tpu.pipeline_mode<synchronous>, transform_indices = @transform_2, window_bounds = array<i64: 16, 128>}, {transform_indices = @transform_3, window_bounds = array<i64: 1, 1, 128>}, {transform_indices = @transform_4, window_bounds = array<i64: 1, 1, 128>}, {transform_indices = @transform_5, window_bounds = array<i64: 1, 128, 96>}, {transform_indices = @transform_6, window_bounds = array<i64: 1, 1, 96>}, {transform_indices = @transform_7, window_bounds = array<i64: 1, 32, 128>}, {transform_indices = @transform_8, window_bounds = array<i64: 1, 1, 128>}, {transform_indices = @transform_9, window_bounds = array<i64: 1, 1, 128>}, {transform_indices = @transform_10, window_bounds = array<i64: 1, 1, 128>}, {transform_indices = @transform_11, window_bounds = array<i64: 1, 128, 512>}, {transform_indices = @transform_12, window_bounds = array<i64: 1, 1, 512>}, {transform_indices = @transform_13, window_bounds = array<i64: 1, 512, 128>}, {transform_indices = @transform_14, window_bounds = array<i64: 1, 1, 128>}, {pipeline_mode = #tpu.pipeline_mode<synchronous>, transform_indices = @transform_15, window_bounds = array<i64: 2, 8, 128>}]} {
    %c0_i32 = arith.constant 0 : i32
    %0 = arith.cmpi eq, %arg0, %c0_i32 : i32
    %1 = arith.extui %0 : i1 to i32
    %c0_i32_0 = arith.constant 0 : i32
    %2 = arith.cmpi ne, %1, %c0_i32_0 : i32
    scf.if %2 {
      %c0_69 = arith.constant 0 : index
      %c0_70 = arith.constant 0 : index
      %157 = vector.load %arg1[%c0_69, %c0_70] : memref<16x1xi32, #tpu.memory_space<vmem>>, vector<16x1xi32>
      %158 = tpu.iota {dimensions = array<i32: 1>} : vector<16x64xi32>
      %159 = vector.broadcast %157 : vector<16x1xi32> to vector<16x64xi32>
      %160 = arith.cmpi eq, %158, %159 : vector<16x64xi32>
      %161 = arith.extui %160 : vector<16x64xi1> to vector<16x64xi32>
      %162 = arith.sitofp %161 : vector<16x64xi32> to vector<16x64xf32>
      %c0_71 = arith.constant 0 : index
      %c0_72 = arith.constant 0 : index
      %163 = vector.load %arg2[%c0_71, %c0_72] : memref<64x128xf32, #tpu.memory_space<vmem>>, vector<64x128xf32>
      %cst_73 = arith.constant dense<0.000000e+00> : vector<16x128xf32>
      %164 = tpu.matmul %162, %163, %cst_73 {dimension_numbers = #tpu.dot_dimension_numbers<[1], [0], [0], [1], [0, 0, 1, 1], [], []>} : vector<16x64xf32>, vector<64x128xf32>, vector<16x128xf32> -> vector<16x128xf32>
      %c0_74 = arith.constant 0 : index
      %c0_75 = arith.constant 0 : index
      %165 = vector.load %arg3[%c0_74, %c0_75] : memref<16x128xf32, #tpu.memory_space<vmem>>, vector<16x128xf32>
      %166 = arith.addf %164, %165 : vector<16x128xf32>
      %c0_76 = arith.constant 0 : index
      %c0_77 = arith.constant 0 : index
      %167 = vector.load %arg17[%c0_76, %c0_77] : memref<16x128xf32, #tpu.memory_space<vmem>>, vector<16x128xf32>
      tpu.vector_store %arg17[%c0_76, %c0_77], %166 {strides = array<i32>} : memref<16x128xf32, #tpu.memory_space<vmem>>, vector<16x128xf32>,
    } else {
    }
    %c0 = arith.constant 0 : index
    %c0_1 = arith.constant 0 : index
    %3 = vector.load %arg17[%c0, %c0_1] : memref<16x128xf32, #tpu.memory_space<vmem>>, vector<16x128xf32>
    %c0_2 = arith.constant 0 : index
    %c0_3 = arith.constant 0 : index
    %c0_4 = arith.constant 0 : index
    %4 = vector.load %arg4[%c0_2, %c0_3, %c0_4] : memref<1x1x128xf32, #tpu.memory_space<vmem>>, vector<1x1x128xf32>
    %5 = vector.shape_cast %4 : vector<1x1x128xf32> to vector<1x128xf32>
    %c0_5 = arith.constant 0 : index
    %c0_6 = arith.constant 0 : index
    %c0_7 = arith.constant 0 : index
    %6 = vector.load %arg5[%c0_5, %c0_6, %c0_7] : memref<1x1x128xf32, #tpu.memory_space<vmem>>, vector<1x1x128xf32>
    %7 = vector.shape_cast %6 : vector<1x1x128xf32> to vector<1x128xf32>
    %cst = arith.constant dense<0.000000e+00> : vector<16xf32>
    %8 = vector.multi_reduction <add>, %3, %cst [1] : vector<16x128xf32> to vector<16xf32>
    %9 = vector.shape_cast %8 : vector<16xf32> to vector<16x1xf32>
    %cst_8 = arith.constant 7.812500e-03 : f32
    %10 = vector.broadcast %cst_8 : f32 to vector<16x1xf32>
    %11 = arith.mulf %9, %10 : vector<16x1xf32>
    %12 = vector.broadcast %11 : vector<16x1xf32> to vector<16x128xf32>
    %13 = arith.subf %3, %12 : vector<16x128xf32>
    %14 = arith.mulf %13, %13 : vector<16x128xf32>
    %cst_9 = arith.constant dense<0.000000e+00> : vector<16xf32>
    %15 = vector.multi_reduction <add>, %14, %cst_9 [1] : vector<16x128xf32> to vector<16xf32>
    %16 = vector.shape_cast %15 : vector<16xf32> to vector<16x1xf32>
    %cst_10 = arith.constant 7.812500e-03 : f32
    %17 = vector.broadcast %cst_10 : f32 to vector<16x1xf32>
    %18 = arith.mulf %16, %17 : vector<16x1xf32>
    %cst_11 = arith.constant 9.99999974E-6 : f32
    %19 = vector.broadcast %cst_11 : f32 to vector<16x1xf32>
    %20 = arith.addf %18, %19 : vector<16x1xf32>
    %21 = math.rsqrt %20 : vector<16x1xf32>
    %22 = vector.broadcast %21 : vector<16x1xf32> to vector<16x128xf32>
    %23 = arith.mulf %13, %22 : vector<16x128xf32>
    %24 = vector.broadcast %5 : vector<1x128xf32> to vector<16x128xf32>
    %25 = arith.mulf %23, %24 : vector<16x128xf32>
    %26 = vector.broadcast %7 : vector<1x128xf32> to vector<16x128xf32>
    %27 = arith.addf %25, %26 : vector<16x128xf32>
    %c0_12 = arith.constant 0 : index
    %c0_13 = arith.constant 0 : index
    %c0_14 = arith.constant 0 : index
    %28 = vector.load %arg6[%c0_12, %c0_13, %c0_14] : memref<1x128x96xf32, #tpu.memory_space<vmem>>, vector<1x128x96xf32>
    %29 = vector.shape_cast %28 : vector<1x128x96xf32> to vector<128x96xf32>
    %cst_15 = arith.constant dense<0.000000e+00> : vector<16x96xf32>
    %30 = tpu.matmul %27, %29, %cst_15 {dimension_numbers = #tpu.dot_dimension_numbers<[1], [0], [0], [1], [0, 0, 1, 1], [], []>} : vector<16x128xf32>, vector<128x96xf32>, vector<16x96xf32> -> vector<16x96xf32>
    %c0_16 = arith.constant 0 : index
    %c0_17 = arith.constant 0 : index
    %c0_18 = arith.constant 0 : index
    %31 = vector.load %arg7[%c0_16, %c0_17, %c0_18] : memref<1x1x96xf32, #tpu.memory_space<vmem>>, vector<1x1x96xf32>
    %32 = vector.shape_cast %31 : vector<1x1x96xf32> to vector<1x96xf32>
    %33 = vector.broadcast %32 : vector<1x96xf32> to vector<16x96xf32>
    %34 = arith.addf %30, %33 : vector<16x96xf32>
    %35 = vector.extract_strided_slice %34 {offsets = [0, 0], sizes = [16, 8], strides = [1, 1]} : vector<16x96xf32> to vector<16x8xf32>
    %36 = vector.shape_cast %35 : vector<16x8xf32> to vector<2x8x8xf32>
    %37 = vector.extract_strided_slice %34 {offsets = [0, 32], sizes = [16, 8], strides = [1, 1]} : vector<16x96xf32> to vector<16x8xf32>
    %38 = vector.shape_cast %37 : vector<16x8xf32> to vector<2x8x8xf32>
    %39 = vector.extract_strided_slice %34 {offsets = [0, 64], sizes = [16, 8], strides = [1, 1]} : vector<16x96xf32> to vector<16x8xf32>
    %40 = vector.shape_cast %39 : vector<16x8xf32> to vector<2x8x8xf32>
    "tpu.trace_start"() <{level = 10 : i32, message = "bid,bjd->bij"}> : () -> ()
    %cst_19 = arith.constant dense<0.000000e+00> : vector<2x8x8xf32>
    %41 = tpu.matmul %36, %38, %cst_19 {dimension_numbers = #tpu.dot_dimension_numbers<[2], [2], [1], [1], [0, 0, 0, 1, 1, 1], [0], [0]>} : vector<2x8x8xf32>, vector<2x8x8xf32>, vector<2x8x8xf32> -> vector<2x8x8xf32>
    "tpu.trace_stop"() : () -> ()
    %42 = math.exp %41 : vector<2x8x8xf32>
    %cst_20 = arith.constant dense<0.000000e+00> : vector<2x8xf32>
    %43 = vector.multi_reduction <add>, %42, %cst_20 [2] : vector<2x8x8xf32> to vector<2x8xf32>
    %44 = vector.shape_cast %43 : vector<2x8xf32> to vector<2x8x1xf32>
    %45 = tpu.reciprocal %44 {approx = true} : vector<2x8x1xf32> -> vector<2x8x1xf32>
    %46 = vector.broadcast %45 : vector<2x8x1xf32> to vector<2x8x8xf32>
    %47 = arith.mulf %42, %46 : vector<2x8x8xf32>
    "tpu.trace_start"() <{level = 10 : i32, message = "bij,bjd->bid"}> : () -> ()
    %cst_21 = arith.constant dense<0.000000e+00> : vector<2x8x8xf32>
    %48 = tpu.matmul %47, %40, %cst_21 {dimension_numbers = #tpu.dot_dimension_numbers<[2], [1], [1], [2], [0, 0, 0, 1, 1, 2], [0], [0]>} : vector<2x8x8xf32>, vector<2x8x8xf32>, vector<2x8x8xf32> -> vector<2x8x8xf32>
    "tpu.trace_stop"() : () -> ()
    %49 = vector.shape_cast %48 : vector<2x8x8xf32> to vector<16x8xf32>
    %50 = vector.extract_strided_slice %34 {offsets = [0, 8], sizes = [16, 8], strides = [1, 1]} : vector<16x96xf32> to vector<16x8xf32>
    %51 = vector.shape_cast %50 : vector<16x8xf32> to vector<2x8x8xf32>
    %52 = vector.extract_strided_slice %34 {offsets = [0, 40], sizes = [16, 8], strides = [1, 1]} : vector<16x96xf32> to vector<16x8xf32>
    %53 = vector.shape_cast %52 : vector<16x8xf32> to vector<2x8x8xf32>
    %54 = vector.extract_strided_slice %34 {offsets = [0, 72], sizes = [16, 8], strides = [1, 1]} : vector<16x96xf32> to vector<16x8xf32>
    %55 = vector.shape_cast %54 : vector<16x8xf32> to vector<2x8x8xf32>
    "tpu.trace_start"() <{level = 10 : i32, message = "bid,bjd->bij"}> : () -> ()
    %cst_22 = arith.constant dense<0.000000e+00> : vector<2x8x8xf32>
    %56 = tpu.matmul %51, %53, %cst_22 {dimension_numbers = #tpu.dot_dimension_numbers<[2], [2], [1], [1], [0, 0, 0, 1, 1, 1], [0], [0]>} : vector<2x8x8xf32>, vector<2x8x8xf32>, vector<2x8x8xf32> -> vector<2x8x8xf32>
    "tpu.trace_stop"() : () -> ()
    %57 = math.exp %56 : vector<2x8x8xf32>
    %cst_23 = arith.constant dense<0.000000e+00> : vector<2x8xf32>
    %58 = vector.multi_reduction <add>, %57, %cst_23 [2] : vector<2x8x8xf32> to vector<2x8xf32>
    %59 = vector.shape_cast %58 : vector<2x8xf32> to vector<2x8x1xf32>
    %60 = tpu.reciprocal %59 {approx = true} : vector<2x8x1xf32> -> vector<2x8x1xf32>
    %61 = vector.broadcast %60 : vector<2x8x1xf32> to vector<2x8x8xf32>
    %62 = arith.mulf %57, %61 : vector<2x8x8xf32>
    "tpu.trace_start"() <{level = 10 : i32, message = "bij,bjd->bid"}> : () -> ()
    %cst_24 = arith.constant dense<0.000000e+00> : vector<2x8x8xf32>
    %63 = tpu.matmul %62, %55, %cst_24 {dimension_numbers = #tpu.dot_dimension_numbers<[2], [1], [1], [2], [0, 0, 0, 1, 1, 2], [0], [0]>} : vector<2x8x8xf32>, vector<2x8x8xf32>, vector<2x8x8xf32> -> vector<2x8x8xf32>
    "tpu.trace_stop"() : () -> ()
    %64 = vector.shape_cast %63 : vector<2x8x8xf32> to vector<16x8xf32>
    %65 = vector.extract_strided_slice %34 {offsets = [0, 16], sizes = [16, 8], strides = [1, 1]} : vector<16x96xf32> to vector<16x8xf32>
    %66 = vector.shape_cast %65 : vector<16x8xf32> to vector<2x8x8xf32>
    %67 = vector.extract_strided_slice %34 {offsets = [0, 48], sizes = [16, 8], strides = [1, 1]} : vector<16x96xf32> to vector<16x8xf32>
    %68 = vector.shape_cast %67 : vector<16x8xf32> to vector<2x8x8xf32>
    %69 = vector.extract_strided_slice %34 {offsets = [0, 80], sizes = [16, 8], strides = [1, 1]} : vector<16x96xf32> to vector<16x8xf32>
    %70 = vector.shape_cast %69 : vector<16x8xf32> to vector<2x8x8xf32>
    "tpu.trace_start"() <{level = 10 : i32, message = "bid,bjd->bij"}> : () -> ()
    %cst_25 = arith.constant dense<0.000000e+00> : vector<2x8x8xf32>
    %71 = tpu.matmul %66, %68, %cst_25 {dimension_numbers = #tpu.dot_dimension_numbers<[2], [2], [1], [1], [0, 0, 0, 1, 1, 1], [0], [0]>} : vector<2x8x8xf32>, vector<2x8x8xf32>, vector<2x8x8xf32> -> vector<2x8x8xf32>
    "tpu.trace_stop"() : () -> ()
    %72 = math.exp %71 : vector<2x8x8xf32>
    %cst_26 = arith.constant dense<0.000000e+00> : vector<2x8xf32>
    %73 = vector.multi_reduction <add>, %72, %cst_26 [2] : vector<2x8x8xf32> to vector<2x8xf32>
    %74 = vector.shape_cast %73 : vector<2x8xf32> to vector<2x8x1xf32>
    %75 = tpu.reciprocal %74 {approx = true} : vector<2x8x1xf32> -> vector<2x8x1xf32>
    %76 = vector.broadcast %75 : vector<2x8x1xf32> to vector<2x8x8xf32>
    %77 = arith.mulf %72, %76 : vector<2x8x8xf32>
    "tpu.trace_start"() <{level = 10 : i32, message = "bij,bjd->bid"}> : () -> ()
    %cst_27 = arith.constant dense<0.000000e+00> : vector<2x8x8xf32>
    %78 = tpu.matmul %77, %70, %cst_27 {dimension_numbers = #tpu.dot_dimension_numbers<[2], [1], [1], [2], [0, 0, 0, 1, 1, 2], [0], [0]>} : vector<2x8x8xf32>, vector<2x8x8xf32>, vector<2x8x8xf32> -> vector<2x8x8xf32>
    "tpu.trace_stop"() : () -> ()
    %79 = vector.shape_cast %78 : vector<2x8x8xf32> to vector<16x8xf32>
    %80 = vector.extract_strided_slice %34 {offsets = [0, 24], sizes = [16, 8], strides = [1, 1]} : vector<16x96xf32> to vector<16x8xf32>
    %81 = vector.shape_cast %80 : vector<16x8xf32> to vector<2x8x8xf32>
    %82 = vector.extract_strided_slice %34 {offsets = [0, 56], sizes = [16, 8], strides = [1, 1]} : vector<16x96xf32> to vector<16x8xf32>
    %83 = vector.shape_cast %82 : vector<16x8xf32> to vector<2x8x8xf32>
    %84 = vector.extract_strided_slice %34 {offsets = [0, 88], sizes = [16, 8], strides = [1, 1]} : vector<16x96xf32> to vector<16x8xf32>
    %85 = vector.shape_cast %84 : vector<16x8xf32> to vector<2x8x8xf32>
    "tpu.trace_start"() <{level = 10 : i32, message = "bid,bjd->bij"}> : () -> ()
    %cst_28 = arith.constant dense<0.000000e+00> : vector<2x8x8xf32>
    %86 = tpu.matmul %81, %83, %cst_28 {dimension_numbers = #tpu.dot_dimension_numbers<[2], [2], [1], [1], [0, 0, 0, 1, 1, 1], [0], [0]>} : vector<2x8x8xf32>, vector<2x8x8xf32>, vector<2x8x8xf32> -> vector<2x8x8xf32>
    "tpu.trace_stop"() : () -> ()
    %87 = math.exp %86 : vector<2x8x8xf32>
    %cst_29 = arith.constant dense<0.000000e+00> : vector<2x8xf32>
    %88 = vector.multi_reduction <add>, %87, %cst_29 [2] : vector<2x8x8xf32> to vector<2x8xf32>
    %89 = vector.shape_cast %88 : vector<2x8xf32> to vector<2x8x1xf32>
    %90 = tpu.reciprocal %89 {approx = true} : vector<2x8x1xf32> -> vector<2x8x1xf32>
    %91 = vector.broadcast %90 : vector<2x8x1xf32> to vector<2x8x8xf32>
    %92 = arith.mulf %87, %91 : vector<2x8x8xf32>
    "tpu.trace_start"() <{level = 10 : i32, message = "bij,bjd->bid"}> : () -> ()
    %cst_30 = arith.constant dense<0.000000e+00> : vector<2x8x8xf32>
    %93 = tpu.matmul %92, %85, %cst_30 {dimension_numbers = #tpu.dot_dimension_numbers<[2], [1], [1], [2], [0, 0, 0, 1, 1, 2], [0], [0]>} : vector<2x8x8xf32>, vector<2x8x8xf32>, vector<2x8x8xf32> -> vector<2x8x8xf32>
    "tpu.trace_stop"() : () -> ()
    %94 = vector.shape_cast %93 : vector<2x8x8xf32> to vector<16x8xf32>
    %95 = tpu.concatenate %49, %64, %79, %94 in 1 : vector<16x8xf32>, vector<16x8xf32>, vector<16x8xf32>, vector<16x8xf32> -> vector<16x32xf32>
    %c0_31 = arith.constant 0 : index
    %c0_32 = arith.constant 0 : index
    %c0_33 = arith.constant 0 : index
    %96 = vector.load %arg8[%c0_31, %c0_32, %c0_33] : memref<1x32x128xf32, #tpu.memory_space<vmem>>, vector<1x32x128xf32>
    %97 = vector.shape_cast %96 : vector<1x32x128xf32> to vector<32x128xf32>
    %cst_34 = arith.constant dense<0.000000e+00> : vector<16x128xf32>
    %98 = tpu.matmul %95, %97, %cst_34 {dimension_numbers = #tpu.dot_dimension_numbers<[1], [0], [0], [1], [0, 0, 1, 1], [], []>} : vector<16x32xf32>, vector<32x128xf32>, vector<16x128xf32> -> vector<16x128xf32>
    %99 = arith.addf %3, %98 : vector<16x128xf32>
    %c0_35 = arith.constant 0 : index
    %c0_36 = arith.constant 0 : index
    %c0_37 = arith.constant 0 : index
    %100 = vector.load %arg9[%c0_35, %c0_36, %c0_37] : memref<1x1x128xf32, #tpu.memory_space<vmem>>, vector<1x1x128xf32>
    %101 = vector.shape_cast %100 : vector<1x1x128xf32> to vector<1x128xf32>
    %102 = vector.broadcast %101 : vector<1x128xf32> to vector<16x128xf32>
    %103 = arith.addf %99, %102 : vector<16x128xf32>
    %c0_38 = arith.constant 0 : index
    %c0_39 = arith.constant 0 : index
    %c0_40 = arith.constant 0 : index
    %104 = vector.load %arg10[%c0_38, %c0_39, %c0_40] : memref<1x1x128xf32, #tpu.memory_space<vmem>>, vector<1x1x128xf32>
    %105 = vector.shape_cast %104 : vector<1x1x128xf32> to vector<1x128xf32>
    %c0_41 = arith.constant 0 : index
    %c0_42 = arith.constant 0 : index
    %c0_43 = arith.constant 0 : index
    %106 = vector.load %arg11[%c0_41, %c0_42, %c0_43] : memref<1x1x128xf32, #tpu.memory_space<vmem>>, vector<1x1x128xf32>
    %107 = vector.shape_cast %106 : vector<1x1x128xf32> to vector<1x128xf32>
    %cst_44 = arith.constant dense<0.000000e+00> : vector<16xf32>
    %108 = vector.multi_reduction <add>, %103, %cst_44 [1] : vector<16x128xf32> to vector<16xf32>
    %109 = vector.shape_cast %108 : vector<16xf32> to vector<16x1xf32>
    %cst_45 = arith.constant 7.812500e-03 : f32
    %110 = vector.broadcast %cst_45 : f32 to vector<16x1xf32>
    %111 = arith.mulf %109, %110 : vector<16x1xf32>
    %112 = vector.broadcast %111 : vector<16x1xf32> to vector<16x128xf32>
    %113 = arith.subf %103, %112 : vector<16x128xf32>
    %114 = arith.mulf %113, %113 : vector<16x128xf32>
    %cst_46 = arith.constant dense<0.000000e+00> : vector<16xf32>
    %115 = vector.multi_reduction <add>, %114, %cst_46 [1] : vector<16x128xf32> to vector<16xf32>
    %116 = vector.shape_cast %115 : vector<16xf32> to vector<16x1xf32>
    %cst_47 = arith.constant 7.812500e-03 : f32
    %117 = vector.broadcast %cst_47 : f32 to vector<16x1xf32>
    %118 = arith.mulf %116, %117 : vector<16x1xf32>
    %cst_48 = arith.constant 9.99999974E-6 : f32
    %119 = vector.broadcast %cst_48 : f32 to vector<16x1xf32>
    %120 = arith.addf %118, %119 : vector<16x1xf32>
    %121 = math.rsqrt %120 : vector<16x1xf32>
    %122 = vector.broadcast %121 : vector<16x1xf32> to vector<16x128xf32>
    %123 = arith.mulf %113, %122 : vector<16x128xf32>
    %124 = vector.broadcast %105 : vector<1x128xf32> to vector<16x128xf32>
    %125 = arith.mulf %123, %124 : vector<16x128xf32>
    %126 = vector.broadcast %107 : vector<1x128xf32> to vector<16x128xf32>
    %127 = arith.addf %125, %126 : vector<16x128xf32>
    %128 = arith.truncf %127 : vector<16x128xf32> to vector<16x128xbf16>
    %c0_49 = arith.constant 0 : index
    %c0_50 = arith.constant 0 : index
    %c0_51 = arith.constant 0 : index
    %129 = vector.load %arg12[%c0_49, %c0_50, %c0_51] : memref<1x128x512xbf16, #tpu.memory_space<vmem>>, vector<1x128x512xbf16>
    %130 = vector.shape_cast %129 : vector<1x128x512xbf16> to vector<128x512xbf16>
    %cst_52 = arith.constant dense<0.000000e+00> : vector<16x512xf32>
    %131 = tpu.matmul %128, %130, %cst_52 {dimension_numbers = #tpu.dot_dimension_numbers<[1], [0], [0], [1], [0, 0, 1, 1], [], []>} : vector<16x128xbf16>, vector<128x512xbf16>, vector<16x512xf32> -> vector<16x512xf32>
    %c0_53 = arith.constant 0 : index
    %c0_54 = arith.constant 0 : index
    %c0_55 = arith.constant 0 : index
    %132 = vector.load %arg13[%c0_53, %c0_54, %c0_55] : memref<1x1x512xf32, #tpu.memory_space<vmem>>, vector<1x1x512xf32>
    %133 = vector.shape_cast %132 : vector<1x1x512xf32> to vector<1x512xf32>
    %134 = vector.broadcast %133 : vector<1x512xf32> to vector<16x512xf32>
    %135 = arith.addf %131, %134 : vector<16x512xf32>
    %cst_56 = arith.constant 5.000000e-01 : f32
    %136 = vector.broadcast %cst_56 : f32 to vector<16x512xf32>
    %137 = arith.mulf %136, %135 : vector<16x512xf32>
    %cst_57 = arith.constant 0.707106769 : f32
    %138 = vector.broadcast %cst_57 : f32 to vector<16x512xf32>
    %139 = arith.mulf %135, %138 : vector<16x512xf32>
    %140 = math.erf %139 : vector<16x512xf32>
    %cst_58 = arith.constant 1.000000e+00 : f32
    %141 = vector.broadcast %cst_58 : f32 to vector<16x512xf32>
    %142 = arith.addf %141, %140 : vector<16x512xf32>
    %143 = arith.mulf %137, %142 : vector<16x512xf32>
    %144 = arith.truncf %143 : vector<16x512xf32> to vector<16x512xbf16>
    %c0_59 = arith.constant 0 : index
    %c0_60 = arith.constant 0 : index
    %c0_61 = arith.constant 0 : index
    %145 = vector.load %arg14[%c0_59, %c0_60, %c0_61] : memref<1x512x128xbf16, #tpu.memory_space<vmem>>, vector<1x512x128xbf16>
    %146 = vector.shape_cast %145 : vector<1x512x128xbf16> to vector<512x128xbf16>
    %cst_62 = arith.constant dense<0.000000e+00> : vector<16x128xf32>
    %147 = tpu.matmul %144, %146, %cst_62 {dimension_numbers = #tpu.dot_dimension_numbers<[1], [0], [0], [1], [0, 0, 1, 1], [], []>} : vector<16x512xbf16>, vector<512x128xbf16>, vector<16x128xf32> -> vector<16x128xf32>
    %148 = arith.addf %103, %147 : vector<16x128xf32>
    %c0_63 = arith.constant 0 : index
    %c0_64 = arith.constant 0 : index
    %c0_65 = arith.constant 0 : index
    %149 = vector.load %arg15[%c0_63, %c0_64, %c0_65] : memref<1x1x128xf32, #tpu.memory_space<vmem>>, vector<1x1x128xf32>
    %150 = vector.shape_cast %149 : vector<1x1x128xf32> to vector<1x128xf32>
    %151 = vector.broadcast %150 : vector<1x128xf32> to vector<16x128xf32>
    %152 = arith.addf %148, %151 : vector<16x128xf32>
    %c0_66 = arith.constant 0 : index
    %c0_67 = arith.constant 0 : index
    %153 = vector.load %arg17[%c0_66, %c0_67] : memref<16x128xf32, #tpu.memory_space<vmem>>, vector<16x128xf32>
    tpu.vector_store %arg17[%c0_66, %c0_67], %152 {strides = array<i32>} : memref<16x128xf32, #tpu.memory_space<vmem>>, vector<16x128xf32>,
    %c1_i32 = arith.constant 1 : i32
    %154 = arith.cmpi eq, %arg0, %c1_i32 : i32
    %155 = arith.extui %154 : i1 to i32
    %c0_i32_68 = arith.constant 0 : i32
    %156 = arith.cmpi ne, %155, %c0_i32_68 : i32
    scf.if %156 {
      %157 = vector.shape_cast %152 : vector<16x128xf32> to vector<2x8x128xf32>
      %c0_69 = arith.constant 0 : index
      %c0_70 = arith.constant 0 : index
      %c0_71 = arith.constant 0 : index
      %158 = vector.load %arg16[%c0_69, %c0_70, %c0_71] : memref<2x8x128xf32, #tpu.memory_space<vmem>>, vector<2x8x128xf32>
      tpu.vector_store %arg16[%c0_69, %c0_70, %c0_71], %157 {strides = array<i32>} : memref<2x8x128xf32, #tpu.memory_space<vmem>>, vector<2x8x128xf32>,
    } else {
    }
    return
  }
  func.func @transform_0(%arg0: i32) -> (i32, i32) {
    %c0_i32 = arith.constant 0 : i32
    %c0_i32_0 = arith.constant 0 : i32
    %c0_i32_1 = arith.constant 0 : i32
    return %c0_i32, %c0_i32_0 : i32, i32
  }
  func.func @transform_1(%arg0: i32) -> (i32, i32) {
    %c0_i32 = arith.constant 0 : i32
    %c0_i32_0 = arith.constant 0 : i32
    %c0_i32_1 = arith.constant 0 : i32
    return %c0_i32, %c0_i32_0 : i32, i32
  }
  func.func @transform_2(%arg0: i32) -> (i32, i32) {
    %c0_i32 = arith.constant 0 : i32
    %c0_i32_0 = arith.constant 0 : i32
    %c0_i32_1 = arith.constant 0 : i32
    return %c0_i32, %c0_i32_0 : i32, i32
  }
  func.func @transform_3(%arg0: i32) -> (i32, i32, i32) {
    %c0_i32 = arith.constant 0 : i32
    %c0_i32_0 = arith.constant 0 : i32
    %c0_i32_1 = arith.constant 0 : i32
    return %arg0, %c0_i32, %c0_i32_0 : i32, i32, i32
  }
  func.func @transform_4(%arg0: i32) -> (i32, i32, i32) {
    %c0_i32 = arith.constant 0 : i32
    %c0_i32_0 = arith.constant 0 : i32
    %c0_i32_1 = arith.constant 0 : i32
    return %arg0, %c0_i32, %c0_i32_0 : i32, i32, i32
  }
  func.func @transform_5(%arg0: i32) -> (i32, i32, i32) {
    %c0_i32 = arith.constant 0 : i32
    %c0_i32_0 = arith.constant 0 : i32
    %c0_i32_1 = arith.constant 0 : i32
    return %arg0, %c0_i32, %c0_i32_0 : i32, i32, i32
  }
  func.func @transform_6(%arg0: i32) -> (i32, i32, i32) {
    %c0_i32 = arith.constant 0 : i32
    %c0_i32_0 = arith.constant 0 : i32
    %c0_i32_1 = arith.constant 0 : i32
    return %arg0, %c0_i32, %c0_i32_0 : i32, i32, i32
  }
  func.func @transform_7(%arg0: i32) -> (i32, i32, i32) {
    %c0_i32 = arith.constant 0 : i32
    %c0_i32_0 = arith.constant 0 : i32
    %c0_i32_1 = arith.constant 0 : i32
    return %arg0, %c0_i32, %c0_i32_0 : i32, i32, i32
  }
  func.func @transform_8(%arg0: i32) -> (i32, i32, i32) {
    %c0_i32 = arith.constant 0 : i32
    %c0_i32_0 = arith.constant 0 : i32
    %c0_i32_1 = arith.constant 0 : i32
    return %arg0, %c0_i32, %c0_i32_0 : i32, i32, i32
  }
  func.func @transform_9(%arg0: i32) -> (i32, i32, i32) {
    %c0_i32 = arith.constant 0 : i32
    %c0_i32_0 = arith.constant 0 : i32
    %c0_i32_1 = arith.constant 0 : i32
    return %arg0, %c0_i32, %c0_i32_0 : i32, i32, i32
  }
  func.func @transform_10(%arg0: i32) -> (i32, i32, i32) {
    %c0_i32 = arith.constant 0 : i32
    %c0_i32_0 = arith.constant 0 : i32
    %c0_i32_1 = arith.constant 0 : i32
    return %arg0, %c0_i32, %c0_i32_0 : i32, i32, i32
  }
  func.func @transform_11(%arg0: i32) -> (i32, i32, i32) {
    %c0_i32 = arith.constant 0 : i32
    %c0_i32_0 = arith.constant 0 : i32
    %c0_i32_1 = arith.constant 0 : i32
    return %arg0, %c0_i32, %c0_i32_0 : i32, i32, i32
  }
  func.func @transform_12(%arg0: i32) -> (i32, i32, i32) {
    %c0_i32 = arith.constant 0 : i32
    %c0_i32_0 = arith.constant 0 : i32
    %c0_i32_1 = arith.constant 0 : i32
    return %arg0, %c0_i32, %c0_i32_0 : i32, i32, i32
  }
  func.func @transform_13(%arg0: i32) -> (i32, i32, i32) {
    %c0_i32 = arith.constant 0 : i32
    %c0_i32_0 = arith.constant 0 : i32
    %c0_i32_1 = arith.constant 0 : i32
    return %arg0, %c0_i32, %c0_i32_0 : i32, i32, i32
  }
  func.func @transform_14(%arg0: i32) -> (i32, i32, i32) {
    %c0_i32 = arith.constant 0 : i32
    %c0_i32_0 = arith.constant 0 : i32
    %c0_i32_1 = arith.constant 0 : i32
    return %arg0, %c0_i32, %c0_i32_0 : i32, i32, i32
  }
  func.func @transform_15(%arg0: i32) -> (i32, i32, i32) {
    %c0_i32 = arith.constant 0 : i32
    %c0_i32_0 = arith.constant 0 : i32
    %c0_i32_1 = arith.constant 0 : i32
    %c0_i32_2 = arith.constant 0 : i32
    return %c0_i32, %c0_i32_0, %c0_i32_1 : i32, i32, i32
  }
}

</mosaic_0001>

<llo_original>
// kernel: tpu_custom_call.1
$region0: #{tpu_custom_call.1}
  #allocation0 [shape = 'u32[]', space=smem, size = 0x4, offset = 0x4, fixed_abs, tag = 'smem constant byte address 0x4 - core index']
  #allocation1 [shape = 'u32[144,128]{1,0:T(1,128)}', space=vmem, size = 0x12000, scoped, tag = 'internal scratch']
  #allocation2 [shape = 'f32[16,128]{1,0:T(8,128)}', space=vmem, size = 0x2000, scoped, tag = 'scratch operand']
  %s0 = inlined_call_operand.vmem [shape: s32[16,1], index: 0, kind: input, shape index: {}]
  %s1 = inlined_call_operand.hbm [shape: f32[64,128], index: 1, kind: input, shape index: {}]
  %s2 = inlined_call_operand.hbm [shape: f32[16,128], index: 2, kind: input, shape index: {}]
  %s3 = inlined_call_operand.vmem [shape: f32[2,1,128], index: 3, kind: input, shape index: {}]
  %s4 = inlined_call_operand.hbm [shape: f32[2,1,128], index: 4, kind: input, shape index: {}]
  %s5 = inlined_call_operand.vmem [shape: f32[2,128,96], index: 5, kind: input, shape index: {}]
  %s6 = inlined_call_operand.hbm [shape: f32[2,1,96], index: 6, kind: input, shape index: {}]
  %s7 = inlined_call_operand.hbm [shape: f32[2,32,128], index: 7, kind: input, shape index: {}]
  %s8 = inlined_call_operand.hbm [shape: f32[2,1,128], index: 8, kind: input, shape index: {}]
  %s9 = inlined_call_operand.hbm [shape: f32[2,1,128], index: 9, kind: input, shape index: {}]
  %s10 = inlined_call_operand.hbm [shape: f32[2,1,128], index: 10, kind: input, shape index: {}]
  %s11 = inlined_call_operand.hbm [shape: bf16[2,128,512], index: 11, kind: input, shape index: {}]
  %s12 = inlined_call_operand.hbm [shape: f32[2,1,512], index: 12, kind: input, shape index: {}]
  %s13 = inlined_call_operand.vmem [shape: bf16[2,512,128], index: 13, kind: input, shape index: {}]
  %s14 = inlined_call_operand.vmem [shape: f32[2,1,128], index: 14, kind: input, shape index: {}]
  %s15 = inlined_call_operand.hbm [shape: f32[2,8,128], index: 15, kind: output, shape index: {}]
  %s16 = sld [smem:[#allocation0]]
  $region141: #{tpu_custom_call.1} parent=0
    _
  %s18 = ssub.s32 1, %s16
  %s19 = scalar_select 0, %s18, %s16
  $region1: #{tpu_custom_call.1} parent=0
    #allocation3 [shape = 'u8[32768]{0}', space=vmem, size = 0x8000, scoped, tag = 'input window, operand 1, single buffered']
    #allocation4 [shape = 's32[2]{0}', space=sflag, size = 0x8, scoped, tag = 'scoped memory for tpu_custom_call.1']
    #allocation5 [shape = 's32[2]{0}', space=sflag, size = 0x8, scoped, tag = 'scoped memory for tpu_custom_call.1']
    #allocation6 [shape = 'u8[8192]{0}', space=vmem, size = 0x2000, scoped, tag = 'input window, operand 2, single buffered']
    #allocation7 [shape = 's32[1]{0}', space=sflag, size = 0x4, scoped, tag = 'scoped memory for tpu_custom_call.1']
    #allocation8 [shape = 'u8[1024]{0}', space=vmem, size = 0x400, scoped, tag = 'input window, operand 4']
    #allocation9 [shape = 'u8[1024]{0}', space=vmem, size = 0x400, scoped, tag = 'input window, operand 6']
    #allocation10 [shape = 'u8[32768]{0}', space=vmem, size = 0x8000, scoped, tag = 'input window, operand 7']
    #allocation11 [shape = 'u8[1024]{0}', space=vmem, size = 0x400, scoped, tag = 'input window, operand 8']
    #allocation12 [shape = 'u8[1024]{0}', space=vmem, size = 0x400, scoped, tag = 'input window, operand 9']
    #allocation13 [shape = 'u8[1024]{0}', space=vmem, size = 0x400, scoped, tag = 'input window, operand 10']
    #allocation14 [shape = 'u8[262144]{0}', space=vmem, size = 0x40000, scoped, tag = 'input window, operand 11']
    #allocation15 [shape = 'u8[4096]{0}', space=vmem, size = 0x1000, scoped, tag = 'input window, operand 12']
    #allocation16 [shape = 'u8[8192]{0}', space=vmem, size = 0x2000, scoped, tag = 'output window, operand 0, single buffered']
    %20 = vsyncpa [#allocation4], 0
    %21 = vsyncpa [#allocation7], 0
    %22 = vsyncpa [#allocation5], 0
    loop: start=0, step=1, limit=4
    $region2: #{tpu_custom_call.1} parent=1 // loop_pre_header
      _
    $region3: #{tpu_custom_call.1} parent=1 // loop_header
      %s24 = sphi 0, %s28
      %p25 = scmp.ge.s32.totalorder %s24, 4
      %s32 = sphi 0, %s32
      %s34 = sphi 0, %s32
      %s35 = sphi 0, %s34
      %s49 = sphi 0, %s35
      %s53 = sphi 0, %s53
      %s55 = sphi 0, %s53
      %s56 = sphi 0, %s55
      %s70 = sphi 0, %s56
      %s74 = sphi 0, %s74
      %s76 = sphi 0, %s74
      %s77 = sphi 0, %s76
      %s91 = sphi 0, %s77
      %s97 = sphi 0, %s99
      %s100 = sphi 0, %s97
      %s101 = sphi 0, %s100
      %s117 = sphi 0, %s101
      %s123 = sphi 0, %s125
      %s126 = sphi 0, %s123
      %s127 = sphi 0, %s126
      %s143 = sphi 0, %s127
      %s149 = sphi 0, %s151
      %s152 = sphi 0, %s149
      %s153 = sphi 0, %s152
      %s169 = sphi 0, %s153
      %s175 = sphi 0, %s177
      %s178 = sphi 0, %s175
      %s179 = sphi 0, %s178
      %s195 = sphi 0, %s179
      %s201 = sphi 0, %s203
      %s204 = sphi 0, %s201
      %s205 = sphi 0, %s204
      %s221 = sphi 0, %s205
      %s227 = sphi 0, %s229
      %s230 = sphi 0, %s227
      %s231 = sphi 0, %s230
      %s247 = sphi 0, %s231
      %s253 = sphi 0, %s255
      %s256 = sphi 0, %s253
      %s257 = sphi 0, %s256
      %s273 = sphi 0, %s257
      %s279 = sphi 0, %s281
      %s282 = sphi 0, %s279
      %s283 = sphi 0, %s282
      %s299 = sphi 0, %s283
      %s305 = sphi 0, %s307
      %s308 = sphi 0, %s305
      %s309 = sphi 0, %s308
      %s325 = sphi 0, %s309
      %s331 = sphi 0, %s333
      %s334 = sphi 0, %s331
      %s335 = sphi 0, %s334
      %s351 = sphi 0, %s335
      %s357 = sphi 0, %s359
      %s360 = sphi 0, %s357
      %s361 = sphi 0, %s360
      %s377 = sphi 0, %s361
      %s383 = sphi 0, %s385
      %s386 = sphi 0, %s383
      %s387 = sphi 0, %s386
      %s403 = sphi 0, %s387
      %s407 = sphi 0, %s407
      %s409 = sphi 0, %s407
      %s410 = sphi 0, %s409
      %s424 = sphi 0, %s410
    $region4: #{tpu_custom_call.1} parent=1 // loop_header_branch
      %27 = sbr.rel (%p25) target = $region8
    $region5: #{tpu_custom_call.1} parent=1 // loop_body
      %s29 = ssub.s32 %s24, 1
      %s30 = ssub.s32 %s24, 2
      %s31 = sadd.s32 %s24, 1
      %s33 = sadd.s32 %s32, 1
      %p36 = scmp.eq.s32.totalorder %s24, 1
      %p37 = scmp.ne.s32.totalorder %s32, %s34
      %p38 = scmp.eq.s32.totalorder %s24, 0
      %p39 = por %p37, %p38
      %p40 = scmp.ne.s32.totalorder %s32, %s34
      %p41 = scmp.eq.s32.totalorder %s29, 1
      %p42 = por %p40, %p41
      %p43 = scmp.ne.s32.totalorder %s34, %s35
      %p44 = scmp.eq.s32.totalorder %s29, 0
      %p45 = por %p43, %p44
      %p46 = scmp.ne.s32.totalorder %s34, %s35
      %p47 = scmp.eq.s32.totalorder %s30, 1
      %p48 = por %p46, %p47
      %p50 = scmp.ne.s32.totalorder %s35, %s49
      %p51 = scmp.eq.s32.totalorder %s30, 0
      %p52 = por %p50, %p51
      %s54 = sadd.s32 %s53, 1
      %p57 = scmp.eq.s32.totalorder %s24, 1
      %p58 = scmp.ne.s32.totalorder %s53, %s55
      %p59 = scmp.eq.s32.totalorder %s24, 0
      %p60 = por %p58, %p59
      %p61 = scmp.ne.s32.totalorder %s53, %s55
      %p62 = scmp.eq.s32.totalorder %s29, 1
      %p63 = por %p61, %p62
      %p64 = scmp.ne.s32.totalorder %s55, %s56
      %p65 = scmp.eq.s32.totalorder %s29, 0
      %p66 = por %p64, %p65
      %p67 = scmp.ne.s32.totalorder %s55, %s56
      %p68 = scmp.eq.s32.totalorder %s30, 1
      %p69 = por %p67, %p68
      %p71 = scmp.ne.s32.totalorder %s56, %s70
      %p72 = scmp.eq.s32.totalorder %s30, 0
      %p73 = por %p71, %p72
      %s75 = sadd.s32 %s74, 1
      %p78 = scmp.eq.s32.totalorder %s24, 1
      %p79 = scmp.ne.s32.totalorder %s74, %s76
      %p80 = scmp.eq.s32.totalorder %s24, 0
      %p81 = por %p79, %p80
      %p82 = scmp.ne.s32.totalorder %s74, %s76
      %p83 = scmp.eq.s32.totalorder %s29, 1
      %p84 = por %p82, %p83
      %p85 = scmp.ne.s32.totalorder %s76, %s77
      %p86 = scmp.eq.s32.totalorder %s29, 0
      %p87 = por %p85, %p86
      %p88 = scmp.ne.s32.totalorder %s76, %s77
      %p89 = scmp.eq.s32.totalorder %s30, 1
      %p90 = por %p88, %p89
      %p92 = scmp.ne.s32.totalorder %s77, %s91
      %p93 = scmp.eq.s32.totalorder %s30, 0
      %p94 = por %p92, %p93
      %s95 = ssub.s32 %s24, %s31
      %p96 = scmp.eq.s32.totalorder %s95, 0
      %s98 = sadd.s32 %s97, 1
      %s99 = scalar_select %p96, %s97, %s98
      %p102 = pneg %p96
      %p103 = scmp.eq.s32.totalorder %s24, 1
      %p104 = por %p102, %p103
      %p105 = scmp.ne.s32.totalorder %s97, %s100
      %p106 = scmp.eq.s32.totalorder %s24, 0
      %p107 = por %p105, %p106
      %p108 = scmp.ne.s32.totalorder %s97, %s100
      %p109 = scmp.eq.s32.totalorder %s29, 1
      %p110 = por %p108, %p109
      %p111 = scmp.ne.s32.totalorder %s100, %s101
      %p112 = scmp.eq.s32.totalorder %s29, 0
      %p113 = por %p111, %p112
      %p114 = scmp.ne.s32.totalorder %s100, %s101
      %p115 = scmp.eq.s32.totalorder %s30, 1
      %p116 = por %p114, %p115
      %p118 = scmp.ne.s32.totalorder %s101, %s117
      %p119 = scmp.eq.s32.totalorder %s30, 0
      %p120 = por %p118, %p119
      %s121 = ssub.s32 %s24, %s31
      %p122 = scmp.eq.s32.totalorder %s121, 0
      %s124 = sadd.s32 %s123, 1
      %s125 = scalar_select %p122, %s123, %s124
      %p128 = pneg %p122
      %p129 = scmp.eq.s32.totalorder %s24, 1
      %p130 = por %p128, %p129
      %p131 = scmp.ne.s32.totalorder %s123, %s126
      %p132 = scmp.eq.s32.totalorder %s24, 0
      %p133 = por %p131, %p132
      %p134 = scmp.ne.s32.totalorder %s123, %s126
      %p135 = scmp.eq.s32.totalorder %s29, 1
      %p136 = por %p134, %p135
      %p137 = scmp.ne.s32.totalorder %s126, %s127
      %p138 = scmp.eq.s32.totalorder %s29, 0
      %p139 = por %p137, %p138
      %p140 = scmp.ne.s32.totalorder %s126, %s127
      %p141 = scmp.eq.s32.totalorder %s30, 1
      %p142 = por %p140, %p141
      %p144 = scmp.ne.s32.totalorder %s127, %s143
      %p145 = scmp.eq.s32.totalorder %s30, 0
      %p146 = por %p144, %p145
      %s147 = ssub.s32 %s24, %s31
      %p148 = scmp.eq.s32.totalorder %s147, 0
      %s150 = sadd.s32 %s149, 1
      %s151 = scalar_select %p148, %s149, %s150
      %p154 = pneg %p148
      %p155 = scmp.eq.s32.totalorder %s24, 1
      %p156 = por %p154, %p155
      %p157 = scmp.ne.s32.totalorder %s149, %s152
      %p158 = scmp.eq.s32.totalorder %s24, 0
      %p159 = por %p157, %p158
      %p160 = scmp.ne.s32.totalorder %s149, %s152
      %p161 = scmp.eq.s32.totalorder %s29, 1
      %p162 = por %p160, %p161
      %p163 = scmp.ne.s32.totalorder %s152, %s153
      %p164 = scmp.eq.s32.totalorder %s29, 0
      %p165 = por %p163, %p164
      %p166 = scmp.ne.s32.totalorder %s152, %s153
      %p167 = scmp.eq.s32.totalorder %s30, 1
      %p168 = por %p166, %p167
      %p170 = scmp.ne.s32.totalorder %s153, %s169
      %p171 = scmp.eq.s32.totalorder %s30, 0
      %p172 = por %p170, %p171
      %s173 = ssub.s32 %s24, %s31
      %p174 = scmp.eq.s32.totalorder %s173, 0
      %s176 = sadd.s32 %s175, 1
      %s177 = scalar_select %p174, %s175, %s176
      %p180 = pneg %p174
      %p181 = scmp.eq.s32.totalorder %s24, 1
      %p182 = por %p180, %p181
      %p183 = scmp.ne.s32.totalorder %s175, %s178
      %p184 = scmp.eq.s32.totalorder %s24, 0
      %p185 = por %p183, %p184
      %p186 = scmp.ne.s32.totalorder %s175, %s178
      %p187 = scmp.eq.s32.totalorder %s29, 1
      %p188 = por %p186, %p187
      %p189 = scmp.ne.s32.totalorder %s178, %s179
      %p190 = scmp.eq.s32.totalorder %s29, 0
      %p191 = por %p189, %p190
      %p192 = scmp.ne.s32.totalorder %s178, %s179
      %p193 = scmp.eq.s32.totalorder %s30, 1
      %p194 = por %p192, %p193
      %p196 = scmp.ne.s32.totalorder %s179, %s195
      %p197 = scmp.eq.s32.totalorder %s30, 0
      %p198 = por %p196, %p197
      %s199 = ssub.s32 %s24, %s31
      %p200 = scmp.eq.s32.totalorder %s199, 0
      %s202 = sadd.s32 %s201, 1
      %s203 = scalar_select %p200, %s201, %s202
      %p206 = pneg %p200
      %p207 = scmp.eq.s32.totalorder %s24, 1
      %p208 = por %p206, %p207
      %p209 = scmp.ne.s32.totalorder %s201, %s204
      %p210 = scmp.eq.s32.totalorder %s24, 0
      %p211 = por %p209, %p210
      %p212 = scmp.ne.s32.totalorder %s201, %s204
      %p213 = scmp.eq.s32.totalorder %s29, 1
      %p214 = por %p212, %p213
      %p215 = scmp.ne.s32.totalorder %s204, %s205
      %p216 = scmp.eq.s32.totalorder %s29, 0
      %p217 = por %p215, %p216
      %p218 = scmp.ne.s32.totalorder %s204, %s205
      %p219 = scmp.eq.s32.totalorder %s30, 1
      %p220 = por %p218, %p219
      %p222 = scmp.ne.s32.totalorder %s205, %s221
      %p223 = scmp.eq.s32.totalorder %s30, 0
      %p224 = por %p222, %p223
      %s225 = ssub.s32 %s24, %s31
      %p226 = scmp.eq.s32.totalorder %s225, 0
      %s228 = sadd.s32 %s227, 1
      %s229 = scalar_select %p226, %s227, %s228
      %p232 = pneg %p226
      %p233 = scmp.eq.s32.totalorder %s24, 1
      %p234 = por %p232, %p233
      %p235 = scmp.ne.s32.totalorder %s227, %s230
      %p236 = scmp.eq.s32.totalorder %s24, 0
      %p237 = por %p235, %p236
      %p238 = scmp.ne.s32.totalorder %s227, %s230
      %p239 = scmp.eq.s32.totalorder %s29, 1
      %p240 = por %p238, %p239
      %p241 = scmp.ne.s32.totalorder %s230, %s231
      %p242 = scmp.eq.s32.totalorder %s29, 0
      %p243 = por %p241, %p242
      %p244 = scmp.ne.s32.totalorder %s230, %s231
      %p245 = scmp.eq.s32.totalorder %s30, 1
      %p246 = por %p244, %p245
      %p248 = scmp.ne.s32.totalorder %s231, %s247
      %p249 = scmp.eq.s32.totalorder %s30, 0
      %p250 = por %p248, %p249
      %s251 = ssub.s32 %s24, %s31
      %p252 = scmp.eq.s32.totalorder %s251, 0
      %s254 = sadd.s32 %s253, 1
      %s255 = scalar_select %p252, %s253, %s254
      %p258 = pneg %p252
      %p259 = scmp.eq.s32.totalorder %s24, 1
      %p260 = por %p258, %p259
      %p261 = scmp.ne.s32.totalorder %s253, %s256
      %p262 = scmp.eq.s32.totalorder %s24, 0
      %p263 = por %p261, %p262
      %p264 = scmp.ne.s32.totalorder %s253, %s256
      %p265 = scmp.eq.s32.totalorder %s29, 1
      %p266 = por %p264, %p265
      %p267 = scmp.ne.s32.totalorder %s256, %s257
      %p268 = scmp.eq.s32.totalorder %s29, 0
      %p269 = por %p267, %p268
      %p270 = scmp.ne.s32.totalorder %s256, %s257
      %p271 = scmp.eq.s32.totalorder %s30, 1
      %p272 = por %p270, %p271
      %p274 = scmp.ne.s32.totalorder %s257, %s273
      %p275 = scmp.eq.s32.totalorder %s30, 0
      %p276 = por %p274, %p275
      %s277 = ssub.s32 %s24, %s31
      %p278 = scmp.eq.s32.totalorder %s277, 0
      %s280 = sadd.s32 %s279, 1
      %s281 = scalar_select %p278, %s279, %s280
      %p284 = pneg %p278
      %p285 = scmp.eq.s32.totalorder %s24, 1
      %p286 = por %p284, %p285
      %p287 = scmp.ne.s32.totalorder %s279, %s282
      %p288 = scmp.eq.s32.totalorder %s24, 0
      %p289 = por %p287, %p288
      %p290 = scmp.ne.s32.totalorder %s279, %s282
      %p291 = scmp.eq.s32.totalorder %s29, 1
      %p292 = por %p290, %p291
      %p293 = scmp.ne.s32.totalorder %s282, %s283
      %p294 = scmp.eq.s32.totalorder %s29, 0
      %p295 = por %p293, %p294
      %p296 = scmp.ne.s32.totalorder %s282, %s283
      %p297 = scmp.eq.s32.totalorder %s30, 1
      %p298 = por %p296, %p297
      %p300 = scmp.ne.s32.totalorder %s283, %s299
      %p301 = scmp.eq.s32.totalorder %s30, 0
      %p302 = por %p300, %p301
      %s303 = ssub.s32 %s24, %s31
      %p304 = scmp.eq.s32.totalorder %s303, 0
      %s306 = sadd.s32 %s305, 1
      %s307 = scalar_select %p304, %s305, %s306
      %p310 = pneg %p304
      %p311 = scmp.eq.s32.totalorder %s24, 1
      %p312 = por %p310, %p311
      %p313 = scmp.ne.s32.totalorder %s305, %s308
      %p314 = scmp.eq.s32.totalorder %s24, 0
      %p315 = por %p313, %p314
      %p316 = scmp.ne.s32.totalorder %s305, %s308
      %p317 = scmp.eq.s32.totalorder %s29, 1
      %p318 = por %p316, %p317
      %p319 = scmp.ne.s32.totalorder %s308, %s309
      %p320 = scmp.eq.s32.totalorder %s29, 0
      %p321 = por %p319, %p320
      %p322 = scmp.ne.s32.totalorder %s308, %s309
      %p323 = scmp.eq.s32.totalorder %s30, 1
      %p324 = por %p322, %p323
      %p326 = scmp.ne.s32.totalorder %s309, %s325
      %p327 = scmp.eq.s32.totalorder %s30, 0
      %p328 = por %p326, %p327
      %s329 = ssub.s32 %s24, %s31
      %p330 = scmp.eq.s32.totalorder %s329, 0
      %s332 = sadd.s32 %s331, 1
      %s333 = scalar_select %p330, %s331, %s332
      %p336 = pneg %p330
      %p337 = scmp.eq.s32.totalorder %s24, 1
      %p338 = por %p336, %p337
      %p339 = scmp.ne.s32.totalorder %s331, %s334
      %p340 = scmp.eq.s32.totalorder %s24, 0
      %p341 = por %p339, %p340
      %p342 = scmp.ne.s32.totalorder %s331, %s334
      %p343 = scmp.eq.s32.totalorder %s29, 1
      %p344 = por %p342, %p343
      %p345 = scmp.ne.s32.totalorder %s334, %s335
      %p346 = scmp.eq.s32.totalorder %s29, 0
      %p347 = por %p345, %p346
      %p348 = scmp.ne.s32.totalorder %s334, %s335
      %p349 = scmp.eq.s32.totalorder %s30, 1
      %p350 = por %p348, %p349
      %p352 = scmp.ne.s32.totalorder %s335, %s351
      %p353 = scmp.eq.s32.totalorder %s30, 0
      %p354 = por %p352, %p353
      %s355 = ssub.s32 %s24, %s31
      %p356 = scmp.eq.s32.totalorder %s355, 0
      %s358 = sadd.s32 %s357, 1
      %s359 = scalar_select %p356, %s357, %s358
      %p362 = pneg %p356
      %p363 = scmp.eq.s32.totalorder %s24, 1
      %p364 = por %p362, %p363
      %p365 = scmp.ne.s32.totalorder %s357, %s360
      %p366 = scmp.eq.s32.totalorder %s24, 0
      %p367 = por %p365, %p366
      %p368 = scmp.ne.s32.totalorder %s357, %s360
      %p369 = scmp.eq.s32.totalorder %s29, 1
      %p370 = por %p368, %p369
      %p371 = scmp.ne.s32.totalorder %s360, %s361
      %p372 = scmp.eq.s32.totalorder %s29, 0
      %p373 = por %p371, %p372
      %p374 = scmp.ne.s32.totalorder %s360, %s361
      %p375 = scmp.eq.s32.totalorder %s30, 1
      %p376 = por %p374, %p375
      %p378 = scmp.ne.s32.totalorder %s361, %s377
      %p379 = scmp.eq.s32.totalorder %s30, 0
      %p380 = por %p378, %p379
      %s381 = ssub.s32 %s24, %s31
      %p382 = scmp.eq.s32.totalorder %s381, 0
      %s384 = sadd.s32 %s383, 1
      %s385 = scalar_select %p382, %s383, %s384
      %p388 = pneg %p382
      %p389 = scmp.eq.s32.totalorder %s24, 1
      %p390 = por %p388, %p389
      %p391 = scmp.ne.s32.totalorder %s383, %s386
      %p392 = scmp.eq.s32.totalorder %s24, 0
      %p393 = por %p391, %p392
      %p394 = scmp.ne.s32.totalorder %s383, %s386
      %p395 = scmp.eq.s32.totalorder %s29, 1
      %p396 = por %p394, %p395
      %p397 = scmp.ne.s32.totalorder %s386, %s387
      %p398 = scmp.eq.s32.totalorder %s29, 0
      %p399 = por %p397, %p398
      %p400 = scmp.ne.s32.totalorder %s386, %s387
      %p401 = scmp.eq.s32.totalorder %s30, 1
      %p402 = por %p400, %p401
      %p404 = scmp.ne.s32.totalorder %s387, %s403
      %p405 = scmp.eq.s32.totalorder %s30, 0
      %p406 = por %p404, %p405
      %s408 = sadd.s32 %s407, 1
      %p411 = scmp.eq.s32.totalorder %s24, 1
      %p412 = scmp.ne.s32.totalorder %s407, %s409
      %p413 = scmp.eq.s32.totalorder %s24, 0
      %p414 = por %p412, %p413
      %p415 = scmp.ne.s32.totalorder %s407, %s409
      %p416 = scmp.eq.s32.totalorder %s29, 1
      %p417 = por %p415, %p416
      %p418 = scmp.ne.s32.totalorder %s409, %s410
      %p419 = scmp.eq.s32.totalorder %s29, 0
      %p420 = por %p418, %p419
      %p421 = scmp.ne.s32.totalorder %s409, %s410
      %p422 = scmp.eq.s32.totalorder %s30, 1
      %p423 = por %p421, %p422
      %p425 = scmp.ne.s32.totalorder %s410, %s424
      %p426 = scmp.eq.s32.totalorder %s30, 0
      %p427 = por %p425, %p426
      %p428 = scmp.le.s32.totalorder 1, %s24
      %p429 = scmp.lt.s32.totalorder %s24, 3
      %p430 = pnand %p428, %p429
      %p431 = pneg %p430
      // Predicated region
      $region9: #{tpu_custom_call.1} parent=5 // pred_check
        _
      $region10: #{tpu_custom_call.1} parent=5 // pred_check_branch
        %433 = sbr.rel (%p430) target = $region12
      $region11: #{tpu_custom_call.1} parent=5 // pred_region
        %s434 = ssub.s32 %s24, 1
        // Predicated region
        $region13: #{tpu_custom_call.1} parent=11 // pred_check
          %p435 = pneg %p45
        $region14: #{tpu_custom_call.1} parent=11 // pred_check_branch
          %437 = sbr.rel (%p435) target = $region16
        $region15: #{tpu_custom_call.1} parent=11 // pred_region
          _
        $region16: #{tpu_custom_call.1} parent=11 // pred_fallthru
          _
        // Predicated region
        $region17: #{tpu_custom_call.1} parent=11 // pred_check
          %p438 = pneg %p66
        $region18: #{tpu_custom_call.1} parent=11 // pred_check_branch
          %440 = sbr.rel (%p438) target = $region20
        $region19: #{tpu_custom_call.1} parent=11 // pred_region
          %s442 = ssub.s32 1024, 1024
          %443 = vsyncadd [#allocation4], %s442
          %s444 = sshll.u32 [#allocation3], 4
          %s445 = int_to_ptr.vmem [resolvable:$true] %s444
          %450 = dma.hbm_to_vmem [thread:$0]  %s1, 1024, %s445, [#allocation4], 128, 128, 8
        $region20: #{tpu_custom_call.1} parent=11 // pred_fallthru
          _
        // Predicated region
        $region21: #{tpu_custom_call.1} parent=11 // pred_check
          %p451 = pneg %p87
        $region22: #{tpu_custom_call.1} parent=11 // pred_check_branch
          %453 = sbr.rel (%p451) target = $region24
        $region23: #{tpu_custom_call.1} parent=11 // pred_region
          %s455 = ssub.s32 256, 256
          %456 = vsyncadd [#allocation7], %s455
          %s457 = sshll.u32 [#allocation6], 4
          %s458 = int_to_ptr.vmem [resolvable:$true] %s457
          %463 = dma.hbm_to_vmem [thread:$0]  %s2, 256, %s458, [#allocation7], 128, 128, 8
        $region24: #{tpu_custom_call.1} parent=11 // pred_fallthru
          _
      $region12: #{tpu_custom_call.1} parent=5 // pred_fallthru
        _
      %p464 = scmp.lt.s32.totalorder %s24, 2
      // Predicated region
      $region25: #{tpu_custom_call.1} parent=5 // pred_check
        %p465 = pneg %p464
      $region26: #{tpu_custom_call.1} parent=5 // pred_check_branch
        %467 = sbr.rel (%p465) target = $region28
      $region27: #{tpu_custom_call.1} parent=5 // pred_region
        // Predicated region
        $region29: #{tpu_custom_call.1} parent=27 // pred_check
          %p468 = pneg %p107
        $region30: #{tpu_custom_call.1} parent=27 // pred_check_branch
          %470 = sbr.rel (%p468) target = $region32
        $region31: #{tpu_custom_call.1} parent=27 // pred_region
          %p471 = scmp.lt.s32.totalorder %s24, 1
          %s472 = scalar_select %p471, %s24, 1
          %s473 = scalar_lea.vmem %s3, %s472
        $region32: #{tpu_custom_call.1} parent=27 // pred_fallthru
          _
        // Predicated region
        $region33: #{tpu_custom_call.1} parent=27 // pred_check
          %p474 = pneg %p133
        $region34: #{tpu_custom_call.1} parent=27 // pred_check_branch
          %476 = sbr.rel (%p474) target = $region36
        $region35: #{tpu_custom_call.1} parent=27 // pred_region
          %s477 = sand.u32 %s24, 1
          %s478 = scalar_lea.sflag [#allocation4], %s477
          %s479 = sand.u32 %s123, 1
          %s480 = scalar_lea.vmem [#allocation8], %s479
          %s482 = ssub.s32 16, 16
          %483 = vsyncadd %s478, %s482
          %s484 = smul.addr %s24, 16
          %s485 = scalar_lea.hbm %s4, %s484
          %s487 = sshll.u32 %s480, 4
          %s488 = int_to_ptr.vmem [resolvable:$true] %s487
          %490 = dma.hbm_to_vmem [thread:$0]  %s485, 16, %s488, %s478
        $region36: #{tpu_custom_call.1} parent=27 // pred_fallthru
          _
        // Predicated region
        $region37: #{tpu_custom_call.1} parent=27 // pred_check
          %p491 = pneg %p159
        $region38: #{tpu_custom_call.1} parent=27 // pred_check_branch
          %493 = sbr.rel (%p491) target = $region40
        $region39: #{tpu_custom_call.1} parent=27 // pred_region
          %p494 = scmp.lt.s32.totalorder %s24, 1
          %s495 = scalar_select %p494, %s24, 1
          %s496 = smul.addr %s495, 16
          %s497 = smul.addr %s496, 8
          %s498 = scalar_lea.vmem %s5, %s497
        $region40: #{tpu_custom_call.1} parent=27 // pred_fallthru
          _
        // Predicated region
        $region41: #{tpu_custom_call.1} parent=27 // pred_check
          %p499 = pneg %p185
        $region42: #{tpu_custom_call.1} parent=27 // pred_check_branch
          %501 = sbr.rel (%p499) target = $region44
        $region43: #{tpu_custom_call.1} parent=27 // pred_region
          %s502 = sand.u32 %s24, 1
          %s503 = scalar_lea.sflag [#allocation4], %s502
          %s504 = sand.u32 %s175, 1
          %s505 = scalar_lea.vmem [#allocation9], %s504
          %s507 = ssub.s32 16, 16
          %508 = vsyncadd %s503, %s507
          %s509 = smul.addr %s24, 16
          %s510 = scalar_lea.hbm %s6, %s509
          %s512 = sshll.u32 %s505, 4
          %s513 = int_to_ptr.vmem [resolvable:$true] %s512
          %515 = dma.hbm_to_vmem [thread:$0]  %s510, 16, %s513, %s503
        $region44: #{tpu_custom_call.1} parent=27 // pred_fallthru
          _
        // Predicated region
        $region45: #{tpu_custom_call.1} parent=27 // pred_check
          %p516 = pneg %p211
        $region46: #{tpu_custom_call.1} parent=27 // pred_check_branch
          %518 = sbr.rel (%p516) target = $region48
        $region47: #{tpu_custom_call.1} parent=27 // pred_region
          %s519 = sand.u32 %s24, 1
          %s520 = scalar_lea.sflag [#allocation4], %s519
          %s521 = sand.u32 %s201, 1
          %s522 = smul.addr %s521, 32
          %s523 = scalar_lea.vmem [#allocation10], %s522
          %s525 = ssub.s32 512, 512
          %526 = vsyncadd %s520, %s525
          %s527 = smul.addr %s24, 4
          %s528 = smul.addr %s527, 128
          %s529 = scalar_lea.hbm %s7, %s528
          %s530 = sshll.u32 %s523, 4
          %s531 = int_to_ptr.vmem [resolvable:$true] %s530
          %536 = dma.hbm_to_vmem [thread:$0]  %s529, 512, %s531, %s520, 128, 128, 8
        $region48: #{tpu_custom_call.1} parent=27 // pred_fallthru
          _
        // Predicated region
        $region49: #{tpu_custom_call.1} parent=27 // pred_check
          %p537 = pneg %p237
        $region50: #{tpu_custom_call.1} parent=27 // pred_check_branch
          %539 = sbr.rel (%p537) target = $region52
        $region51: #{tpu_custom_call.1} parent=27 // pred_region
          %s540 = sand.u32 %s24, 1
          %s541 = scalar_lea.sflag [#allocation4], %s540
          %s542 = sand.u32 %s227, 1
          %s543 = scalar_lea.vmem [#allocation11], %s542
          %s545 = ssub.s32 16, 16
          %546 = vsyncadd %s541, %s545
          %s547 = smul.addr %s24, 16
          %s548 = scalar_lea.hbm %s8, %s547
          %s550 = sshll.u32 %s543, 4
          %s551 = int_to_ptr.vmem [resolvable:$true] %s550
          %553 = dma.hbm_to_vmem [thread:$0]  %s548, 16, %s551, %s541
        $region52: #{tpu_custom_call.1} parent=27 // pred_fallthru
          _
        // Predicated region
        $region53: #{tpu_custom_call.1} parent=27 // pred_check
          %p554 = pneg %p263
        $region54: #{tpu_custom_call.1} parent=27 // pred_check_branch
          %556 = sbr.rel (%p554) target = $region56
        $region55: #{tpu_custom_call.1} parent=27 // pred_region
          %s557 = sand.u32 %s24, 1
          %s558 = scalar_lea.sflag [#allocation4], %s557
          %s559 = sand.u32 %s253, 1
          %s560 = scalar_lea.vmem [#allocation12], %s559
          %s562 = ssub.s32 16, 16
          %563 = vsyncadd %s558, %s562
          %s564 = smul.addr %s24, 16
          %s565 = scalar_lea.hbm %s9, %s564
          %s567 = sshll.u32 %s560, 4
          %s568 = int_to_ptr.vmem [resolvable:$true] %s567
          %570 = dma.hbm_to_vmem [thread:$0]  %s565, 16, %s568, %s558
        $region56: #{tpu_custom_call.1} parent=27 // pred_fallthru
          _
        // Predicated region
        $region57: #{tpu_custom_call.1} parent=27 // pred_check
          %p571 = pneg %p289
        $region58: #{tpu_custom_call.1} parent=27 // pred_check_branch
          %573 = sbr.rel (%p571) target = $region60
        $region59: #{tpu_custom_call.1} parent=27 // pred_region
          %s574 = sand.u32 %s24, 1
          %s575 = scalar_lea.sflag [#allocation4], %s574
          %s576 = sand.u32 %s279, 1
          %s577 = scalar_lea.vmem [#allocation13], %s576
          %s579 = ssub.s32 16, 16
          %580 = vsyncadd %s575, %s579
          %s581 = smul.addr %s24, 16
          %s582 = scalar_lea.hbm %s10, %s581
          %s584 = sshll.u32 %s577, 4
          %s585 = int_to_ptr.vmem [resolvable:$true] %s584
          %587 = dma.hbm_to_vmem [thread:$0]  %s582, 16, %s585, %s575
        $region60: #{tpu_custom_call.1} parent=27 // pred_fallthru
          _
        // Predicated region
        $region61: #{tpu_custom_call.1} parent=27 // pred_check
          %p588 = pneg %p315
        $region62: #{tpu_custom_call.1} parent=27 // pred_check_branch
          %590 = sbr.rel (%p588) target = $region64
        $region63: #{tpu_custom_call.1} parent=27 // pred_region
          %s591 = sand.u32 %s24, 1
          %s592 = scalar_lea.sflag [#allocation4], %s591
          %s593 = sand.u32 %s305, 1
          %s594 = smul.addr %s593, 256
          %s595 = scalar_lea.vmem [#allocation14], %s594
          %s597 = ssub.s32 4096, 4096
          %598 = vsyncadd %s592, %s597
          %s599 = smul.addr %s24, 64
          %s600 = smul.addr %s599, 64
          %s601 = scalar_lea.hbm %s11, %s600
          %s602 = sshll.u32 %s595, 4
          %s603 = int_to_ptr.vmem [resolvable:$true] %s602
          %608 = dma.hbm_to_vmem [thread:$0]  %s601, 4096, %s603, %s592, 256, 256, 16
        $region64: #{tpu_custom_call.1} parent=27 // pred_fallthru
          _
        // Predicated region
        $region65: #{tpu_custom_call.1} parent=27 // pred_check
          %p609 = pneg %p341
        $region66: #{tpu_custom_call.1} parent=27 // pred_check_branch
          %611 = sbr.rel (%p609) target = $region68
        $region67: #{tpu_custom_call.1} parent=27 // pred_region
          %s612 = sand.u32 %s24, 1
          %s613 = scalar_lea.sflag [#allocation4], %s612
          %s614 = sand.u32 %s331, 1
          %s615 = smul.addr %s614, 4
          %s616 = scalar_lea.vmem [#allocation15], %s615
          %s618 = ssub.s32 64, 64
          %619 = vsyncadd %s613, %s618
          %s620 = smul.addr %s24, 4
          %s621 = smul.addr %s620, 16
          %s622 = scalar_lea.hbm %s12, %s621
          %s624 = sshll.u32 %s616, 4
          %s625 = int_to_ptr.vmem [resolvable:$true] %s624
          %627 = dma.hbm_to_vmem [thread:$0]  %s622, 64, %s625, %s613
        $region68: #{tpu_custom_call.1} parent=27 // pred_fallthru
          _
        // Predicated region
        $region69: #{tpu_custom_call.1} parent=27 // pred_check
          %p628 = pneg %p367
        $region70: #{tpu_custom_call.1} parent=27 // pred_check_branch
          %630 = sbr.rel (%p628) target = $region72
        $region71: #{tpu_custom_call.1} parent=27 // pred_region
          %p631 = scmp.lt.s32.totalorder %s24, 1
          %s632 = scalar_select %p631, %s24, 1
          %s633 = smul.addr %s632, 64
          %s634 = smul.addr %s633, 4
          %s635 = scalar_lea.vmem %s13, %s634
        $region72: #{tpu_custom_call.1} parent=27 // pred_fallthru
          _
        // Predicated region
        $region73: #{tpu_custom_call.1} parent=27 // pred_check
          %p636 = pneg %p393
        $region74: #{tpu_custom_call.1} parent=27 // pred_check_branch
          %638 = sbr.rel (%p636) target = $region76
        $region75: #{tpu_custom_call.1} parent=27 // pred_region
          %p639 = scmp.lt.s32.totalorder %s24, 1
          %s640 = scalar_select %p639, %s24, 1
          %s641 = scalar_lea.vmem %s14, %s640
        $region76: #{tpu_custom_call.1} parent=27 // pred_fallthru
          _
      $region28: #{tpu_custom_call.1} parent=5 // pred_fallthru
        _
      %p642 = scmp.le.s32.totalorder 1, %s24
      %p643 = scmp.lt.s32.totalorder %s24, 3
      %p644 = pnand %p642, %p643
      %p645 = pneg %p644
      // Predicated region
      $region77: #{tpu_custom_call.1} parent=5 // pred_check
        _
      $region78: #{tpu_custom_call.1} parent=5 // pred_check_branch
        %647 = sbr.rel (%p644) target = $region80
      $region79: #{tpu_custom_call.1} parent=5 // pred_region
        %s648 = ssub.s32 %s24, 1
        // Predicated region
        $region81: #{tpu_custom_call.1} parent=79 // pred_check
          %p649 = pneg %p66
        $region82: #{tpu_custom_call.1} parent=79 // pred_check_branch
          %651 = sbr.rel (%p649) target = $region84
        $region83: #{tpu_custom_call.1} parent=79 // pred_region
          %652 = dma.done [#allocation4], 1024
        $region84: #{tpu_custom_call.1} parent=79 // pred_fallthru
          _
        // Predicated region
        $region85: #{tpu_custom_call.1} parent=79 // pred_check
          %p653 = pneg %p87
        $region86: #{tpu_custom_call.1} parent=79 // pred_check_branch
          %655 = sbr.rel (%p653) target = $region88
        $region87: #{tpu_custom_call.1} parent=79 // pred_region
          %656 = dma.done [#allocation7], 256
        $region88: #{tpu_custom_call.1} parent=79 // pred_fallthru
          _
        %s657 = sand.u32 %s29, 1
        %s658 = scalar_lea.sflag [#allocation4], %s657
        %s659 = sand.u32 %s126, 1
        %s660 = scalar_lea.vmem [#allocation8], %s659
        // Predicated region
        $region89: #{tpu_custom_call.1} parent=79 // pred_check
          %p661 = pneg %p139
        $region90: #{tpu_custom_call.1} parent=79 // pred_check_branch
          %663 = sbr.rel (%p661) target = $region92
        $region91: #{tpu_custom_call.1} parent=79 // pred_region
          %664 = dma.done %s658, 16
        $region92: #{tpu_custom_call.1} parent=79 // pred_fallthru
          _
        %s665 = sand.u32 %s29, 1
        %s666 = scalar_lea.sflag [#allocation4], %s665
        %s667 = sand.u32 %s178, 1
        %s668 = scalar_lea.vmem [#allocation9], %s667
        // Predicated region
        $region93: #{tpu_custom_call.1} parent=79 // pred_check
          %p669 = pneg %p191
        $region94: #{tpu_custom_call.1} parent=79 // pred_check_branch
          %671 = sbr.rel (%p669) target = $region96
        $region95: #{tpu_custom_call.1} parent=79 // pred_region
          %672 = dma.done %s666, 16
        $region96: #{tpu_custom_call.1} parent=79 // pred_fallthru
          _
        %s673 = sand.u32 %s29, 1
        %s674 = scalar_lea.sflag [#allocation4], %s673
        %s675 = sand.u32 %s204, 1
        %s676 = smul.addr %s675, 32
        %s677 = scalar_lea.vmem [#allocation10], %s676
        // Predicated region
        $region97: #{tpu_custom_call.1} parent=79 // pred_check
          %p678 = pneg %p217
        $region98: #{tpu_custom_call.1} parent=79 // pred_check_branch
          %680 = sbr.rel (%p678) target = $region100
        $region99: #{tpu_custom_call.1} parent=79 // pred_region
          %681 = dma.done %s674, 512
        $region100: #{tpu_custom_call.1} parent=79 // pred_fallthru
          _
        %s682 = sand.u32 %s29, 1
        %s683 = scalar_lea.sflag [#allocation4], %s682
        %s684 = sand.u32 %s230, 1
        %s685 = scalar_lea.vmem [#allocation11], %s684
        // Predicated region
        $region101: #{tpu_custom_call.1} parent=79 // pred_check
          %p686 = pneg %p243
        $region102: #{tpu_custom_call.1} parent=79 // pred_check_branch
          %688 = sbr.rel (%p686) target = $region104
        $region103: #{tpu_custom_call.1} parent=79 // pred_region
          %689 = dma.done %s683, 16
        $region104: #{tpu_custom_call.1} parent=79 // pred_fallthru
          _
        %s690 = sand.u32 %s29, 1
        %s691 = scalar_lea.sflag [#allocation4], %s690
        %s692 = sand.u32 %s256, 1
        %s693 = scalar_lea.vmem [#allocation12], %s692
        // Predicated region
        $region105: #{tpu_custom_call.1} parent=79 // pred_check
          %p694 = pneg %p269
        $region106: #{tpu_custom_call.1} parent=79 // pred_check_branch
          %696 = sbr.rel (%p694) target = $region108
        $region107: #{tpu_custom_call.1} parent=79 // pred_region
          %697 = dma.done %s691, 16
        $region108: #{tpu_custom_call.1} parent=79 // pred_fallthru
          _
        %s698 = sand.u32 %s29, 1
        %s699 = scalar_lea.sflag [#allocation4], %s698
        %s700 = sand.u32 %s282, 1
        %s701 = scalar_lea.vmem [#allocation13], %s700
        // Predicated region
        $region109: #{tpu_custom_call.1} parent=79 // pred_check
          %p702 = pneg %p295
        $region110: #{tpu_custom_call.1} parent=79 // pred_check_branch
          %704 = sbr.rel (%p702) target = $region112
        $region111: #{tpu_custom_call.1} parent=79 // pred_region
          %705 = dma.done %s699, 16
        $region112: #{tpu_custom_call.1} parent=79 // pred_fallthru
          _
        %s706 = sand.u32 %s29, 1
        %s707 = scalar_lea.sflag [#allocation4], %s706
        %s708 = sand.u32 %s308, 1
        %s709 = smul.addr %s708, 256
        %s710 = scalar_lea.vmem [#allocation14], %s709
        // Predicated region
        $region113: #{tpu_custom_call.1} parent=79 // pred_check
          %p711 = pneg %p321
        $region114: #{tpu_custom_call.1} parent=79 // pred_check_branch
          %713 = sbr.rel (%p711) target = $region116
        $region115: #{tpu_custom_call.1} parent=79 // pred_region
          %714 = dma.done %s707, 4096
        $region116: #{tpu_custom_call.1} parent=79 // pred_fallthru
          _
        %s715 = sand.u32 %s29, 1
        %s716 = scalar_lea.sflag [#allocation4], %s715
        %s717 = sand.u32 %s334, 1
        %s718 = smul.addr %s717, 4
        %s719 = scalar_lea.vmem [#allocation15], %s718
        // Predicated region
        $region117: #{tpu_custom_call.1} parent=79 // pred_check
          %p720 = pneg %p347
        $region118: #{tpu_custom_call.1} parent=79 // pred_check_branch
          %722 = sbr.rel (%p720) target = $region120
        $region119: #{tpu_custom_call.1} parent=79 // pred_region
          %723 = dma.done %s716, 64
        $region120: #{tpu_custom_call.1} parent=79 // pred_fallthru
          _
        %p724 = pneg %p45
        %p725 = pneg %p42
        %p726 = pneg %p66
        %p727 = pneg %p63
        %p728 = pneg %p87
        %p729 = pneg %p84
        %p730 = scmp.lt.s32.totalorder %s29, 1
        %s731 = scalar_select %p730, %s29, 1
        %s732 = scalar_lea.vmem %s3, %s731
        %p733 = pneg %p113
        %p734 = pneg %p110
        %s735 = sand.u32 %s29, 1
        %s736 = scalar_lea.sflag [#allocation4], %s735
        %s737 = sand.u32 %s126, 1
        %s738 = scalar_lea.vmem [#allocation8], %s737
        %p739 = pneg %p139
        %p740 = pneg %p136
        %p741 = scmp.lt.s32.totalorder %s29, 1
        %s742 = scalar_select %p741, %s29, 1
        %s743 = smul.addr %s742, 16
        %s744 = smul.addr %s743, 8
        %s745 = scalar_lea.vmem %s5, %s744
        %p746 = pneg %p165
        %p747 = pneg %p162
        %s748 = sand.u32 %s29, 1
        %s749 = scalar_lea.sflag [#allocation4], %s748
        %s750 = sand.u32 %s178, 1
        %s751 = scalar_lea.vmem [#allocation9], %s750
        %p752 = pneg %p191
        %p753 = pneg %p188
        %s754 = sand.u32 %s29, 1
        %s755 = scalar_lea.sflag [#allocation4], %s754
        %s756 = sand.u32 %s204, 1
        %s757 = smul.addr %s756, 32
        %s758 = scalar_lea.vmem [#allocation10], %s757
        %p759 = pneg %p217
        %p760 = pneg %p214
        %s761 = sand.u32 %s29, 1
        %s762 = scalar_lea.sflag [#allocation4], %s761
        %s763 = sand.u32 %s230, 1
        %s764 = scalar_lea.vmem [#allocation11], %s763
        %p765 = pneg %p243
        %p766 = pneg %p240
        %s767 = sand.u32 %s29, 1
        %s768 = scalar_lea.sflag [#allocation4], %s767
        %s769 = sand.u32 %s256, 1
        %s770 = scalar_lea.vmem [#allocation12], %s769
        %p771 = pneg %p269
        %p772 = pneg %p266
        %s773 = sand.u32 %s29, 1
        %s774 = scalar_lea.sflag [#allocation4], %s773
        %s775 = sand.u32 %s282, 1
        %s776 = scalar_lea.vmem [#allocation13], %s775
        %p777 = pneg %p295
        %p778 = pneg %p292
        %s779 = sand.u32 %s29, 1
        %s780 = scalar_lea.sflag [#allocation4], %s779
        %s781 = sand.u32 %s308, 1
        %s782 = smul.addr %s781, 256
        %s783 = scalar_lea.vmem [#allocation14], %s782
        %p784 = pneg %p321
        %p785 = pneg %p318
        %s786 = sand.u32 %s29, 1
        %s787 = scalar_lea.sflag [#allocation4], %s786
        %s788 = sand.u32 %s334, 1
        %s789 = smul.addr %s788, 4
        %s790 = scalar_lea.vmem [#allocation15], %s789
        %p791 = pneg %p347
        %p792 = pneg %p344
        %p793 = scmp.lt.s32.totalorder %s29, 1
        %s794 = scalar_select %p793, %s29, 1
        %s795 = smul.addr %s794, 64
        %s796 = smul.addr %s795, 4
        %s797 = scalar_lea.vmem %s13, %s796
        %p798 = pneg %p373
        %p799 = pneg %p370
        %p800 = scmp.lt.s32.totalorder %s29, 1
        %s801 = scalar_select %p800, %s29, 1
        %s802 = scalar_lea.vmem %s14, %s801
        %p803 = pneg %p399
        %p804 = pneg %p396
        %p805 = pneg %p420
        %p806 = pneg %p417
        %p807 = scmp.lt.s32.totalorder %s29, 1
        %s808 = scalar_select %p807, %s29, 1
        %s809 = scalar_lea.vmem %s3, %s808
        %p810 = scmp.lt.s32.totalorder %s29, 1
        %s811 = scalar_select %p810, %s29, 1
        %s812 = smul.addr %s811, 16
        %s813 = smul.addr %s812, 8
        %s814 = scalar_lea.vmem %s5, %s813
        %p815 = scmp.lt.s32.totalorder %s29, 1
        %s816 = scalar_select %p815, %s29, 1
        %s817 = smul.addr %s816, 64
        %s818 = smul.addr %s817, 4
        %s819 = scalar_lea.vmem %s13, %s818
        %p820 = scmp.lt.s32.totalorder %s29, 1
        %s821 = scalar_select %p820, %s29, 1
        %s822 = scalar_lea.vmem %s14, %s821
        %p824 = scmp.eq.s32.totalorder %s29, 0
        // Predicated region
        $region121: #{tpu_custom_call.1} parent=79 // pred_check
          %p825 = pneg %p824
        $region122: #{tpu_custom_call.1} parent=79 // pred_check_branch
          %827 = sbr.rel (%p825) target = $region124
        $region123: #{tpu_custom_call.1} parent=79 // pred_region
          %v828 = vld [vmem:[%s0] sm:$0xff]
          %v829 = vld [vmem:[%s0 + $0x8] sm:$0xff]
          %v830 = vlaneseq
          %v831 = vand.u32 %v830, 127
          %832 = vset.pattern.permute.xlu0 0
          %833 = vperm.xlu0 %832, %v828
          %v834 = vpop.permute.xlu0 %833
          %835 = vset.pattern.permute.xlu0 0
          %836 = vperm.xlu0 %835, %v829
          %v837 = vpop.permute.xlu0 %836
          %vm838 = vcmp.eq.s32.totalorder %v831, %v834
          %vm839 = vcmp.eq.s32.totalorder %v831, %v837
          %v840 = vsel %vm838, 1, 0
          %v841 = vsel %vm839, 1, 0
          %v842 = vcvt.s32.f32 %v840
          %v843 = vcvt.s32.f32 %v841
          %v844 = vld [vmem:[#allocation3] sm:$0xff]
          %v845 = vld [vmem:[#allocation3 + $0x8] sm:$0xff]
          %v846 = vld [vmem:[#allocation3 + $0x10] sm:$0xff]
          %v847 = vld [vmem:[#allocation3 + $0x18] sm:$0xff]
          %v848 = vld [vmem:[#allocation3 + $0x20] sm:$0xff]
          %v849 = vld [vmem:[#allocation3 + $0x28] sm:$0xff]
          %v850 = vld [vmem:[#allocation3 + $0x30] sm:$0xff]
          %v851 = vld [vmem:[#allocation3 + $0x38] sm:$0xff]
          %v852 = vld [vmem:[#allocation6] sm:$0xff]
          %v853 = vld [vmem:[#allocation6 + $0x8] sm:$0xff]
          %vm854 = vcmask 523264
          %v856 = vsel %vm854, %v842, 0
          %v859 = vsel %vm854, %v843, 0
          %861 = vmatprep.subr.mxu0 0.0
          %862 = vmatpush1.msra.mxu0 %v844
          %863 = vmatprep.subr.mxu0 0.0
          %864 = vmatpush1.msra.mxu0 %v845
          %865 = vmatprep.subr.mxu0 0.0
          %866 = vmatpush1.msra.mxu0 %v846
          %867 = vmatprep.subr.mxu0 0.0
          %868 = vmatpush1.msra.mxu0 %v847
          %869 = vmatprep.subr.mxu0 0.0
          %870 = vmatpush1.msra.mxu0 %v848
          %871 = vmatprep.subr.mxu0 0.0
          %872 = vmatpush1.msra.mxu0 %v849
          %873 = vmatprep.subr.mxu0 0.0
          %874 = vmatpush1.msra.mxu0 %v850
          %875 = vmatprep.subr.mxu0 0.0
          %876 = vmatpush1.msra.mxu0 %v851
          %877 = vmatprep.subr.mxu0 0.0
          %878 = vmatpush1.msra.mxu0 0.0
          %879 = vmatprep.subr.mxu0 0.0
          %880 = vmatpush1.msra.mxu0 0.0
          %881 = vmatprep.subr.mxu0 0.0
          %882 = vmatpush1.msra.mxu0 0.0
          %883 = vmatprep.subr.mxu0 0.0
          %884 = vmatpush1.msra.mxu0 0.0
          %885 = vmatprep.subr.mxu0 0.0
          %886 = vmatpush1.msra.mxu0 0.0
          %887 = vmatprep.subr.mxu0 0.0
          %888 = vmatpush1.msra.mxu0 0.0
          %889 = vmatprep.subr.mxu0 0.0
          %890 = vmatpush1.msra.mxu0 0.0
          %891 = vmatprep.subr.mxu0 0.0
          %892 = vmatpush1.msra.mxu0 0.0
          %893 = vmatprep.subr.mxu0 0.0
          %894 = vmatpush1.msra.mxu0 0.0
          %895 = vmatprep.subr.mxu0 0.0
          %896 = vmatpush1.msra.mxu0 0.0
          %897 = vmatprep.subr.mxu0 0.0
          %898 = vmatpush1.msra.mxu0 0.0
          %899 = vmatprep.subr.mxu0 0.0
          %900 = vmatpush1.msra.mxu0 0.0
          %901 = vmatprep.subr.mxu0 0.0
          %902 = vmatpush1.msra.mxu0 0.0
          %903 = vmatprep.subr.mxu0 0.0
          %904 = vmatpush1.msra.mxu0 0.0
          %905 = vmatprep.subr.mxu0 0.0
          %906 = vmatpush1.msra.mxu0 0.0
          %907 = vmatprep.subr.mxu0 0.0
          %908 = vmatpush1.msra.mxu0 0.0
          %909 = vmatprep.subr.mxu0 0.0
          %910 = vmatpush1.msra.mxu0 0.0
          %911 = vmatprep.subr.mxu0 0.0
          %912 = vmatpush1.msra.mxu0 0.0
          %913 = vmatprep.subr.mxu0 0.0
          %914 = vmatpush1.msra.mxu0 0.0
          %915 = vmatprep.subr.mxu0 0.0
          %916 = vmatpush1.msra.mxu0 0.0
          %917 = vmatprep.subr.mxu0 0.0
          %918 = vmatpush1.msra.mxu0 0.0
          %919 = vmatprep.subr.mxu0 0.0
          %920 = vmatpush1.msra.mxu0 0.0
          %921 = vmatprep.subr.mxu0 0.0
          %922 = vmatpush1.msra.mxu0 0.0
          %923 = vmatprep.subr.mxu0 0.0
          %924 = vmatpush1.msra.mxu0 0.0
          %925 = vmatprep.mubr.f32.mxu0 0.0
          %926 = vmatmul.mubr.f32.gmra.mrb[0].mxu0 %v856
          %v927 = vpop.f32.mrb[0].mxu0
          %v928 = vadd.f32 %v852, %v927
          %v929 = vpop.f32.mrb[0].mxu0
          %930 = vmatprep.mubr.f32.mxu0 0.0
          %931 = vmatmul.mubr.f32.gmra.mrb[0].mxu0 %v859
          %v932 = vpop.f32.mrb[0].mxu0
          %v933 = vadd.f32 %v853, %v932
          %v934 = vpop.f32.mrb[0].mxu0
          %935 = vdwg.mxu0
          %936 = vst [vmem:[#allocation2] sm:$0xff] %v928
          %937 = vst [vmem:[#allocation2 + $0x8] sm:$0xff] %v933
        $region124: #{tpu_custom_call.1} parent=79 // pred_fallthru
          _
        %v938 = vld [vmem:[#allocation2] sm:$0xff]
        %v939 = vld [vmem:[#allocation2 + $0x8] sm:$0xff]
        %v940 = vld [vmem:[%s809] sm:$0x1]
        %v941 = vld [vmem:[%s660] sm:$0x1]
        %942 = vadd.xlane.f32.xlu0 %v938
        %v943 = vpop.xlane.xlu0 %942
        %944 = vadd.xlane.f32.xlu0 %v939
        %v945 = vpop.xlane.xlu0 %944
        %v946 = vmul.f32 %v943, 0.0078125
        %v947 = vmul.f32 %v945, 0.0078125
        %v948 = vsub.f32 %v938, %v946
        %v949 = vsub.f32 %v939, %v947
        %v950 = vmul.f32 %v948, %v948
        %v951 = vmul.f32 %v949, %v949
        %952 = vadd.xlane.f32.xlu0 %v950
        %v953 = vpop.xlane.xlu0 %952
        %954 = vadd.xlane.f32.xlu0 %v951
        %v955 = vpop.xlane.xlu0 %954
        %v956 = vmul.f32 %v953, 0.0078125
        %v957 = vmul.f32 %v955, 0.0078125
        %v958 = vadd.f32 %v956, 1e-05
        %v959 = vadd.f32 %v957, 1e-05
        %v960 = vrsqrt.pop %v958
        %v961 = vrsqrt.pop %v959
        %v962 = vmul.f32 %v948, %v960
        %v963 = vmul.f32 %v949, %v961
        %v965 = vlaneseq
        %v966 = vshrl.u32 %v965, 7
        %v967 = vsub.s32 0, %v966
        %v968 = vrot.slane %v940, %v967
        %v970 = vmul.f32 %v962, %v968
        %v971 = vmul.f32 %v963, %v968
        %v973 = vlaneseq
        %v974 = vshrl.u32 %v973, 7
        %v975 = vsub.s32 0, %v974
        %v976 = vrot.slane %v941, %v975
        %v978 = vadd.f32 %v970, %v976
        %v979 = vadd.f32 %v971, %v976
        %v980 = vld [vmem:[%s814] sm:$0xff]
        %v981 = vld [vmem:[%s814 + $0x8] sm:$0xff]
        %v982 = vld [vmem:[%s814 + $0x10] sm:$0xff]
        %v983 = vld [vmem:[%s814 + $0x18] sm:$0xff]
        %v984 = vld [vmem:[%s814 + $0x20] sm:$0xff]
        %v985 = vld [vmem:[%s814 + $0x28] sm:$0xff]
        %v986 = vld [vmem:[%s814 + $0x30] sm:$0xff]
        %v987 = vld [vmem:[%s814 + $0x38] sm:$0xff]
        %v988 = vld [vmem:[%s814 + $0x40] sm:$0xff]
        %v989 = vld [vmem:[%s814 + $0x48] sm:$0xff]
        %v990 = vld [vmem:[%s814 + $0x50] sm:$0xff]
        %v991 = vld [vmem:[%s814 + $0x58] sm:$0xff]
        %v992 = vld [vmem:[%s814 + $0x60] sm:$0xff]
        %v993 = vld [vmem:[%s814 + $0x68] sm:$0xff]
        %v994 = vld [vmem:[%s814 + $0x70] sm:$0xff]
        %v995 = vld [vmem:[%s814 + $0x78] sm:$0xff]
        %v996 = vld [vmem:[%s668] sm:$0x1]
        %v998 = vlaneseq
        %v999 = vshrl.u32 %v998, 7
        %v1000 = vsub.s32 0, %v999
        %v1001 = vrot.slane %v996, %v1000
        %1003 = vmatprep.subr.mxu0 0.0
        %1004 = vmatpush1.msra.mxu0 %v980
        %1005 = vmatprep.subr.mxu0 0.0
        %1006 = vmatpush1.msra.mxu0 %v981
        %1007 = vmatprep.subr.mxu0 0.0
        %1008 = vmatpush1.msra.mxu0 %v982
        %1009 = vmatprep.subr.mxu0 0.0
        %1010 = vmatpush1.msra.mxu0 %v983
        %1011 = vmatprep.subr.mxu0 0.0
        %1012 = vmatpush1.msra.mxu0 %v984
        %1013 = vmatprep.subr.mxu0 0.0
        %1014 = vmatpush1.msra.mxu0 %v985
        %1015 = vmatprep.subr.mxu0 0.0
        %1016 = vmatpush1.msra.mxu0 %v986
        %1017 = vmatprep.subr.mxu0 0.0
        %1018 = vmatpush1.msra.mxu0 %v987
        %1019 = vmatprep.subr.mxu0 0.0
        %1020 = vmatpush1.msra.mxu0 %v988
        %1021 = vmatprep.subr.mxu0 0.0
        %1022 = vmatpush1.msra.mxu0 %v989
        %1023 = vmatprep.subr.mxu0 0.0
        %1024 = vmatpush1.msra.mxu0 %v990
        %1025 = vmatprep.subr.mxu0 0.0
        %1026 = vmatpush1.msra.mxu0 %v991
        %1027 = vmatprep.subr.mxu0 0.0
        %1028 = vmatpush1.msra.mxu0 %v992
        %1029 = vmatprep.subr.mxu0 0.0
        %1030 = vmatpush1.msra.mxu0 %v993
        %1031 = vmatprep.subr.mxu0 0.0
        %1032 = vmatpush1.msra.mxu0 %v994
        %1033 = vmatprep.subr.mxu0 0.0
        %1034 = vmatpush1.msra.mxu0 %v995
        %1035 = vmatprep.subr.mxu0 0.0
        %1036 = vmatpush1.msra.mxu0 0.0
        %1037 = vmatprep.subr.mxu0 0.0
        %1038 = vmatpush1.msra.mxu0 0.0
        %1039 = vmatprep.subr.mxu0 0.0
        %1040 = vmatpush1.msra.mxu0 0.0
        %1041 = vmatprep.subr.mxu0 0.0
        %1042 = vmatpush1.msra.mxu0 0.0
        %1043 = vmatprep.subr.mxu0 0.0
        %1044 = vmatpush1.msra.mxu0 0.0
        %1045 = vmatprep.subr.mxu0 0.0
        %1046 = vmatpush1.msra.mxu0 0.0
        %1047 = vmatprep.subr.mxu0 0.0
        %1048 = vmatpush1.msra.mxu0 0.0
        %1049 = vmatprep.subr.mxu0 0.0
        %1050 = vmatpush1.msra.mxu0 0.0
        %1051 = vmatprep.subr.mxu0 0.0
        %1052 = vmatpush1.msra.mxu0 0.0
        %1053 = vmatprep.subr.mxu0 0.0
        %1054 = vmatpush1.msra.mxu0 0.0
        %1055 = vmatprep.subr.mxu0 0.0
        %1056 = vmatpush1.msra.mxu0 0.0
        %1057 = vmatprep.subr.mxu0 0.0
        %1058 = vmatpush1.msra.mxu0 0.0
        %1059 = vmatprep.subr.mxu0 0.0
        %1060 = vmatpush1.msra.mxu0 0.0
        %1061 = vmatprep.subr.mxu0 0.0
        %1062 = vmatpush1.msra.mxu0 0.0
        %1063 = vmatprep.subr.mxu0 0.0
        %1064 = vmatpush1.msra.mxu0 0.0
        %1065 = vmatprep.subr.mxu0 0.0
        %1066 = vmatpush1.msra.mxu0 0.0
        %1067 = vmatprep.mubr.f32.mxu0 0.0
        %1068 = vmatmul.mubr.f32.gmra.mrb[0].mxu0 %v978
        %v1069 = vpop.f32.mrb[0].mxu0
        %v1070 = vadd.f32 %v1001, %v1069
        %v1071 = vpop.f32.mrb[0].mxu0
        %1072 = vmatprep.mubr.f32.mxu0 0.0
        %1073 = vmatmul.mubr.f32.gmra.mrb[0].mxu0 %v979
        %v1074 = vpop.f32.mrb[0].mxu0
        %v1075 = vadd.f32 %v1001, %v1074
        %v1076 = vpop.f32.mrb[0].mxu0
        %1077 = vdwg.mxu0
        %1079 = vrot.lane.b32.xlu0 %v1070, 96
        %v1080 = vpop.permute.xlu0 %1079
        %vm1081 = vcmask 64512
        %v1082 = vsel %vm1081, %v1070, 0
        %v1084 = vsel %vm1081, %v1080, 0
        %1086 = vmatprep.subr.mxu0 0.0
        %1087 = vmatpush1.xpose.msra.mxu0 %v1084
        %1088 = vmatprep.subr.mxu0 0.0
        %1089 = vmatpush1.xpose.msra.mxu0 0.0
        %1090 = vmatprep.subr.mxu0 0.0
        %1091 = vmatpush1.xpose.msra.mxu0 0.0
        %1092 = vmatprep.subr.mxu0 0.0
        %1093 = vmatpush1.xpose.msra.mxu0 0.0
        %1094 = vmatprep.subr.mxu0 0.0
        %1095 = vmatpush1.xpose.msra.mxu0 0.0
        %1096 = vmatprep.subr.mxu0 0.0
        %1097 = vmatpush1.xpose.msra.mxu0 0.0
        %1098 = vmatprep.subr.mxu0 0.0
        %1099 = vmatpush1.xpose.msra.mxu0 0.0
        %1100 = vmatprep.subr.mxu0 0.0
        %1101 = vmatpush1.xpose.msra.mxu0 0.0
        %1102 = vmatprep.subr.mxu0 0.0
        %1103 = vmatpush1.xpose.msra.mxu0 0.0
        %1104 = vmatprep.subr.mxu0 0.0
        %1105 = vmatpush1.xpose.msra.mxu0 0.0
        %1106 = vmatprep.subr.mxu0 0.0
        %1107 = vmatpush1.xpose.msra.mxu0 0.0
        %1108 = vmatprep.subr.mxu0 0.0
        %1109 = vmatpush1.xpose.msra.mxu0 0.0
        %1110 = vmatprep.subr.mxu0 0.0
        %1111 = vmatpush1.xpose.msra.mxu0 0.0
        %1112 = vmatprep.subr.mxu0 0.0
        %1113 = vmatpush1.xpose.msra.mxu0 0.0
        %1114 = vmatprep.subr.mxu0 0.0
        %1115 = vmatpush1.xpose.msra.mxu0 0.0
        %1116 = vmatprep.subr.mxu0 0.0
        %1117 = vmatpush1.xpose.msra.mxu0 0.0
        %1118 = vmatprep.subr.mxu0 0.0
        %1119 = vmatpush1.xpose.msra.mxu0 0.0
        %1120 = vmatprep.subr.mxu0 0.0
        %1121 = vmatpush1.xpose.msra.mxu0 0.0
        %1122 = vmatprep.subr.mxu0 0.0
        %1123 = vmatpush1.xpose.msra.mxu0 0.0
        %1124 = vmatprep.subr.mxu0 0.0
        %1125 = vmatpush1.xpose.msra.mxu0 0.0
        %1126 = vmatprep.subr.mxu0 0.0
        %1127 = vmatpush1.xpose.msra.mxu0 0.0
        %1128 = vmatprep.subr.mxu0 0.0
        %1129 = vmatpush1.xpose.msra.mxu0 0.0
        %1130 = vmatprep.subr.mxu0 0.0
        %1131 = vmatpush1.xpose.msra.mxu0 0.0
        %1132 = vmatprep.subr.mxu0 0.0
        %1133 = vmatpush1.xpose.msra.mxu0 0.0
        %1134 = vmatprep.subr.mxu0 0.0
        %1135 = vmatpush1.xpose.msra.mxu0 0.0
        %1136 = vmatprep.subr.mxu0 0.0
        %1137 = vmatpush1.xpose.msra.mxu0 0.0
        %1138 = vmatprep.subr.mxu0 0.0
        %1139 = vmatpush1.xpose.msra.mxu0 0.0
        %1140 = vmatprep.subr.mxu0 0.0
        %1141 = vmatpush1.xpose.msra.mxu0 0.0
        %1142 = vmatprep.subr.mxu0 0.0
        %1143 = vmatpush1.xpose.msra.mxu0 0.0
        %1144 = vmatprep.subr.mxu0 0.0
        %1145 = vmatpush1.xpose.msra.mxu0 0.0
        %1146 = vmatprep.subr.mxu0 0.0
        %1147 = vmatpush1.xpose.msra.mxu0 0.0
        %1148 = vmatprep.subr.mxu0 0.0
        %1149 = vmatpush1.xpose.msra.mxu0 0.0
        %1150 = vmatprep.mubr.f32.mxu0 0.0
        %1151 = vmatmul.mubr.f32.gmra.mrb[0].mxu0 %v1082
        %v1152 = vpop.f32.mrb[0].mxu0
        %v1153 = vadd.f32 0.0, %v1152
        %v1154 = vpop.f32.mrb[0].mxu0
        %1155 = vdwg.mxu0
        %1157 = vrot.lane.b32.xlu0 %v1075, 96
        %v1158 = vpop.permute.xlu0 %1157
        %v1159 = vsel %vm1081, %v1075, 0
        %v1161 = vsel %vm1081, %v1158, 0
        %1163 = vmatprep.subr.mxu0 0.0
        %1164 = vmatpush1.xpose.msra.mxu0 %v1161
        %1165 = vmatprep.subr.mxu0 0.0
        %1166 = vmatpush1.xpose.msra.mxu0 0.0
        %1167 = vmatprep.subr.mxu0 0.0
        %1168 = vmatpush1.xpose.msra.mxu0 0.0
        %1169 = vmatprep.subr.mxu0 0.0
        %1170 = vmatpush1.xpose.msra.mxu0 0.0
        %1171 = vmatprep.subr.mxu0 0.0
        %1172 = vmatpush1.xpose.msra.mxu0 0.0
        %1173 = vmatprep.subr.mxu0 0.0
        %1174 = vmatpush1.xpose.msra.mxu0 0.0
        %1175 = vmatprep.subr.mxu0 0.0
        %1176 = vmatpush1.xpose.msra.mxu0 0.0
        %1177 = vmatprep.subr.mxu0 0.0
        %1178 = vmatpush1.xpose.msra.mxu0 0.0
        %1179 = vmatprep.subr.mxu0 0.0
        %1180 = vmatpush1.xpose.msra.mxu0 0.0
        %1181 = vmatprep.subr.mxu0 0.0
        %1182 = vmatpush1.xpose.msra.mxu0 0.0
        %1183 = vmatprep.subr.mxu0 0.0
        %1184 = vmatpush1.xpose.msra.mxu0 0.0
        %1185 = vmatprep.subr.mxu0 0.0
        %1186 = vmatpush1.xpose.msra.mxu0 0.0
        %1187 = vmatprep.subr.mxu0 0.0
        %1188 = vmatpush1.xpose.msra.mxu0 0.0
        %1189 = vmatprep.subr.mxu0 0.0
        %1190 = vmatpush1.xpose.msra.mxu0 0.0
        %1191 = vmatprep.subr.mxu0 0.0
        %1192 = vmatpush1.xpose.msra.mxu0 0.0
        %1193 = vmatprep.subr.mxu0 0.0
        %1194 = vmatpush1.xpose.msra.mxu0 0.0
        %1195 = vmatprep.subr.mxu0 0.0
        %1196 = vmatpush1.xpose.msra.mxu0 0.0
        %1197 = vmatprep.subr.mxu0 0.0
        %1198 = vmatpush1.xpose.msra.mxu0 0.0
        %1199 = vmatprep.subr.mxu0 0.0
        %1200 = vmatpush1.xpose.msra.mxu0 0.0
        %1201 = vmatprep.subr.mxu0 0.0
        %1202 = vmatpush1.xpose.msra.mxu0 0.0
        %1203 = vmatprep.subr.mxu0 0.0
        %1204 = vmatpush1.xpose.msra.mxu0 0.0
        %1205 = vmatprep.subr.mxu0 0.0
        %1206 = vmatpush1.xpose.msra.mxu0 0.0
        %1207 = vmatprep.subr.mxu0 0.0
        %1208 = vmatpush1.xpose.msra.mxu0 0.0
        %1209 = vmatprep.subr.mxu0 0.0
        %1210 = vmatpush1.xpose.msra.mxu0 0.0
        %1211 = vmatprep.subr.mxu0 0.0
        %1212 = vmatpush1.xpose.msra.mxu0 0.0
        %1213 = vmatprep.subr.mxu0 0.0
        %1214 = vmatpush1.xpose.msra.mxu0 0.0
        %1215 = vmatprep.subr.mxu0 0.0
        %1216 = vmatpush1.xpose.msra.mxu0 0.0
        %1217 = vmatprep.subr.mxu0 0.0
        %1218 = vmatpush1.xpose.msra.mxu0 0.0
        %1219 = vmatprep.subr.mxu0 0.0
        %1220 = vmatpush1.xpose.msra.mxu0 0.0
        %1221 = vmatprep.subr.mxu0 0.0
        %1222 = vmatpush1.xpose.msra.mxu0 0.0
        %1223 = vmatprep.subr.mxu0 0.0
        %1224 = vmatpush1.xpose.msra.mxu0 0.0
        %1225 = vmatprep.subr.mxu0 0.0
        %1226 = vmatpush1.xpose.msra.mxu0 0.0
        %1227 = vmatprep.mubr.f32.mxu0 0.0
        %1228 = vmatmul.mubr.f32.gmra.mrb[0].mxu0 %v1159
        %v1229 = vpop.f32.mrb[0].mxu0
        %v1230 = vadd.f32 0.0, %v1229
        %v1231 = vpop.f32.mrb[0].mxu0
        %1232 = vdwg.mxu0
        %v1233 = vmul.f32 %v1153, 1.442695
        %v1234 = vpow.pop %v1233
        %v1235 = vmul.f32 %v1230, 1.442695
        %v1236 = vpow.pop %v1235
        %v1237 = vsel %vm1081, %v1234, 0.0
        %1238 = vadd.xlane.f32.xlu0 %v1237
        %v1239 = vpop.xlane.xlu0 %1238
        %v1240 = vsel %vm1081, %v1236, 0.0
        %1241 = vadd.xlane.f32.xlu0 %v1240
        %v1242 = vpop.xlane.xlu0 %1241
        %v1243 = vrcp.pop %v1239
        %v1244 = vrcp.pop %v1242
        %v1245 = vmul.f32 %v1234, %v1243
        %v1246 = vmul.f32 %v1236, %v1244
        %1247 = vrot.lane.b32.xlu0 %v1070, 64
        %v1248 = vpop.permute.xlu0 %1247
        %v1251 = vsel %vm1081, %v1245, 0
        %1253 = vmatprep.subr.mxu0 0.0
        %1254 = vmatpush1.msra.mxu0 %v1248
        %1255 = vmatprep.subr.mxu0 0.0
        %1256 = vmatpush1.msra.mxu0 0.0
        %1257 = vmatprep.subr.mxu0 0.0
        %1258 = vmatpush1.msra.mxu0 0.0
        %1259 = vmatprep.subr.mxu0 0.0
        %1260 = vmatpush1.msra.mxu0 0.0
        %1261 = vmatprep.subr.mxu0 0.0
        %1262 = vmatpush1.msra.mxu0 0.0
        %1263 = vmatprep.subr.mxu0 0.0
        %1264 = vmatpush1.msra.mxu0 0.0
        %1265 = vmatprep.subr.mxu0 0.0
        %1266 = vmatpush1.msra.mxu0 0.0
        %1267 = vmatprep.subr.mxu0 0.0
        %1268 = vmatpush1.msra.mxu0 0.0
        %1269 = vmatprep.subr.mxu0 0.0
        %1270 = vmatpush1.msra.mxu0 0.0
        %1271 = vmatprep.subr.mxu0 0.0
        %1272 = vmatpush1.msra.mxu0 0.0
        %1273 = vmatprep.subr.mxu0 0.0
        %1274 = vmatpush1.msra.mxu0 0.0
        %1275 = vmatprep.subr.mxu0 0.0
        %1276 = vmatpush1.msra.mxu0 0.0
        %1277 = vmatprep.subr.mxu0 0.0
        %1278 = vmatpush1.msra.mxu0 0.0
        %1279 = vmatprep.subr.mxu0 0.0
        %1280 = vmatpush1.msra.mxu0 0.0
        %1281 = vmatprep.subr.mxu0 0.0
        %1282 = vmatpush1.msra.mxu0 0.0
        %1283 = vmatprep.subr.mxu0 0.0
        %1284 = vmatpush1.msra.mxu0 0.0
        %1285 = vmatprep.subr.mxu0 0.0
        %1286 = vmatpush1.msra.mxu0 0.0
        %1287 = vmatprep.subr.mxu0 0.0
        %1288 = vmatpush1.msra.mxu0 0.0
        %1289 = vmatprep.subr.mxu0 0.0
        %1290 = vmatpush1.msra.mxu0 0.0
        %1291 = vmatprep.subr.mxu0 0.0
        %1292 = vmatpush1.msra.mxu0 0.0
        %1293 = vmatprep.subr.mxu0 0.0
        %1294 = vmatpush1.msra.mxu0 0.0
        %1295 = vmatprep.subr.mxu0 0.0
        %1296 = vmatpush1.msra.mxu0 0.0
        %1297 = vmatprep.subr.mxu0 0.0
        %1298 = vmatpush1.msra.mxu0 0.0
        %1299 = vmatprep.subr.mxu0 0.0
        %1300 = vmatpush1.msra.mxu0 0.0
        %1301 = vmatprep.subr.mxu0 0.0
        %1302 = vmatpush1.msra.mxu0 0.0
        %1303 = vmatprep.subr.mxu0 0.0
        %1304 = vmatpush1.msra.mxu0 0.0
        %1305 = vmatprep.subr.mxu0 0.0
        %1306 = vmatpush1.msra.mxu0 0.0
        %1307 = vmatprep.subr.mxu0 0.0
        %1308 = vmatpush1.msra.mxu0 0.0
        %1309 = vmatprep.subr.mxu0 0.0
        %1310 = vmatpush1.msra.mxu0 0.0
        %1311 = vmatprep.subr.mxu0 0.0
        %1312 = vmatpush1.msra.mxu0 0.0
        %1313 = vmatprep.subr.mxu0 0.0
        %1314 = vmatpush1.msra.mxu0 0.0
        %1315 = vmatprep.subr.mxu0 0.0
        %1316 = vmatpush1.msra.mxu0 0.0
        %1317 = vmatprep.mubr.f32.mxu0 0.0
        %1318 = vmatmul.mubr.f32.gmra.mrb[0].mxu0 %v1251
        %v1319 = vpop.f32.mrb[0].mxu0
        %v1320 = vadd.f32 0.0, %v1319
        %v1321 = vpop.f32.mrb[0].mxu0
        %1322 = vdwg.mxu0
        %1323 = vrot.lane.b32.xlu0 %v1075, 64
        %v1324 = vpop.permute.xlu0 %1323
        %v1327 = vsel %vm1081, %v1246, 0
        %1329 = vmatprep.subr.mxu0 0.0
        %1330 = vmatpush1.msra.mxu0 %v1324
        %1331 = vmatprep.subr.mxu0 0.0
        %1332 = vmatpush1.msra.mxu0 0.0
        %1333 = vmatprep.subr.mxu0 0.0
        %1334 = vmatpush1.msra.mxu0 0.0
        %1335 = vmatprep.subr.mxu0 0.0
        %1336 = vmatpush1.msra.mxu0 0.0
        %1337 = vmatprep.subr.mxu0 0.0
        %1338 = vmatpush1.msra.mxu0 0.0
        %1339 = vmatprep.subr.mxu0 0.0
        %1340 = vmatpush1.msra.mxu0 0.0
        %1341 = vmatprep.subr.mxu0 0.0
        %1342 = vmatpush1.msra.mxu0 0.0
        %1343 = vmatprep.subr.mxu0 0.0
        %1344 = vmatpush1.msra.mxu0 0.0
        %1345 = vmatprep.subr.mxu0 0.0
        %1346 = vmatpush1.msra.mxu0 0.0
        %1347 = vmatprep.subr.mxu0 0.0
        %1348 = vmatpush1.msra.mxu0 0.0
        %1349 = vmatprep.subr.mxu0 0.0
        %1350 = vmatpush1.msra.mxu0 0.0
        %1351 = vmatprep.subr.mxu0 0.0
        %1352 = vmatpush1.msra.mxu0 0.0
        %1353 = vmatprep.subr.mxu0 0.0
        %1354 = vmatpush1.msra.mxu0 0.0
        %1355 = vmatprep.subr.mxu0 0.0
        %1356 = vmatpush1.msra.mxu0 0.0
        %1357 = vmatprep.subr.mxu0 0.0
        %1358 = vmatpush1.msra.mxu0 0.0
        %1359 = vmatprep.subr.mxu0 0.0
        %1360 = vmatpush1.msra.mxu0 0.0
        %1361 = vmatprep.subr.mxu0 0.0
        %1362 = vmatpush1.msra.mxu0 0.0
        %1363 = vmatprep.subr.mxu0 0.0
        %1364 = vmatpush1.msra.mxu0 0.0
        %1365 = vmatprep.subr.mxu0 0.0
        %1366 = vmatpush1.msra.mxu0 0.0
        %1367 = vmatprep.subr.mxu0 0.0
        %1368 = vmatpush1.msra.mxu0 0.0
        %1369 = vmatprep.subr.mxu0 0.0
        %1370 = vmatpush1.msra.mxu0 0.0
        %1371 = vmatprep.subr.mxu0 0.0
        %1372 = vmatpush1.msra.mxu0 0.0
        %1373 = vmatprep.subr.mxu0 0.0
        %1374 = vmatpush1.msra.mxu0 0.0
        %1375 = vmatprep.subr.mxu0 0.0
        %1376 = vmatpush1.msra.mxu0 0.0
        %1377 = vmatprep.subr.mxu0 0.0
        %1378 = vmatpush1.msra.mxu0 0.0
        %1379 = vmatprep.subr.mxu0 0.0
        %1380 = vmatpush1.msra.mxu0 0.0
        %1381 = vmatprep.subr.mxu0 0.0
        %1382 = vmatpush1.msra.mxu0 0.0
        %1383 = vmatprep.subr.mxu0 0.0
        %1384 = vmatpush1.msra.mxu0 0.0
        %1385 = vmatprep.subr.mxu0 0.0
        %1386 = vmatpush1.msra.mxu0 0.0
        %1387 = vmatprep.subr.mxu0 0.0
        %1388 = vmatpush1.msra.mxu0 0.0
        %1389 = vmatprep.subr.mxu0 0.0
        %1390 = vmatpush1.msra.mxu0 0.0
        %1391 = vmatprep.subr.mxu0 0.0
        %1392 = vmatpush1.msra.mxu0 0.0
        %1393 = vmatprep.mubr.f32.mxu0 0.0
        %1394 = vmatmul.mubr.f32.gmra.mrb[0].mxu0 %v1327
        %v1395 = vpop.f32.mrb[0].mxu0
        %v1396 = vadd.f32 0.0, %v1395
        %v1397 = vpop.f32.mrb[0].mxu0
        %1398 = vdwg.mxu0
        %1399 = vrot.lane.b32.xlu0 %v1070, 120
        %v1400 = vpop.permute.xlu0 %1399
        %1401 = vrot.lane.b32.xlu0 %v1070, 88
        %v1402 = vpop.permute.xlu0 %1401
        %v1403 = vsel %vm1081, %v1400, 0
        %v1405 = vsel %vm1081, %v1402, 0
        %1407 = vmatprep.subr.mxu0 0.0
        %1408 = vmatpush1.xpose.msra.mxu0 %v1405
        %1409 = vmatprep.subr.mxu0 0.0
        %1410 = vmatpush1.xpose.msra.mxu0 0.0
        %1411 = vmatprep.subr.mxu0 0.0
        %1412 = vmatpush1.xpose.msra.mxu0 0.0
        %1413 = vmatprep.subr.mxu0 0.0
        %1414 = vmatpush1.xpose.msra.mxu0 0.0
        %1415 = vmatprep.subr.mxu0 0.0
        %1416 = vmatpush1.xpose.msra.mxu0 0.0
        %1417 = vmatprep.subr.mxu0 0.0
        %1418 = vmatpush1.xpose.msra.mxu0 0.0
        %1419 = vmatprep.subr.mxu0 0.0
        %1420 = vmatpush1.xpose.msra.mxu0 0.0
        %1421 = vmatprep.subr.mxu0 0.0
        %1422 = vmatpush1.xpose.msra.mxu0 0.0
        %1423 = vmatprep.subr.mxu0 0.0
        %1424 = vmatpush1.xpose.msra.mxu0 0.0
        %1425 = vmatprep.subr.mxu0 0.0
        %1426 = vmatpush1.xpose.msra.mxu0 0.0
        %1427 = vmatprep.subr.mxu0 0.0
        %1428 = vmatpush1.xpose.msra.mxu0 0.0
        %1429 = vmatprep.subr.mxu0 0.0
        %1430 = vmatpush1.xpose.msra.mxu0 0.0
        %1431 = vmatprep.subr.mxu0 0.0
        %1432 = vmatpush1.xpose.msra.mxu0 0.0
        %1433 = vmatprep.subr.mxu0 0.0
        %1434 = vmatpush1.xpose.msra.mxu0 0.0
        %1435 = vmatprep.subr.mxu0 0.0
        %1436 = vmatpush1.xpose.msra.mxu0 0.0
        %1437 = vmatprep.subr.mxu0 0.0
        %1438 = vmatpush1.xpose.msra.mxu0 0.0
        %1439 = vmatprep.subr.mxu0 0.0
        %1440 = vmatpush1.xpose.msra.mxu0 0.0
        %1441 = vmatprep.subr.mxu0 0.0
        %1442 = vmatpush1.xpose.msra.mxu0 0.0
        %1443 = vmatprep.subr.mxu0 0.0
        %1444 = vmatpush1.xpose.msra.mxu0 0.0
        %1445 = vmatprep.subr.mxu0 0.0
        %1446 = vmatpush1.xpose.msra.mxu0 0.0
        %1447 = vmatprep.subr.mxu0 0.0
        %1448 = vmatpush1.xpose.msra.mxu0 0.0
        %1449 = vmatprep.subr.mxu0 0.0
        %1450 = vmatpush1.xpose.msra.mxu0 0.0
        %1451 = vmatprep.subr.mxu0 0.0
        %1452 = vmatpush1.xpose.msra.mxu0 0.0
        %1453 = vmatprep.subr.mxu0 0.0
        %1454 = vmatpush1.xpose.msra.mxu0 0.0
        %1455 = vmatprep.subr.mxu0 0.0
        %1456 = vmatpush1.xpose.msra.mxu0 0.0
        %1457 = vmatprep.subr.mxu0 0.0
        %1458 = vmatpush1.xpose.msra.mxu0 0.0
        %1459 = vmatprep.subr.mxu0 0.0
        %1460 = vmatpush1.xpose.msra.mxu0 0.0
        %1461 = vmatprep.subr.mxu0 0.0
        %1462 = vmatpush1.xpose.msra.mxu0 0.0
        %1463 = vmatprep.subr.mxu0 0.0
        %1464 = vmatpush1.xpose.msra.mxu0 0.0
        %1465 = vmatprep.subr.mxu0 0.0
        %1466 = vmatpush1.xpose.msra.mxu0 0.0
        %1467 = vmatprep.subr.mxu0 0.0
        %1468 = vmatpush1.xpose.msra.mxu0 0.0
        %1469 = vmatprep.subr.mxu0 0.0
        %1470 = vmatpush1.xpose.msra.mxu0 0.0
        %1471 = vmatprep.mubr.f32.mxu0 0.0
        %1472 = vmatmul.mubr.f32.gmra.mrb[0].mxu0 %v1403
        %v1473 = vpop.f32.mrb[0].mxu0
        %v1474 = vadd.f32 0.0, %v1473
        %v1475 = vpop.f32.mrb[0].mxu0
        %1476 = vdwg.mxu0
        %1477 = vrot.lane.b32.xlu0 %v1075, 120
        %v1478 = vpop.permute.xlu0 %1477
        %1479 = vrot.lane.b32.xlu0 %v1075, 88
        %v1480 = vpop.permute.xlu0 %1479
        %v1481 = vsel %vm1081, %v1478, 0
        %v1483 = vsel %vm1081, %v1480, 0
        %1485 = vmatprep.subr.mxu0 0.0
        %1486 = vmatpush1.xpose.msra.mxu0 %v1483
        %1487 = vmatprep.subr.mxu0 0.0
        %1488 = vmatpush1.xpose.msra.mxu0 0.0
        %1489 = vmatprep.subr.mxu0 0.0
        %1490 = vmatpush1.xpose.msra.mxu0 0.0
        %1491 = vmatprep.subr.mxu0 0.0
        %1492 = vmatpush1.xpose.msra.mxu0 0.0
        %1493 = vmatprep.subr.mxu0 0.0
        %1494 = vmatpush1.xpose.msra.mxu0 0.0
        %1495 = vmatprep.subr.mxu0 0.0
        %1496 = vmatpush1.xpose.msra.mxu0 0.0
        %1497 = vmatprep.subr.mxu0 0.0
        %1498 = vmatpush1.xpose.msra.mxu0 0.0
        %1499 = vmatprep.subr.mxu0 0.0
        %1500 = vmatpush1.xpose.msra.mxu0 0.0
        %1501 = vmatprep.subr.mxu0 0.0
        %1502 = vmatpush1.xpose.msra.mxu0 0.0
        %1503 = vmatprep.subr.mxu0 0.0
        %1504 = vmatpush1.xpose.msra.mxu0 0.0
        %1505 = vmatprep.subr.mxu0 0.0
        %1506 = vmatpush1.xpose.msra.mxu0 0.0
        %1507 = vmatprep.subr.mxu0 0.0
        %1508 = vmatpush1.xpose.msra.mxu0 0.0
        %1509 = vmatprep.subr.mxu0 0.0
        %1510 = vmatpush1.xpose.msra.mxu0 0.0
        %1511 = vmatprep.subr.mxu0 0.0
        %1512 = vmatpush1.xpose.msra.mxu0 0.0
        %1513 = vmatprep.subr.mxu0 0.0
        %1514 = vmatpush1.xpose.msra.mxu0 0.0
        %1515 = vmatprep.subr.mxu0 0.0
        %1516 = vmatpush1.xpose.msra.mxu0 0.0
        %1517 = vmatprep.subr.mxu0 0.0
        %1518 = vmatpush1.xpose.msra.mxu0 0.0
        %1519 = vmatprep.subr.mxu0 0.0
        %1520 = vmatpush1.xpose.msra.mxu0 0.0
        %1521 = vmatprep.subr.mxu0 0.0
        %1522 = vmatpush1.xpose.msra.mxu0 0.0
        %1523 = vmatprep.subr.mxu0 0.0
        %1524 = vmatpush1.xpose.msra.mxu0 0.0
        %1525 = vmatprep.subr.mxu0 0.0
        %1526 = vmatpush1.xpose.msra.mxu0 0.0
        %1527 = vmatprep.subr.mxu0 0.0
        %1528 = vmatpush1.xpose.msra.mxu0 0.0
        %1529 = vmatprep.subr.mxu0 0.0
        %1530 = vmatpush1.xpose.msra.mxu0 0.0
        %1531 = vmatprep.subr.mxu0 0.0
        %1532 = vmatpush1.xpose.msra.mxu0 0.0
        %1533 = vmatprep.subr.mxu0 0.0
        %1534 = vmatpush1.xpose.msra.mxu0 0.0
        %1535 = vmatprep.subr.mxu0 0.0
        %1536 = vmatpush1.xpose.msra.mxu0 0.0
        %1537 = vmatprep.subr.mxu0 0.0
        %1538 = vmatpush1.xpose.msra.mxu0 0.0
        %1539 = vmatprep.subr.mxu0 0.0
        %1540 = vmatpush1.xpose.msra.mxu0 0.0
        %1541 = vmatprep.subr.mxu0 0.0
        %1542 = vmatpush1.xpose.msra.mxu0 0.0
        %1543 = vmatprep.subr.mxu0 0.0
        %1544 = vmatpush1.xpose.msra.mxu0 0.0
        %1545 = vmatprep.subr.mxu0 0.0
        %1546 = vmatpush1.xpose.msra.mxu0 0.0
        %1547 = vmatprep.subr.mxu0 0.0
        %1548 = vmatpush1.xpose.msra.mxu0 0.0
        %1549 = vmatprep.mubr.f32.mxu0 0.0
        %1550 = vmatmul.mubr.f32.gmra.mrb[0].mxu0 %v1481
        %v1551 = vpop.f32.mrb[0].mxu0
        %v1552 = vadd.f32 0.0, %v1551
        %v1553 = vpop.f32.mrb[0].mxu0
        %1554 = vdwg.mxu0
        %v1555 = vmul.f32 %v1474, 1.442695
        %v1556 = vpow.pop %v1555
        %v1557 = vmul.f32 %v1552, 1.442695
        %v1558 = vpow.pop %v1557
        %v1559 = vsel %vm1081, %v1556, 0.0
        %1560 = vadd.xlane.f32.xlu0 %v1559
        %v1561 = vpop.xlane.xlu0 %1560
        %v1562 = vsel %vm1081, %v1558, 0.0
        %1563 = vadd.xlane.f32.xlu0 %v1562
        %v1564 = vpop.xlane.xlu0 %1563
        %v1565 = vrcp.pop %v1561
        %v1566 = vrcp.pop %v1564
        %v1567 = vmul.f32 %v1556, %v1565
        %v1568 = vmul.f32 %v1558, %v1566
        %1569 = vrot.lane.b32.xlu0 %v1070, 56
        %v1570 = vpop.permute.xlu0 %1569
        %v1573 = vsel %vm1081, %v1567, 0
        %1575 = vmatprep.subr.mxu0 0.0
        %1576 = vmatpush1.msra.mxu0 %v1570
        %1577 = vmatprep.subr.mxu0 0.0
        %1578 = vmatpush1.msra.mxu0 0.0
        %1579 = vmatprep.subr.mxu0 0.0
        %1580 = vmatpush1.msra.mxu0 0.0
        %1581 = vmatprep.subr.mxu0 0.0
        %1582 = vmatpush1.msra.mxu0 0.0
        %1583 = vmatprep.subr.mxu0 0.0
        %1584 = vmatpush1.msra.mxu0 0.0
        %1585 = vmatprep.subr.mxu0 0.0
        %1586 = vmatpush1.msra.mxu0 0.0
        %1587 = vmatprep.subr.mxu0 0.0
        %1588 = vmatpush1.msra.mxu0 0.0
        %1589 = vmatprep.subr.mxu0 0.0
        %1590 = vmatpush1.msra.mxu0 0.0
        %1591 = vmatprep.subr.mxu0 0.0
        %1592 = vmatpush1.msra.mxu0 0.0
        %1593 = vmatprep.subr.mxu0 0.0
        %1594 = vmatpush1.msra.mxu0 0.0
        %1595 = vmatprep.subr.mxu0 0.0
        %1596 = vmatpush1.msra.mxu0 0.0
        %1597 = vmatprep.subr.mxu0 0.0
        %1598 = vmatpush1.msra.mxu0 0.0
        %1599 = vmatprep.subr.mxu0 0.0
        %1600 = vmatpush1.msra.mxu0 0.0
        %1601 = vmatprep.subr.mxu0 0.0
        %1602 = vmatpush1.msra.mxu0 0.0
        %1603 = vmatprep.subr.mxu0 0.0
        %1604 = vmatpush1.msra.mxu0 0.0
        %1605 = vmatprep.subr.mxu0 0.0
        %1606 = vmatpush1.msra.mxu0 0.0
        %1607 = vmatprep.subr.mxu0 0.0
        %1608 = vmatpush1.msra.mxu0 0.0
        %1609 = vmatprep.subr.mxu0 0.0
        %1610 = vmatpush1.msra.mxu0 0.0
        %1611 = vmatprep.subr.mxu0 0.0
        %1612 = vmatpush1.msra.mxu0 0.0
        %1613 = vmatprep.subr.mxu0 0.0
        %1614 = vmatpush1.msra.mxu0 0.0
        %1615 = vmatprep.subr.mxu0 0.0
        %1616 = vmatpush1.msra.mxu0 0.0
        %1617 = vmatprep.subr.mxu0 0.0
        %1618 = vmatpush1.msra.mxu0 0.0
        %1619 = vmatprep.subr.mxu0 0.0
        %1620 = vmatpush1.msra.mxu0 0.0
        %1621 = vmatprep.subr.mxu0 0.0
        %1622 = vmatpush1.msra.mxu0 0.0
        %1623 = vmatprep.subr.mxu0 0.0
        %1624 = vmatpush1.msra.mxu0 0.0
        %1625 = vmatprep.subr.mxu0 0.0
        %1626 = vmatpush1.msra.mxu0 0.0
        %1627 = vmatprep.subr.mxu0 0.0
        %1628 = vmatpush1.msra.mxu0 0.0
        %1629 = vmatprep.subr.mxu0 0.0
        %1630 = vmatpush1.msra.mxu0 0.0
        %1631 = vmatprep.subr.mxu0 0.0
        %1632 = vmatpush1.msra.mxu0 0.0
        %1633 = vmatprep.subr.mxu0 0.0
        %1634 = vmatpush1.msra.mxu0 0.0
        %1635 = vmatprep.subr.mxu0 0.0
        %1636 = vmatpush1.msra.mxu0 0.0
        %1637 = vmatprep.subr.mxu0 0.0
        %1638 = vmatpush1.msra.mxu0 0.0
        %1639 = vmatprep.mubr.f32.mxu0 0.0
        %1640 = vmatmul.mubr.f32.gmra.mrb[0].mxu0 %v1573
        %v1641 = vpop.f32.mrb[0].mxu0
        %v1642 = vadd.f32 0.0, %v1641
        %v1643 = vpop.f32.mrb[0].mxu0
        %1644 = vdwg.mxu0
        %1645 = vrot.lane.b32.xlu0 %v1075, 56
        %v1646 = vpop.permute.xlu0 %1645
        %v1649 = vsel %vm1081, %v1568, 0
        %1651 = vmatprep.subr.mxu0 0.0
        %1652 = vmatpush1.msra.mxu0 %v1646
        %1653 = vmatprep.subr.mxu0 0.0
        %1654 = vmatpush1.msra.mxu0 0.0
        %1655 = vmatprep.subr.mxu0 0.0
        %1656 = vmatpush1.msra.mxu0 0.0
        %1657 = vmatprep.subr.mxu0 0.0
        %1658 = vmatpush1.msra.mxu0 0.0
        %1659 = vmatprep.subr.mxu0 0.0
        %1660 = vmatpush1.msra.mxu0 0.0
        %1661 = vmatprep.subr.mxu0 0.0
        %1662 = vmatpush1.msra.mxu0 0.0
        %1663 = vmatprep.subr.mxu0 0.0
        %1664 = vmatpush1.msra.mxu0 0.0
        %1665 = vmatprep.subr.mxu0 0.0
        %1666 = vmatpush1.msra.mxu0 0.0
        %1667 = vmatprep.subr.mxu0 0.0
        %1668 = vmatpush1.msra.mxu0 0.0
        %1669 = vmatprep.subr.mxu0 0.0
        %1670 = vmatpush1.msra.mxu0 0.0
        %1671 = vmatprep.subr.mxu0 0.0
        %1672 = vmatpush1.msra.mxu0 0.0
        %1673 = vmatprep.subr.mxu0 0.0
        %1674 = vmatpush1.msra.mxu0 0.0
        %1675 = vmatprep.subr.mxu0 0.0
        %1676 = vmatpush1.msra.mxu0 0.0
        %1677 = vmatprep.subr.mxu0 0.0
        %1678 = vmatpush1.msra.mxu0 0.0
        %1679 = vmatprep.subr.mxu0 0.0
        %1680 = vmatpush1.msra.mxu0 0.0
        %1681 = vmatprep.subr.mxu0 0.0
        %1682 = vmatpush1.msra.mxu0 0.0
        %1683 = vmatprep.subr.mxu0 0.0
        %1684 = vmatpush1.msra.mxu0 0.0
        %1685 = vmatprep.subr.mxu0 0.0
        %1686 = vmatpush1.msra.mxu0 0.0
        %1687 = vmatprep.subr.mxu0 0.0
        %1688 = vmatpush1.msra.mxu0 0.0
        %1689 = vmatprep.subr.mxu0 0.0
        %1690 = vmatpush1.msra.mxu0 0.0
        %1691 = vmatprep.subr.mxu0 0.0
        %1692 = vmatpush1.msra.mxu0 0.0
        %1693 = vmatprep.subr.mxu0 0.0
        %1694 = vmatpush1.msra.mxu0 0.0
        %1695 = vmatprep.subr.mxu0 0.0
        %1696 = vmatpush1.msra.mxu0 0.0
        %1697 = vmatprep.subr.mxu0 0.0
        %1698 = vmatpush1.msra.mxu0 0.0
        %1699 = vmatprep.subr.mxu0 0.0
        %1700 = vmatpush1.msra.mxu0 0.0
        %1701 = vmatprep.subr.mxu0 0.0
        %1702 = vmatpush1.msra.mxu0 0.0
        %1703 = vmatprep.subr.mxu0 0.0
        %1704 = vmatpush1.msra.mxu0 0.0
        %1705 = vmatprep.subr.mxu0 0.0
        %1706 = vmatpush1.msra.mxu0 0.0
        %1707 = vmatprep.subr.mxu0 0.0
        %1708 = vmatpush1.msra.mxu0 0.0
        %1709 = vmatprep.subr.mxu0 0.0
        %1710 = vmatpush1.msra.mxu0 0.0
        %1711 = vmatprep.subr.mxu0 0.0
        %1712 = vmatpush1.msra.mxu0 0.0
        %1713 = vmatprep.subr.mxu0 0.0
        %1714 = vmatpush1.msra.mxu0 0.0
        %1715 = vmatprep.mubr.f32.mxu0 0.0
        %1716 = vmatmul.mubr.f32.gmra.mrb[0].mxu0 %v1649
        %v1717 = vpop.f32.mrb[0].mxu0
        %v1718 = vadd.f32 0.0, %v1717
        %v1719 = vpop.f32.mrb[0].mxu0
        %1720 = vdwg.mxu0
        %1721 = vrot.lane.b32.xlu0 %v1070, 112
        %v1722 = vpop.permute.xlu0 %1721
        %1723 = vrot.lane.b32.xlu0 %v1070, 80
        %v1724 = vpop.permute.xlu0 %1723
        %v1725 = vsel %vm1081, %v1722, 0
        %v1727 = vsel %vm1081, %v1724, 0
        %1729 = vmatprep.subr.mxu0 0.0
        %1730 = vmatpush1.xpose.msra.mxu0 %v1727
        %1731 = vmatprep.subr.mxu0 0.0
        %1732 = vmatpush1.xpose.msra.mxu0 0.0
        %1733 = vmatprep.subr.mxu0 0.0
        %1734 = vmatpush1.xpose.msra.mxu0 0.0
        %1735 = vmatprep.subr.mxu0 0.0
        %1736 = vmatpush1.xpose.msra.mxu0 0.0
        %1737 = vmatprep.subr.mxu0 0.0
        %1738 = vmatpush1.xpose.msra.mxu0 0.0
        %1739 = vmatprep.subr.mxu0 0.0
        %1740 = vmatpush1.xpose.msra.mxu0 0.0
        %1741 = vmatprep.subr.mxu0 0.0
        %1742 = vmatpush1.xpose.msra.mxu0 0.0
        %1743 = vmatprep.subr.mxu0 0.0
        %1744 = vmatpush1.xpose.msra.mxu0 0.0
        %1745 = vmatprep.subr.mxu0 0.0
        %1746 = vmatpush1.xpose.msra.mxu0 0.0
        %1747 = vmatprep.subr.mxu0 0.0
        %1748 = vmatpush1.xpose.msra.mxu0 0.0
        %1749 = vmatprep.subr.mxu0 0.0
        %1750 = vmatpush1.xpose.msra.mxu0 0.0
        %1751 = vmatprep.subr.mxu0 0.0
        %1752 = vmatpush1.xpose.msra.mxu0 0.0
        %1753 = vmatprep.subr.mxu0 0.0
        %1754 = vmatpush1.xpose.msra.mxu0 0.0
        %1755 = vmatprep.subr.mxu0 0.0
        %1756 = vmatpush1.xpose.msra.mxu0 0.0
        %1757 = vmatprep.subr.mxu0 0.0
        %1758 = vmatpush1.xpose.msra.mxu0 0.0
        %1759 = vmatprep.subr.mxu0 0.0
        %1760 = vmatpush1.xpose.msra.mxu0 0.0
        %1761 = vmatprep.subr.mxu0 0.0
        %1762 = vmatpush1.xpose.msra.mxu0 0.0
        %1763 = vmatprep.subr.mxu0 0.0
        %1764 = vmatpush1.xpose.msra.mxu0 0.0
        %1765 = vmatprep.subr.mxu0 0.0
        %1766 = vmatpush1.xpose.msra.mxu0 0.0
        %1767 = vmatprep.subr.mxu0 0.0
        %1768 = vmatpush1.xpose.msra.mxu0 0.0
        %1769 = vmatprep.subr.mxu0 0.0
        %1770 = vmatpush1.xpose.msra.mxu0 0.0
        %1771 = vmatprep.subr.mxu0 0.0
        %1772 = vmatpush1.xpose.msra.mxu0 0.0
        %1773 = vmatprep.subr.mxu0 0.0
        %1774 = vmatpush1.xpose.msra.mxu0 0.0
        %1775 = vmatprep.subr.mxu0 0.0
        %1776 = vmatpush1.xpose.msra.mxu0 0.0
        %1777 = vmatprep.subr.mxu0 0.0
        %1778 = vmatpush1.xpose.msra.mxu0 0.0
        %1779 = vmatprep.subr.mxu0 0.0
        %1780 = vmatpush1.xpose.msra.mxu0 0.0
        %1781 = vmatprep.subr.mxu0 0.0
        %1782 = vmatpush1.xpose.msra.mxu0 0.0
        %1783 = vmatprep.subr.mxu0 0.0
        %1784 = vmatpush1.xpose.msra.mxu0 0.0
        %1785 = vmatprep.subr.mxu0 0.0
        %1786 = vmatpush1.xpose.msra.mxu0 0.0
        %1787 = vmatprep.subr.mxu0 0.0
        %1788 = vmatpush1.xpose.msra.mxu0 0.0
        %1789 = vmatprep.subr.mxu0 0.0
        %1790 = vmatpush1.xpose.msra.mxu0 0.0
        %1791 = vmatprep.subr.mxu0 0.0
        %1792 = vmatpush1.xpose.msra.mxu0 0.0
        %1793 = vmatprep.mubr.f32.mxu0 0.0
        %1794 = vmatmul.mubr.f32.gmra.mrb[0].mxu0 %v1725
        %v1795 = vpop.f32.mrb[0].mxu0
        %v1796 = vadd.f32 0.0, %v1795
        %v1797 = vpop.f32.mrb[0].mxu0
        %1798 = vdwg.mxu0
        %1799 = vrot.lane.b32.xlu0 %v1075, 112
        %v1800 = vpop.permute.xlu0 %1799
        %1801 = vrot.lane.b32.xlu0 %v1075, 80
        %v1802 = vpop.permute.xlu0 %1801
        %v1803 = vsel %vm1081, %v1800, 0
        %v1805 = vsel %vm1081, %v1802, 0
        %1807 = vmatprep.subr.mxu0 0.0
        %1808 = vmatpush1.xpose.msra.mxu0 %v1805
        %1809 = vmatprep.subr.mxu0 0.0
        %1810 = vmatpush1.xpose.msra.mxu0 0.0
        %1811 = vmatprep.subr.mxu0 0.0
        %1812 = vmatpush1.xpose.msra.mxu0 0.0
        %1813 = vmatprep.subr.mxu0 0.0
        %1814 = vmatpush1.xpose.msra.mxu0 0.0
        %1815 = vmatprep.subr.mxu0 0.0
        %1816 = vmatpush1.xpose.msra.mxu0 0.0
        %1817 = vmatprep.subr.mxu0 0.0
        %1818 = vmatpush1.xpose.msra.mxu0 0.0
        %1819 = vmatprep.subr.mxu0 0.0
        %1820 = vmatpush1.xpose.msra.mxu0 0.0
        %1821 = vmatprep.subr.mxu0 0.0
        %1822 = vmatpush1.xpose.msra.mxu0 0.0
        %1823 = vmatprep.subr.mxu0 0.0
        %1824 = vmatpush1.xpose.msra.mxu0 0.0
        %1825 = vmatprep.subr.mxu0 0.0
        %1826 = vmatpush1.xpose.msra.mxu0 0.0
        %1827 = vmatprep.subr.mxu0 0.0
        %1828 = vmatpush1.xpose.msra.mxu0 0.0
        %1829 = vmatprep.subr.mxu0 0.0
        %1830 = vmatpush1.xpose.msra.mxu0 0.0
        %1831 = vmatprep.subr.mxu0 0.0
        %1832 = vmatpush1.xpose.msra.mxu0 0.0
        %1833 = vmatprep.subr.mxu0 0.0
        %1834 = vmatpush1.xpose.msra.mxu0 0.0
        %1835 = vmatprep.subr.mxu0 0.0
        %1836 = vmatpush1.xpose.msra.mxu0 0.0
        %1837 = vmatprep.subr.mxu0 0.0
        %1838 = vmatpush1.xpose.msra.mxu0 0.0
        %1839 = vmatprep.subr.mxu0 0.0
        %1840 = vmatpush1.xpose.msra.mxu0 0.0
        %1841 = vmatprep.subr.mxu0 0.0
        %1842 = vmatpush1.xpose.msra.mxu0 0.0
        %1843 = vmatprep.subr.mxu0 0.0
        %1844 = vmatpush1.xpose.msra.mxu0 0.0
        %1845 = vmatprep.subr.mxu0 0.0
        %1846 = vmatpush1.xpose.msra.mxu0 0.0
        %1847 = vmatprep.subr.mxu0 0.0
        %1848 = vmatpush1.xpose.msra.mxu0 0.0
        %1849 = vmatprep.subr.mxu0 0.0
        %1850 = vmatpush1.xpose.msra.mxu0 0.0
        %1851 = vmatprep.subr.mxu0 0.0
        %1852 = vmatpush1.xpose.msra.mxu0 0.0
        %1853 = vmatprep.subr.mxu0 0.0
        %1854 = vmatpush1.xpose.msra.mxu0 0.0
        %1855 = vmatprep.subr.mxu0 0.0
        %1856 = vmatpush1.xpose.msra.mxu0 0.0
        %1857 = vmatprep.subr.mxu0 0.0
        %1858 = vmatpush1.xpose.msra.mxu0 0.0
        %1859 = vmatprep.subr.mxu0 0.0
        %1860 = vmatpush1.xpose.msra.mxu0 0.0
        %1861 = vmatprep.subr.mxu0 0.0
        %1862 = vmatpush1.xpose.msra.mxu0 0.0
        %1863 = vmatprep.subr.mxu0 0.0
        %1864 = vmatpush1.xpose.msra.mxu0 0.0
        %1865 = vmatprep.subr.mxu0 0.0
        %1866 = vmatpush1.xpose.msra.mxu0 0.0
        %1867 = vmatprep.subr.mxu0 0.0
        %1868 = vmatpush1.xpose.msra.mxu0 0.0
        %1869 = vmatprep.subr.mxu0 0.0
        %1870 = vmatpush1.xpose.msra.mxu0 0.0
        %1871 = vmatprep.mubr.f32.mxu0 0.0
        %1872 = vmatmul.mubr.f32.gmra.mrb[0].mxu0 %v1803
        %v1873 = vpop.f32.mrb[0].mxu0
        %v1874 = vadd.f32 0.0, %v1873
        %v1875 = vpop.f32.mrb[0].mxu0
        %1876 = vdwg.mxu0
        %v1877 = vmul.f32 %v1796, 1.442695
        %v1878 = vpow.pop %v1877
        %v1879 = vmul.f32 %v1874, 1.442695
        %v1880 = vpow.pop %v1879
        %v1881 = vsel %vm1081, %v1878, 0.0
        %1882 = vadd.xlane.f32.xlu0 %v1881
        %v1883 = vpop.xlane.xlu0 %1882
        %v1884 = vsel %vm1081, %v1880, 0.0
        %1885 = vadd.xlane.f32.xlu0 %v1884
        %v1886 = vpop.xlane.xlu0 %1885
        %v1887 = vrcp.pop %v1883
        %v1888 = vrcp.pop %v1886
        %v1889 = vmul.f32 %v1878, %v1887
        %v1890 = vmul.f32 %v1880, %v1888
        %1891 = vrot.lane.b32.xlu0 %v1070, 48
        %v1892 = vpop.permute.xlu0 %1891
        %v1895 = vsel %vm1081, %v1889, 0
        %1897 = vmatprep.subr.mxu0 0.0
        %1898 = vmatpush1.msra.mxu0 %v1892
        %1899 = vmatprep.subr.mxu0 0.0
        %1900 = vmatpush1.msra.mxu0 0.0
        %1901 = vmatprep.subr.mxu0 0.0
        %1902 = vmatpush1.msra.mxu0 0.0
        %1903 = vmatprep.subr.mxu0 0.0
        %1904 = vmatpush1.msra.mxu0 0.0
        %1905 = vmatprep.subr.mxu0 0.0
        %1906 = vmatpush1.msra.mxu0 0.0
        %1907 = vmatprep.subr.mxu0 0.0
        %1908 = vmatpush1.msra.mxu0 0.0
        %1909 = vmatprep.subr.mxu0 0.0
        %1910 = vmatpush1.msra.mxu0 0.0
        %1911 = vmatprep.subr.mxu0 0.0
        %1912 = vmatpush1.msra.mxu0 0.0
        %1913 = vmatprep.subr.mxu0 0.0
        %1914 = vmatpush1.msra.mxu0 0.0
        %1915 = vmatprep.subr.mxu0 0.0
        %1916 = vmatpush1.msra.mxu0 0.0
        %1917 = vmatprep.subr.mxu0 0.0
        %1918 = vmatpush1.msra.mxu0 0.0
        %1919 = vmatprep.subr.mxu0 0.0
        %1920 = vmatpush1.msra.mxu0 0.0
        %1921 = vmatprep.subr.mxu0 0.0
        %1922 = vmatpush1.msra.mxu0 0.0
        %1923 = vmatprep.subr.mxu0 0.0
        %1924 = vmatpush1.msra.mxu0 0.0
        %1925 = vmatprep.subr.mxu0 0.0
        %1926 = vmatpush1.msra.mxu0 0.0
        %1927 = vmatprep.subr.mxu0 0.0
        %1928 = vmatpush1.msra.mxu0 0.0
        %1929 = vmatprep.subr.mxu0 0.0
        %1930 = vmatpush1.msra.mxu0 0.0
        %1931 = vmatprep.subr.mxu0 0.0
        %1932 = vmatpush1.msra.mxu0 0.0
        %1933 = vmatprep.subr.mxu0 0.0
        %1934 = vmatpush1.msra.mxu0 0.0
        %1935 = vmatprep.subr.mxu0 0.0
        %1936 = vmatpush1.msra.mxu0 0.0
        %1937 = vmatprep.subr.mxu0 0.0
        %1938 = vmatpush1.msra.mxu0 0.0
        %1939 = vmatprep.subr.mxu0 0.0
        %1940 = vmatpush1.msra.mxu0 0.0
        %1941 = vmatprep.subr.mxu0 0.0
        %1942 = vmatpush1.msra.mxu0 0.0
        %1943 = vmatprep.subr.mxu0 0.0
        %1944 = vmatpush1.msra.mxu0 0.0
        %1945 = vmatprep.subr.mxu0 0.0
        %1946 = vmatpush1.msra.mxu0 0.0
        %1947 = vmatprep.subr.mxu0 0.0
        %1948 = vmatpush1.msra.mxu0 0.0
        %1949 = vmatprep.subr.mxu0 0.0
        %1950 = vmatpush1.msra.mxu0 0.0
        %1951 = vmatprep.subr.mxu0 0.0
        %1952 = vmatpush1.msra.mxu0 0.0
        %1953 = vmatprep.subr.mxu0 0.0
        %1954 = vmatpush1.msra.mxu0 0.0
        %1955 = vmatprep.subr.mxu0 0.0
        %1956 = vmatpush1.msra.mxu0 0.0
        %1957 = vmatprep.subr.mxu0 0.0
        %1958 = vmatpush1.msra.mxu0 0.0
        %1959 = vmatprep.subr.mxu0 0.0
        %1960 = vmatpush1.msra.mxu0 0.0
        %1961 = vmatprep.mubr.f32.mxu0 0.0
        %1962 = vmatmul.mubr.f32.gmra.mrb[0].mxu0 %v1895
        %v1963 = vpop.f32.mrb[0].mxu0
        %v1964 = vadd.f32 0.0, %v1963
        %v1965 = vpop.f32.mrb[0].mxu0
        %1966 = vdwg.mxu0
        %1967 = vrot.lane.b32.xlu0 %v1075, 48
        %v1968 = vpop.permute.xlu0 %1967
        %v1971 = vsel %vm1081, %v1890, 0
        %1973 = vmatprep.subr.mxu0 0.0
        %1974 = vmatpush1.msra.mxu0 %v1968
        %1975 = vmatprep.subr.mxu0 0.0
        %1976 = vmatpush1.msra.mxu0 0.0
        %1977 = vmatprep.subr.mxu0 0.0
        %1978 = vmatpush1.msra.mxu0 0.0
        %1979 = vmatprep.subr.mxu0 0.0
        %1980 = vmatpush1.msra.mxu0 0.0
        %1981 = vmatprep.subr.mxu0 0.0
        %1982 = vmatpush1.msra.mxu0 0.0
        %1983 = vmatprep.subr.mxu0 0.0
        %1984 = vmatpush1.msra.mxu0 0.0
        %1985 = vmatprep.subr.mxu0 0.0
        %1986 = vmatpush1.msra.mxu0 0.0
        %1987 = vmatprep.subr.mxu0 0.0
        %1988 = vmatpush1.msra.mxu0 0.0
        %1989 = vmatprep.subr.mxu0 0.0
        %1990 = vmatpush1.msra.mxu0 0.0
        %1991 = vmatprep.subr.mxu0 0.0
        %1992 = vmatpush1.msra.mxu0 0.0
        %1993 = vmatprep.subr.mxu0 0.0
        %1994 = vmatpush1.msra.mxu0 0.0
        %1995 = vmatprep.subr.mxu0 0.0
        %1996 = vmatpush1.msra.mxu0 0.0
        %1997 = vmatprep.subr.mxu0 0.0
        %1998 = vmatpush1.msra.mxu0 0.0
        %1999 = vmatprep.subr.mxu0 0.0
        %2000 = vmatpush1.msra.mxu0 0.0
        %2001 = vmatprep.subr.mxu0 0.0
        %2002 = vmatpush1.msra.mxu0 0.0
        %2003 = vmatprep.subr.mxu0 0.0
        %2004 = vmatpush1.msra.mxu0 0.0
        %2005 = vmatprep.subr.mxu0 0.0
        %2006 = vmatpush1.msra.mxu0 0.0
        %2007 = vmatprep.subr.mxu0 0.0
        %2008 = vmatpush1.msra.mxu0 0.0
        %2009 = vmatprep.subr.mxu0 0.0
        %2010 = vmatpush1.msra.mxu0 0.0
        %2011 = vmatprep.subr.mxu0 0.0
        %2012 = vmatpush1.msra.mxu0 0.0
        %2013 = vmatprep.subr.mxu0 0.0
        %2014 = vmatpush1.msra.mxu0 0.0
        %2015 = vmatprep.subr.mxu0 0.0
        %2016 = vmatpush1.msra.mxu0 0.0
        %2017 = vmatprep.subr.mxu0 0.0
        %2018 = vmatpush1.msra.mxu0 0.0
        %2019 = vmatprep.subr.mxu0 0.0
        %2020 = vmatpush1.msra.mxu0 0.0
        %2021 = vmatprep.subr.mxu0 0.0
        %2022 = vmatpush1.msra.mxu0 0.0
        %2023 = vmatprep.subr.mxu0 0.0
        %2024 = vmatpush1.msra.mxu0 0.0
        %2025 = vmatprep.subr.mxu0 0.0
        %2026 = vmatpush1.msra.mxu0 0.0
        %2027 = vmatprep.subr.mxu0 0.0
        %2028 = vmatpush1.msra.mxu0 0.0
        %2029 = vmatprep.subr.mxu0 0.0
        %2030 = vmatpush1.msra.mxu0 0.0
        %2031 = vmatprep.subr.mxu0 0.0
        %2032 = vmatpush1.msra.mxu0 0.0
        %2033 = vmatprep.subr.mxu0 0.0
        %2034 = vmatpush1.msra.mxu0 0.0
        %2035 = vmatprep.subr.mxu0 0.0
        %2036 = vmatpush1.msra.mxu0 0.0
        %2037 = vmatprep.mubr.f32.mxu0 0.0
        %2038 = vmatmul.mubr.f32.gmra.mrb[0].mxu0 %v1971
        %v2039 = vpop.f32.mrb[0].mxu0
        %v2040 = vadd.f32 0.0, %v2039
        %v2041 = vpop.f32.mrb[0].mxu0
        %2042 = vdwg.mxu0
        %2043 = vrot.lane.b32.xlu0 %v1070, 104
        %v2044 = vpop.permute.xlu0 %2043
        %2045 = vrot.lane.b32.xlu0 %v1070, 72
        %v2046 = vpop.permute.xlu0 %2045
        %v2047 = vsel %vm1081, %v2044, 0
        %v2049 = vsel %vm1081, %v2046, 0
        %2051 = vmatprep.subr.mxu0 0.0
        %2052 = vmatpush1.xpose.msra.mxu0 %v2049
        %2053 = vmatprep.subr.mxu0 0.0
        %2054 = vmatpush1.xpose.msra.mxu0 0.0
        %2055 = vmatprep.subr.mxu0 0.0
        %2056 = vmatpush1.xpose.msra.mxu0 0.0
        %2057 = vmatprep.subr.mxu0 0.0
        %2058 = vmatpush1.xpose.msra.mxu0 0.0
        %2059 = vmatprep.subr.mxu0 0.0
        %2060 = vmatpush1.xpose.msra.mxu0 0.0
        %2061 = vmatprep.subr.mxu0 0.0
        %2062 = vmatpush1.xpose.msra.mxu0 0.0
        %2063 = vmatprep.subr.mxu0 0.0
        %2064 = vmatpush1.xpose.msra.mxu0 0.0
        %2065 = vmatprep.subr.mxu0 0.0
        %2066 = vmatpush1.xpose.msra.mxu0 0.0
        %2067 = vmatprep.subr.mxu0 0.0
        %2068 = vmatpush1.xpose.msra.mxu0 0.0
        %2069 = vmatprep.subr.mxu0 0.0
        %2070 = vmatpush1.xpose.msra.mxu0 0.0
        %2071 = vmatprep.subr.mxu0 0.0
        %2072 = vmatpush1.xpose.msra.mxu0 0.0
        %2073 = vmatprep.subr.mxu0 0.0
        %2074 = vmatpush1.xpose.msra.mxu0 0.0
        %2075 = vmatprep.subr.mxu0 0.0
        %2076 = vmatpush1.xpose.msra.mxu0 0.0
        %2077 = vmatprep.subr.mxu0 0.0
        %2078 = vmatpush1.xpose.msra.mxu0 0.0
        %2079 = vmatprep.subr.mxu0 0.0
        %2080 = vmatpush1.xpose.msra.mxu0 0.0
        %2081 = vmatprep.subr.mxu0 0.0
        %2082 = vmatpush1.xpose.msra.mxu0 0.0
        %2083 = vmatprep.subr.mxu0 0.0
        %2084 = vmatpush1.xpose.msra.mxu0 0.0
        %2085 = vmatprep.subr.mxu0 0.0
        %2086 = vmatpush1.xpose.msra.mxu0 0.0
        %2087 = vmatprep.subr.mxu0 0.0
        %2088 = vmatpush1.xpose.msra.mxu0 0.0
        %2089 = vmatprep.subr.mxu0 0.0
        %2090 = vmatpush1.xpose.msra.mxu0 0.0
        %2091 = vmatprep.subr.mxu0 0.0
        %2092 = vmatpush1.xpose.msra.mxu0 0.0
        %2093 = vmatprep.subr.mxu0 0.0
        %2094 = vmatpush1.xpose.msra.mxu0 0.0
        %2095 = vmatprep.subr.mxu0 0.0
        %2096 = vmatpush1.xpose.msra.mxu0 0.0
        %2097 = vmatprep.subr.mxu0 0.0
        %2098 = vmatpush1.xpose.msra.mxu0 0.0
        %2099 = vmatprep.subr.mxu0 0.0
        %2100 = vmatpush1.xpose.msra.mxu0 0.0
        %2101 = vmatprep.subr.mxu0 0.0
        %2102 = vmatpush1.xpose.msra.mxu0 0.0
        %2103 = vmatprep.subr.mxu0 0.0
        %2104 = vmatpush1.xpose.msra.mxu0 0.0
        %2105 = vmatprep.subr.mxu0 0.0
        %2106 = vmatpush1.xpose.msra.mxu0 0.0
        %2107 = vmatprep.subr.mxu0 0.0
        %2108 = vmatpush1.xpose.msra.mxu0 0.0
        %2109 = vmatprep.subr.mxu0 0.0
        %2110 = vmatpush1.xpose.msra.mxu0 0.0
        %2111 = vmatprep.subr.mxu0 0.0
        %2112 = vmatpush1.xpose.msra.mxu0 0.0
        %2113 = vmatprep.subr.mxu0 0.0
        %2114 = vmatpush1.xpose.msra.mxu0 0.0
        %2115 = vmatprep.mubr.f32.mxu0 0.0
        %2116 = vmatmul.mubr.f32.gmra.mrb[0].mxu0 %v2047
        %v2117 = vpop.f32.mrb[0].mxu0
        %v2118 = vadd.f32 0.0, %v2117
        %v2119 = vpop.f32.mrb[0].mxu0
        %2120 = vdwg.mxu0
        %2121 = vrot.lane.b32.xlu0 %v1075, 104
        %v2122 = vpop.permute.xlu0 %2121
        %2123 = vrot.lane.b32.xlu0 %v1075, 72
        %v2124 = vpop.permute.xlu0 %2123
        %v2125 = vsel %vm1081, %v2122, 0
        %v2127 = vsel %vm1081, %v2124, 0
        %2129 = vmatprep.subr.mxu0 0.0
        %2130 = vmatpush1.xpose.msra.mxu0 %v2127
        %2131 = vmatprep.subr.mxu0 0.0
        %2132 = vmatpush1.xpose.msra.mxu0 0.0
        %2133 = vmatprep.subr.mxu0 0.0
        %2134 = vmatpush1.xpose.msra.mxu0 0.0
        %2135 = vmatprep.subr.mxu0 0.0
        %2136 = vmatpush1.xpose.msra.mxu0 0.0
        %2137 = vmatprep.subr.mxu0 0.0
        %2138 = vmatpush1.xpose.msra.mxu0 0.0
        %2139 = vmatprep.subr.mxu0 0.0
        %2140 = vmatpush1.xpose.msra.mxu0 0.0
        %2141 = vmatprep.subr.mxu0 0.0
        %2142 = vmatpush1.xpose.msra.mxu0 0.0
        %2143 = vmatprep.subr.mxu0 0.0
        %2144 = vmatpush1.xpose.msra.mxu0 0.0
        %2145 = vmatprep.subr.mxu0 0.0
        %2146 = vmatpush1.xpose.msra.mxu0 0.0
        %2147 = vmatprep.subr.mxu0 0.0
        %2148 = vmatpush1.xpose.msra.mxu0 0.0
        %2149 = vmatprep.subr.mxu0 0.0
        %2150 = vmatpush1.xpose.msra.mxu0 0.0
        %2151 = vmatprep.subr.mxu0 0.0
        %2152 = vmatpush1.xpose.msra.mxu0 0.0
        %2153 = vmatprep.subr.mxu0 0.0
        %2154 = vmatpush1.xpose.msra.mxu0 0.0
        %2155 = vmatprep.subr.mxu0 0.0
        %2156 = vmatpush1.xpose.msra.mxu0 0.0
        %2157 = vmatprep.subr.mxu0 0.0
        %2158 = vmatpush1.xpose.msra.mxu0 0.0
        %2159 = vmatprep.subr.mxu0 0.0
        %2160 = vmatpush1.xpose.msra.mxu0 0.0
        %2161 = vmatprep.subr.mxu0 0.0
        %2162 = vmatpush1.xpose.msra.mxu0 0.0
        %2163 = vmatprep.subr.mxu0 0.0
        %2164 = vmatpush1.xpose.msra.mxu0 0.0
        %2165 = vmatprep.subr.mxu0 0.0
        %2166 = vmatpush1.xpose.msra.mxu0 0.0
        %2167 = vmatprep.subr.mxu0 0.0
        %2168 = vmatpush1.xpose.msra.mxu0 0.0
        %2169 = vmatprep.subr.mxu0 0.0
        %2170 = vmatpush1.xpose.msra.mxu0 0.0
        %2171 = vmatprep.subr.mxu0 0.0
        %2172 = vmatpush1.xpose.msra.mxu0 0.0
        %2173 = vmatprep.subr.mxu0 0.0
        %2174 = vmatpush1.xpose.msra.mxu0 0.0
        %2175 = vmatprep.subr.mxu0 0.0
        %2176 = vmatpush1.xpose.msra.mxu0 0.0
        %2177 = vmatprep.subr.mxu0 0.0
        %2178 = vmatpush1.xpose.msra.mxu0 0.0
        %2179 = vmatprep.subr.mxu0 0.0
        %2180 = vmatpush1.xpose.msra.mxu0 0.0
        %2181 = vmatprep.subr.mxu0 0.0
        %2182 = vmatpush1.xpose.msra.mxu0 0.0
        %2183 = vmatprep.subr.mxu0 0.0
        %2184 = vmatpush1.xpose.msra.mxu0 0.0
        %2185 = vmatprep.subr.mxu0 0.0
        %2186 = vmatpush1.xpose.msra.mxu0 0.0
        %2187 = vmatprep.subr.mxu0 0.0
        %2188 = vmatpush1.xpose.msra.mxu0 0.0
        %2189 = vmatprep.subr.mxu0 0.0
        %2190 = vmatpush1.xpose.msra.mxu0 0.0
        %2191 = vmatprep.subr.mxu0 0.0
        %2192 = vmatpush1.xpose.msra.mxu0 0.0
        %2193 = vmatprep.mubr.f32.mxu0 0.0
        %2194 = vmatmul.mubr.f32.gmra.mrb[0].mxu0 %v2125
        %v2195 = vpop.f32.mrb[0].mxu0
        %v2196 = vadd.f32 0.0, %v2195
        %v2197 = vpop.f32.mrb[0].mxu0
        %2198 = vdwg.mxu0
        %v2199 = vmul.f32 %v2118, 1.442695
        %v2200 = vpow.pop %v2199
        %v2201 = vmul.f32 %v2196, 1.442695
        %v2202 = vpow.pop %v2201
        %v2203 = vsel %vm1081, %v2200, 0.0
        %2204 = vadd.xlane.f32.xlu0 %v2203
        %v2205 = vpop.xlane.xlu0 %2204
        %v2206 = vsel %vm1081, %v2202, 0.0
        %2207 = vadd.xlane.f32.xlu0 %v2206
        %v2208 = vpop.xlane.xlu0 %2207
        %v2209 = vrcp.pop %v2205
        %v2210 = vrcp.pop %v2208
        %v2211 = vmul.f32 %v2200, %v2209
        %v2212 = vmul.f32 %v2202, %v2210
        %2213 = vrot.lane.b32.xlu0 %v1070, 40
        %v2214 = vpop.permute.xlu0 %2213
        %v2217 = vsel %vm1081, %v2211, 0
        %2219 = vmatprep.subr.mxu0 0.0
        %2220 = vmatpush1.msra.mxu0 %v2214
        %2221 = vmatprep.subr.mxu0 0.0
        %2222 = vmatpush1.msra.mxu0 0.0
        %2223 = vmatprep.subr.mxu0 0.0
        %2224 = vmatpush1.msra.mxu0 0.0
        %2225 = vmatprep.subr.mxu0 0.0
        %2226 = vmatpush1.msra.mxu0 0.0
        %2227 = vmatprep.subr.mxu0 0.0
        %2228 = vmatpush1.msra.mxu0 0.0
        %2229 = vmatprep.subr.mxu0 0.0
        %2230 = vmatpush1.msra.mxu0 0.0
        %2231 = vmatprep.subr.mxu0 0.0
        %2232 = vmatpush1.msra.mxu0 0.0
        %2233 = vmatprep.subr.mxu0 0.0
        %2234 = vmatpush1.msra.mxu0 0.0
        %2235 = vmatprep.subr.mxu0 0.0
        %2236 = vmatpush1.msra.mxu0 0.0
        %2237 = vmatprep.subr.mxu0 0.0
        %2238 = vmatpush1.msra.mxu0 0.0
        %2239 = vmatprep.subr.mxu0 0.0
        %2240 = vmatpush1.msra.mxu0 0.0
        %2241 = vmatprep.subr.mxu0 0.0
        %2242 = vmatpush1.msra.mxu0 0.0
        %2243 = vmatprep.subr.mxu0 0.0
        %2244 = vmatpush1.msra.mxu0 0.0
        %2245 = vmatprep.subr.mxu0 0.0
        %2246 = vmatpush1.msra.mxu0 0.0
        %2247 = vmatprep.subr.mxu0 0.0
        %2248 = vmatpush1.msra.mxu0 0.0
        %2249 = vmatprep.subr.mxu0 0.0
        %2250 = vmatpush1.msra.mxu0 0.0
        %2251 = vmatprep.subr.mxu0 0.0
        %2252 = vmatpush1.msra.mxu0 0.0
        %2253 = vmatprep.subr.mxu0 0.0
        %2254 = vmatpush1.msra.mxu0 0.0
        %2255 = vmatprep.subr.mxu0 0.0
        %2256 = vmatpush1.msra.mxu0 0.0
        %2257 = vmatprep.subr.mxu0 0.0
        %2258 = vmatpush1.msra.mxu0 0.0
        %2259 = vmatprep.subr.mxu0 0.0
        %2260 = vmatpush1.msra.mxu0 0.0
        %2261 = vmatprep.subr.mxu0 0.0
        %2262 = vmatpush1.msra.mxu0 0.0
        %2263 = vmatprep.subr.mxu0 0.0
        %2264 = vmatpush1.msra.mxu0 0.0
        %2265 = vmatprep.subr.mxu0 0.0
        %2266 = vmatpush1.msra.mxu0 0.0
        %2267 = vmatprep.subr.mxu0 0.0
        %2268 = vmatpush1.msra.mxu0 0.0
        %2269 = vmatprep.subr.mxu0 0.0
        %2270 = vmatpush1.msra.mxu0 0.0
        %2271 = vmatprep.subr.mxu0 0.0
        %2272 = vmatpush1.msra.mxu0 0.0
        %2273 = vmatprep.subr.mxu0 0.0
        %2274 = vmatpush1.msra.mxu0 0.0
        %2275 = vmatprep.subr.mxu0 0.0
        %2276 = vmatpush1.msra.mxu0 0.0
        %2277 = vmatprep.subr.mxu0 0.0
        %2278 = vmatpush1.msra.mxu0 0.0
        %2279 = vmatprep.subr.mxu0 0.0
        %2280 = vmatpush1.msra.mxu0 0.0
        %2281 = vmatprep.subr.mxu0 0.0
        %2282 = vmatpush1.msra.mxu0 0.0
        %2283 = vmatprep.mubr.f32.mxu0 0.0
        %2284 = vmatmul.mubr.f32.gmra.mrb[0].mxu0 %v2217
        %v2285 = vpop.f32.mrb[0].mxu0
        %v2286 = vadd.f32 0.0, %v2285
        %v2287 = vpop.f32.mrb[0].mxu0
        %2288 = vdwg.mxu0
        %2289 = vrot.lane.b32.xlu0 %v1075, 40
        %v2290 = vpop.permute.xlu0 %2289
        %v2293 = vsel %vm1081, %v2212, 0
        %2295 = vmatprep.subr.mxu0 0.0
        %2296 = vmatpush1.msra.mxu0 %v2290
        %2297 = vmatprep.subr.mxu0 0.0
        %2298 = vmatpush1.msra.mxu0 0.0
        %2299 = vmatprep.subr.mxu0 0.0
        %2300 = vmatpush1.msra.mxu0 0.0
        %2301 = vmatprep.subr.mxu0 0.0
        %2302 = vmatpush1.msra.mxu0 0.0
        %2303 = vmatprep.subr.mxu0 0.0
        %2304 = vmatpush1.msra.mxu0 0.0
        %2305 = vmatprep.subr.mxu0 0.0
        %2306 = vmatpush1.msra.mxu0 0.0
        %2307 = vmatprep.subr.mxu0 0.0
        %2308 = vmatpush1.msra.mxu0 0.0
        %2309 = vmatprep.subr.mxu0 0.0
        %2310 = vmatpush1.msra.mxu0 0.0
        %2311 = vmatprep.subr.mxu0 0.0
        %2312 = vmatpush1.msra.mxu0 0.0
        %2313 = vmatprep.subr.mxu0 0.0
        %2314 = vmatpush1.msra.mxu0 0.0
        %2315 = vmatprep.subr.mxu0 0.0
        %2316 = vmatpush1.msra.mxu0 0.0
        %2317 = vmatprep.subr.mxu0 0.0
        %2318 = vmatpush1.msra.mxu0 0.0
        %2319 = vmatprep.subr.mxu0 0.0
        %2320 = vmatpush1.msra.mxu0 0.0
        %2321 = vmatprep.subr.mxu0 0.0
        %2322 = vmatpush1.msra.mxu0 0.0
        %2323 = vmatprep.subr.mxu0 0.0
        %2324 = vmatpush1.msra.mxu0 0.0
        %2325 = vmatprep.subr.mxu0 0.0
        %2326 = vmatpush1.msra.mxu0 0.0
        %2327 = vmatprep.subr.mxu0 0.0
        %2328 = vmatpush1.msra.mxu0 0.0
        %2329 = vmatprep.subr.mxu0 0.0
        %2330 = vmatpush1.msra.mxu0 0.0
        %2331 = vmatprep.subr.mxu0 0.0
        %2332 = vmatpush1.msra.mxu0 0.0
        %2333 = vmatprep.subr.mxu0 0.0
        %2334 = vmatpush1.msra.mxu0 0.0
        %2335 = vmatprep.subr.mxu0 0.0
        %2336 = vmatpush1.msra.mxu0 0.0
        %2337 = vmatprep.subr.mxu0 0.0
        %2338 = vmatpush1.msra.mxu0 0.0
        %2339 = vmatprep.subr.mxu0 0.0
        %2340 = vmatpush1.msra.mxu0 0.0
        %2341 = vmatprep.subr.mxu0 0.0
        %2342 = vmatpush1.msra.mxu0 0.0
        %2343 = vmatprep.subr.mxu0 0.0
        %2344 = vmatpush1.msra.mxu0 0.0
        %2345 = vmatprep.subr.mxu0 0.0
        %2346 = vmatpush1.msra.mxu0 0.0
        %2347 = vmatprep.subr.mxu0 0.0
        %2348 = vmatpush1.msra.mxu0 0.0
        %2349 = vmatprep.subr.mxu0 0.0
        %2350 = vmatpush1.msra.mxu0 0.0
        %2351 = vmatprep.subr.mxu0 0.0
        %2352 = vmatpush1.msra.mxu0 0.0
        %2353 = vmatprep.subr.mxu0 0.0
        %2354 = vmatpush1.msra.mxu0 0.0
        %2355 = vmatprep.subr.mxu0 0.0
        %2356 = vmatpush1.msra.mxu0 0.0
        %2357 = vmatprep.subr.mxu0 0.0
        %2358 = vmatpush1.msra.mxu0 0.0
        %2359 = vmatprep.mubr.f32.mxu0 0.0
        %2360 = vmatmul.mubr.f32.gmra.mrb[0].mxu0 %v2293
        %v2361 = vpop.f32.mrb[0].mxu0
        %v2362 = vadd.f32 0.0, %v2361
        %v2363 = vpop.f32.mrb[0].mxu0
        %2364 = vdwg.mxu0
        %2367 = vrot.lane.b32.xlu0 %v1642, 8
        %v2368 = vpop.permute.xlu0 %2367
        %2369 = vrot.lane.b32.xlu0 %v1718, 8
        %v2370 = vpop.permute.xlu0 %2369
        %2375 = vrot.lane.b32.xlu0 %v1964, 16
        %v2376 = vpop.permute.xlu0 %2375
        %2377 = vrot.lane.b32.xlu0 %v2040, 16
        %v2378 = vpop.permute.xlu0 %2377
        %2383 = vrot.lane.b32.xlu0 %v2286, 24
        %v2384 = vpop.permute.xlu0 %2383
        %2385 = vrot.lane.b32.xlu0 %v2362, 24
        %v2386 = vpop.permute.xlu0 %2385
        %v2389 = vsel %vm1081, %v1320, %v2368
        %v2390 = vsel %vm1081, %v1396, %v2370
        %vm2391 = vcmask 130048
        %v2392 = vsel %vm2391, %v2389, %v2376
        %v2393 = vsel %vm2391, %v2390, %v2378
        %vm2394 = vcmask 195584
        %v2395 = vsel %vm2394, %v2392, %v2384
        %v2396 = vsel %vm2394, %v2393, %v2386
        %v2397 = vld [vmem:[%s677] sm:$0xff]
        %v2398 = vld [vmem:[%s677 + $0x8] sm:$0xff]
        %v2399 = vld [vmem:[%s677 + $0x10] sm:$0xff]
        %v2400 = vld [vmem:[%s677 + $0x18] sm:$0xff]
        %vm2401 = vcmask 261120
        %v2403 = vsel %vm2401, %v2395, 0
        %v2406 = vsel %vm2401, %v2396, 0
        %2408 = vmatprep.subr.mxu0 0.0
        %2409 = vmatpush1.msra.mxu0 %v2397
        %2410 = vmatprep.subr.mxu0 0.0
        %2411 = vmatpush1.msra.mxu0 %v2398
        %2412 = vmatprep.subr.mxu0 0.0
        %2413 = vmatpush1.msra.mxu0 %v2399
        %2414 = vmatprep.subr.mxu0 0.0
        %2415 = vmatpush1.msra.mxu0 %v2400
        %2416 = vmatprep.subr.mxu0 0.0
        %2417 = vmatpush1.msra.mxu0 0.0
        %2418 = vmatprep.subr.mxu0 0.0
        %2419 = vmatpush1.msra.mxu0 0.0
        %2420 = vmatprep.subr.mxu0 0.0
        %2421 = vmatpush1.msra.mxu0 0.0
        %2422 = vmatprep.subr.mxu0 0.0
        %2423 = vmatpush1.msra.mxu0 0.0
        %2424 = vmatprep.subr.mxu0 0.0
        %2425 = vmatpush1.msra.mxu0 0.0
        %2426 = vmatprep.subr.mxu0 0.0
        %2427 = vmatpush1.msra.mxu0 0.0
        %2428 = vmatprep.subr.mxu0 0.0
        %2429 = vmatpush1.msra.mxu0 0.0
        %2430 = vmatprep.subr.mxu0 0.0
        %2431 = vmatpush1.msra.mxu0 0.0
        %2432 = vmatprep.subr.mxu0 0.0
        %2433 = vmatpush1.msra.mxu0 0.0
        %2434 = vmatprep.subr.mxu0 0.0
        %2435 = vmatpush1.msra.mxu0 0.0
        %2436 = vmatprep.subr.mxu0 0.0
        %2437 = vmatpush1.msra.mxu0 0.0
        %2438 = vmatprep.subr.mxu0 0.0
        %2439 = vmatpush1.msra.mxu0 0.0
        %2440 = vmatprep.subr.mxu0 0.0
        %2441 = vmatpush1.msra.mxu0 0.0
        %2442 = vmatprep.subr.mxu0 0.0
        %2443 = vmatpush1.msra.mxu0 0.0
        %2444 = vmatprep.subr.mxu0 0.0
        %2445 = vmatpush1.msra.mxu0 0.0
        %2446 = vmatprep.subr.mxu0 0.0
        %2447 = vmatpush1.msra.mxu0 0.0
        %2448 = vmatprep.subr.mxu0 0.0
        %2449 = vmatpush1.msra.mxu0 0.0
        %2450 = vmatprep.subr.mxu0 0.0
        %2451 = vmatpush1.msra.mxu0 0.0
        %2452 = vmatprep.subr.mxu0 0.0
        %2453 = vmatpush1.msra.mxu0 0.0
        %2454 = vmatprep.subr.mxu0 0.0
        %2455 = vmatpush1.msra.mxu0 0.0
        %2456 = vmatprep.subr.mxu0 0.0
        %2457 = vmatpush1.msra.mxu0 0.0
        %2458 = vmatprep.subr.mxu0 0.0
        %2459 = vmatpush1.msra.mxu0 0.0
        %2460 = vmatprep.subr.mxu0 0.0
        %2461 = vmatpush1.msra.mxu0 0.0
        %2462 = vmatprep.subr.mxu0 0.0
        %2463 = vmatpush1.msra.mxu0 0.0
        %2464 = vmatprep.subr.mxu0 0.0
        %2465 = vmatpush1.msra.mxu0 0.0
        %2466 = vmatprep.subr.mxu0 0.0
        %2467 = vmatpush1.msra.mxu0 0.0
        %2468 = vmatprep.subr.mxu0 0.0
        %2469 = vmatpush1.msra.mxu0 0.0
        %2470 = vmatprep.subr.mxu0 0.0
        %2471 = vmatpush1.msra.mxu0 0.0
        %2472 = vmatprep.mubr.f32.mxu0 0.0
        %2473 = vmatmul.mubr.f32.gmra.mrb[0].mxu0 %v2403
        %v2474 = vpop.f32.mrb[0].mxu0
        %v2475 = vadd.f32 0.0, %v2474
        %v2476 = vpop.f32.mrb[0].mxu0
        %2477 = vmatprep.mubr.f32.mxu0 0.0
        %2478 = vmatmul.mubr.f32.gmra.mrb[0].mxu0 %v2406
        %v2479 = vpop.f32.mrb[0].mxu0
        %v2480 = vadd.f32 0.0, %v2479
        %v2481 = vpop.f32.mrb[0].mxu0
        %2482 = vdwg.mxu0
        %v2483 = vadd.f32 %v938, %v2475
        %v2484 = vadd.f32 %v939, %v2480
        %v2485 = vld [vmem:[%s685] sm:$0x1]
        %v2487 = vlaneseq
        %v2488 = vshrl.u32 %v2487, 7
        %v2489 = vsub.s32 0, %v2488
        %v2490 = vrot.slane %v2485, %v2489
        %v2492 = vadd.f32 %v2483, %v2490
        %v2493 = vadd.f32 %v2484, %v2490
        %v2494 = vld [vmem:[%s693] sm:$0x1]
        %v2495 = vld [vmem:[%s701] sm:$0x1]
        %2496 = vadd.xlane.f32.xlu0 %v2492
        %v2497 = vpop.xlane.xlu0 %2496
        %2498 = vadd.xlane.f32.xlu0 %v2493
        %v2499 = vpop.xlane.xlu0 %2498
        %v2500 = vmul.f32 %v2497, 0.0078125
        %v2501 = vmul.f32 %v2499, 0.0078125
        %v2502 = vsub.f32 %v2492, %v2500
        %v2503 = vsub.f32 %v2493, %v2501
        %v2504 = vmul.f32 %v2502, %v2502
        %v2505 = vmul.f32 %v2503, %v2503
        %2506 = vadd.xlane.f32.xlu0 %v2504
        %v2507 = vpop.xlane.xlu0 %2506
        %2508 = vadd.xlane.f32.xlu0 %v2505
        %v2509 = vpop.xlane.xlu0 %2508
        %v2510 = vmul.f32 %v2507, 0.0078125
        %v2511 = vmul.f32 %v2509, 0.0078125
        %v2512 = vadd.f32 %v2510, 1e-05
        %v2513 = vadd.f32 %v2511, 1e-05
        %v2514 = vrsqrt.pop %v2512
        %v2515 = vrsqrt.pop %v2513
        %v2516 = vmul.f32 %v2502, %v2514
        %v2517 = vmul.f32 %v2503, %v2515
        %v2519 = vlaneseq
        %v2520 = vshrl.u32 %v2519, 7
        %v2521 = vsub.s32 0, %v2520
        %v2522 = vrot.slane %v2494, %v2521
        %v2524 = vmul.f32 %v2516, %v2522
        %v2525 = vmul.f32 %v2517, %v2522
        %v2527 = vlaneseq
        %v2528 = vshrl.u32 %v2527, 7
        %v2529 = vsub.s32 0, %v2528
        %v2530 = vrot.slane %v2495, %v2529
        %v2532 = vadd.f32 %v2524, %v2530
        %v2533 = vadd.f32 %v2525, %v2530
        %v2534 = vpack.c.bf16 %v2533, %v2532
        %v2535 = vld [vmem:[%s710] sm:$0xff]
        %v2536 = vld [vmem:[%s710 + $0x8] sm:$0xff]
        %v2537 = vld [vmem:[%s710 + $0x10] sm:$0xff]
        %v2538 = vld [vmem:[%s710 + $0x18] sm:$0xff]
        %v2539 = vld [vmem:[%s710 + $0x20] sm:$0xff]
        %v2540 = vld [vmem:[%s710 + $0x28] sm:$0xff]
        %v2541 = vld [vmem:[%s710 + $0x30] sm:$0xff]
        %v2542 = vld [vmem:[%s710 + $0x38] sm:$0xff]
        %v2543 = vld [vmem:[%s710 + $0x40] sm:$0xff]
        %v2544 = vld [vmem:[%s710 + $0x48] sm:$0xff]
        %v2545 = vld [vmem:[%s710 + $0x50] sm:$0xff]
        %v2546 = vld [vmem:[%s710 + $0x58] sm:$0xff]
        %v2547 = vld [vmem:[%s710 + $0x60] sm:$0xff]
        %v2548 = vld [vmem:[%s710 + $0x68] sm:$0xff]
        %v2549 = vld [vmem:[%s710 + $0x70] sm:$0xff]
        %v2550 = vld [vmem:[%s710 + $0x78] sm:$0xff]
        %v2551 = vld [vmem:[%s710 + $0x80] sm:$0xff]
        %v2552 = vld [vmem:[%s710 + $0x88] sm:$0xff]
        %v2553 = vld [vmem:[%s710 + $0x90] sm:$0xff]
        %v2554 = vld [vmem:[%s710 + $0x98] sm:$0xff]
        %v2555 = vld [vmem:[%s710 + $0xa0] sm:$0xff]
        %v2556 = vld [vmem:[%s710 + $0xa8] sm:$0xff]
        %v2557 = vld [vmem:[%s710 + $0xb0] sm:$0xff]
        %v2558 = vld [vmem:[%s710 + $0xb8] sm:$0xff]
        %v2559 = vld [vmem:[%s710 + $0xc0] sm:$0xff]
        %v2560 = vld [vmem:[%s710 + $0xc8] sm:$0xff]
        %v2561 = vld [vmem:[%s710 + $0xd0] sm:$0xff]
        %v2562 = vld [vmem:[%s710 + $0xd8] sm:$0xff]
        %v2563 = vld [vmem:[%s710 + $0xe0] sm:$0xff]
        %v2564 = vld [vmem:[%s710 + $0xe8] sm:$0xff]
        %v2565 = vld [vmem:[%s710 + $0xf0] sm:$0xff]
        %v2566 = vld [vmem:[%s710 + $0xf8] sm:$0xff]
        %v2567 = vld [vmem:[%s719] sm:$0xf]
        %v2569 = vlaneseq
        %v2570 = vshrl.u32 %v2569, 7
        %v2571 = vsub.s32 0, %v2570
        %v2572 = vrot.slane %v2567, %v2571
        %v2573 = vlaneseq
        %v2574 = vshrl.u32 %v2573, 7
        %v2575 = vsub.s32 1, %v2574
        %v2576 = vrot.slane %v2567, %v2575
        %v2577 = vlaneseq
        %v2578 = vshrl.u32 %v2577, 7
        %v2579 = vsub.s32 2, %v2578
        %v2580 = vrot.slane %v2567, %v2579
        %v2581 = vlaneseq
        %v2582 = vshrl.u32 %v2581, 7
        %v2583 = vsub.s32 3, %v2582
        %v2584 = vrot.slane %v2567, %v2583
        %v2621 = vunpack.c.l.b16 %v2535
        %v2622 = vunpack.c.h.b16 %v2535
        %v2623 = vunpack.c.l.b16 %v2536
        %v2624 = vunpack.c.h.b16 %v2536
        %v2625 = vunpack.c.l.b16 %v2537
        %v2626 = vunpack.c.h.b16 %v2537
        %v2627 = vunpack.c.l.b16 %v2538
        %v2628 = vunpack.c.h.b16 %v2538
        %v2629 = vunpack.c.l.b16 %v2539
        %v2630 = vunpack.c.h.b16 %v2539
        %v2631 = vunpack.c.l.b16 %v2540
        %v2632 = vunpack.c.h.b16 %v2540
        %v2633 = vunpack.c.l.b16 %v2541
        %v2634 = vunpack.c.h.b16 %v2541
        %v2635 = vunpack.c.l.b16 %v2542
        %v2636 = vunpack.c.h.b16 %v2542
        %v2637 = vunpack.c.l.b16 %v2543
        %v2638 = vunpack.c.h.b16 %v2543
        %v2639 = vunpack.c.l.b16 %v2544
        %v2640 = vunpack.c.h.b16 %v2544
        %v2641 = vunpack.c.l.b16 %v2545
        %v2642 = vunpack.c.h.b16 %v2545
        %v2643 = vunpack.c.l.b16 %v2546
        %v2644 = vunpack.c.h.b16 %v2546
        %v2645 = vunpack.c.l.b16 %v2547
        %v2646 = vunpack.c.h.b16 %v2547
        %v2647 = vunpack.c.l.b16 %v2548
        %v2648 = vunpack.c.h.b16 %v2548
        %v2649 = vunpack.c.l.b16 %v2549
        %v2650 = vunpack.c.h.b16 %v2549
        %v2651 = vunpack.c.l.b16 %v2550
        %v2652 = vunpack.c.h.b16 %v2550
        %v2653 = vunpack.c.l.b16 %v2551
        %v2654 = vunpack.c.h.b16 %v2551
        %v2655 = vunpack.c.l.b16 %v2552
        %v2656 = vunpack.c.h.b16 %v2552
        %v2657 = vunpack.c.l.b16 %v2553
        %v2658 = vunpack.c.h.b16 %v2553
        %v2659 = vunpack.c.l.b16 %v2554
        %v2660 = vunpack.c.h.b16 %v2554
        %v2661 = vunpack.c.l.b16 %v2555
        %v2662 = vunpack.c.h.b16 %v2555
        %v2663 = vunpack.c.l.b16 %v2556
        %v2664 = vunpack.c.h.b16 %v2556
        %v2665 = vunpack.c.l.b16 %v2557
        %v2666 = vunpack.c.h.b16 %v2557
        %v2667 = vunpack.c.l.b16 %v2558
        %v2668 = vunpack.c.h.b16 %v2558
        %v2669 = vunpack.c.l.b16 %v2559
        %v2670 = vunpack.c.h.b16 %v2559
        %v2671 = vunpack.c.l.b16 %v2560
        %v2672 = vunpack.c.h.b16 %v2560
        %v2673 = vunpack.c.l.b16 %v2561
        %v2674 = vunpack.c.h.b16 %v2561
        %v2675 = vunpack.c.l.b16 %v2562
        %v2676 = vunpack.c.h.b16 %v2562
        %v2677 = vunpack.c.l.b16 %v2563
        %v2678 = vunpack.c.h.b16 %v2563
        %v2679 = vunpack.c.l.b16 %v2564
        %v2680 = vunpack.c.h.b16 %v2564
        %v2681 = vunpack.c.l.b16 %v2565
        %v2682 = vunpack.c.h.b16 %v2565
        %v2683 = vunpack.c.l.b16 %v2566
        %v2684 = vunpack.c.h.b16 %v2566
        %v2685 = vpack.c.b16 %v2625, %v2621
        %v2686 = vpack.c.b16 %v2626, %v2622
        %v2687 = vpack.c.b16 %v2627, %v2623
        %v2688 = vpack.c.b16 %v2628, %v2624
        %v2689 = vpack.c.b16 %v2633, %v2629
        %v2690 = vpack.c.b16 %v2634, %v2630
        %v2691 = vpack.c.b16 %v2635, %v2631
        %v2692 = vpack.c.b16 %v2636, %v2632
        %v2693 = vpack.c.b16 %v2641, %v2637
        %v2694 = vpack.c.b16 %v2642, %v2638
        %v2695 = vpack.c.b16 %v2643, %v2639
        %v2696 = vpack.c.b16 %v2644, %v2640
        %v2697 = vpack.c.b16 %v2649, %v2645
        %v2698 = vpack.c.b16 %v2650, %v2646
        %v2699 = vpack.c.b16 %v2651, %v2647
        %v2700 = vpack.c.b16 %v2652, %v2648
        %v2701 = vpack.c.b16 %v2657, %v2653
        %v2702 = vpack.c.b16 %v2658, %v2654
        %v2703 = vpack.c.b16 %v2659, %v2655
        %v2704 = vpack.c.b16 %v2660, %v2656
        %v2705 = vpack.c.b16 %v2665, %v2661
        %v2706 = vpack.c.b16 %v2666, %v2662
        %v2707 = vpack.c.b16 %v2667, %v2663
        %v2708 = vpack.c.b16 %v2668, %v2664
        %v2709 = vpack.c.b16 %v2673, %v2669
        %v2710 = vpack.c.b16 %v2674, %v2670
        %v2711 = vpack.c.b16 %v2675, %v2671
        %v2712 = vpack.c.b16 %v2676, %v2672
        %v2713 = vpack.c.b16 %v2681, %v2677
        %v2714 = vpack.c.b16 %v2682, %v2678
        %v2715 = vpack.c.b16 %v2683, %v2679
        %v2716 = vpack.c.b16 %v2684, %v2680
        %2749 = vmatprep.subr.bf16.mxu0 %v2686
        %2750 = vmatpush1.bf16.msra.mxu0 %v2685
        %2751 = vmatprep.subr.bf16.mxu0 %v2690
        %2752 = vmatpush1.bf16.msra.mxu0 %v2689
        %2753 = vmatprep.subr.bf16.mxu0 %v2694
        %2754 = vmatpush1.bf16.msra.mxu0 %v2693
        %2755 = vmatprep.subr.bf16.mxu0 %v2698
        %2756 = vmatpush1.bf16.msra.mxu0 %v2697
        %2757 = vmatprep.subr.bf16.mxu0 %v2702
        %2758 = vmatpush1.bf16.msra.mxu0 %v2701
        %2759 = vmatprep.subr.bf16.mxu0 %v2706
        %2760 = vmatpush1.bf16.msra.mxu0 %v2705
        %2761 = vmatprep.subr.bf16.mxu0 %v2710
        %2762 = vmatpush1.bf16.msra.mxu0 %v2709
        %2763 = vmatprep.subr.bf16.mxu0 %v2714
        %2764 = vmatpush1.bf16.msra.mxu0 %v2713
        %2765 = vmatprep.subr.bf16.mxu0 0
        %2766 = vmatpush1.bf16.msra.mxu0 0
        %2767 = vmatprep.subr.bf16.mxu0 0
        %2768 = vmatpush1.bf16.msra.mxu0 0
        %2769 = vmatprep.subr.bf16.mxu0 0
        %2770 = vmatpush1.bf16.msra.mxu0 0
        %2771 = vmatprep.subr.bf16.mxu0 0
        %2772 = vmatpush1.bf16.msra.mxu0 0
        %2773 = vmatprep.subr.bf16.mxu0 0
        %2774 = vmatpush1.bf16.msra.mxu0 0
        %2775 = vmatprep.subr.bf16.mxu0 0
        %2776 = vmatpush1.bf16.msra.mxu0 0
        %2777 = vmatprep.subr.bf16.mxu0 0
        %2778 = vmatpush1.bf16.msra.mxu0 0
        %2779 = vmatprep.subr.bf16.mxu0 0
        %2780 = vmatpush1.bf16.msra.mxu0 0
        %2781 = vmatprep.mubr.bf16.mxu0 0
        %2782 = vmatmul.mubr.bf16.gmra.mrb[0].mxu0 %v2534
        %v2783 = vpop.f32.mrb[0].mxu0
        %v2784 = vadd.f32 %v2572, %v2783
        %v2785 = vpop.f32.mrb[0].mxu0
        %v2786 = vadd.f32 %v2576, %v2785
        %v2787 = vpop.f32.mrb[0].mxu0
        %v2788 = vadd.f32 %v2572, %v2787
        %v2789 = vpop.f32.mrb[0].mxu0
        %v2790 = vadd.f32 %v2576, %v2789
        %2791 = vdwg.mxu0
        %2792 = vmatprep.subr.bf16.mxu0 %v2688
        %2793 = vmatpush1.bf16.msra.mxu0 %v2687
        %2794 = vmatprep.subr.bf16.mxu0 %v2692
        %2795 = vmatpush1.bf16.msra.mxu0 %v2691
        %2796 = vmatprep.subr.bf16.mxu0 %v2696
        %2797 = vmatpush1.bf16.msra.mxu0 %v2695
        %2798 = vmatprep.subr.bf16.mxu0 %v2700
        %2799 = vmatpush1.bf16.msra.mxu0 %v2699
        %2800 = vmatprep.subr.bf16.mxu0 %v2704
        %2801 = vmatpush1.bf16.msra.mxu0 %v2703
        %2802 = vmatprep.subr.bf16.mxu0 %v2708
        %2803 = vmatpush1.bf16.msra.mxu0 %v2707
        %2804 = vmatprep.subr.bf16.mxu0 %v2712
        %2805 = vmatpush1.bf16.msra.mxu0 %v2711
        %2806 = vmatprep.subr.bf16.mxu0 %v2716
        %2807 = vmatpush1.bf16.msra.mxu0 %v2715
        %2808 = vmatprep.subr.bf16.mxu0 0
        %2809 = vmatpush1.bf16.msra.mxu0 0
        %2810 = vmatprep.subr.bf16.mxu0 0
        %2811 = vmatpush1.bf16.msra.mxu0 0
        %2812 = vmatprep.subr.bf16.mxu0 0
        %2813 = vmatpush1.bf16.msra.mxu0 0
        %2814 = vmatprep.subr.bf16.mxu0 0
        %2815 = vmatpush1.bf16.msra.mxu0 0
        %2816 = vmatprep.subr.bf16.mxu0 0
        %2817 = vmatpush1.bf16.msra.mxu0 0
        %2818 = vmatprep.subr.bf16.mxu0 0
        %2819 = vmatpush1.bf16.msra.mxu0 0
        %2820 = vmatprep.subr.bf16.mxu0 0
        %2821 = vmatpush1.bf16.msra.mxu0 0
        %2822 = vmatprep.subr.bf16.mxu0 0
        %2823 = vmatpush1.bf16.msra.mxu0 0
        %2824 = vmatprep.mubr.bf16.mxu0 0
        %2825 = vmatmul.mubr.bf16.gmra.mrb[0].mxu0 %v2534
        %v2826 = vpop.f32.mrb[0].mxu0
        %v2827 = vadd.f32 %v2580, %v2826
        %v2828 = vpop.f32.mrb[0].mxu0
        %v2829 = vadd.f32 %v2584, %v2828
        %v2830 = vpop.f32.mrb[0].mxu0
        %v2831 = vadd.f32 %v2580, %v2830
        %v2832 = vpop.f32.mrb[0].mxu0
        %v2833 = vadd.f32 %v2584, %v2832
        %2834 = vdwg.mxu0
        %v2835 = vmul.f32 %v2784, 0.5
        %v2836 = vmul.f32 %v2786, 0.5
        %v2837 = vmul.f32 %v2827, 0.5
        %v2838 = vmul.f32 %v2829, 0.5
        %v2839 = vmul.f32 %v2788, 0.5
        %v2840 = vmul.f32 %v2790, 0.5
        %v2841 = vmul.f32 %v2831, 0.5
        %v2842 = vmul.f32 %v2833, 0.5
        %v2843 = vmul.f32 %v2784, 0.70710677
        %v2844 = vmul.f32 %v2786, 0.70710677
        %v2845 = vmul.f32 %v2827, 0.70710677
        %v2846 = vmul.f32 %v2829, 0.70710677
        %v2847 = vmul.f32 %v2788, 0.70710677
        %v2848 = vmul.f32 %v2790, 0.70710677
        %v2849 = vmul.f32 %v2831, 0.70710677
        %v2850 = vmul.f32 %v2833, 0.70710677
        %v2851 = verf.f32.pop %v2843
        %v2852 = verf.f32.pop %v2844
        %v2853 = verf.f32.pop %v2845
        %v2854 = verf.f32.pop %v2846
        %v2855 = verf.f32.pop %v2847
        %v2856 = verf.f32.pop %v2848
        %v2857 = verf.f32.pop %v2849
        %v2858 = verf.f32.pop %v2850
        %v2859 = vadd.f32 %v2851, 1.0
        %v2860 = vadd.f32 %v2852, 1.0
        %v2861 = vadd.f32 %v2853, 1.0
        %v2862 = vadd.f32 %v2854, 1.0
        %v2863 = vadd.f32 %v2855, 1.0
        %v2864 = vadd.f32 %v2856, 1.0
        %v2865 = vadd.f32 %v2857, 1.0
        %v2866 = vadd.f32 %v2858, 1.0
        %v2867 = vmul.f32 %v2835, %v2859
        %v2868 = vmul.f32 %v2836, %v2860
        %v2869 = vmul.f32 %v2837, %v2861
        %v2870 = vmul.f32 %v2838, %v2862
        %v2871 = vmul.f32 %v2839, %v2863
        %v2872 = vmul.f32 %v2840, %v2864
        %v2873 = vmul.f32 %v2841, %v2865
        %v2874 = vmul.f32 %v2842, %v2866
        %v2875 = vpack.c.bf16 %v2871, %v2867
        %v2876 = vpack.c.bf16 %v2872, %v2868
        %v2877 = vpack.c.bf16 %v2873, %v2869
        %v2878 = vpack.c.bf16 %v2874, %v2870
        %v2879 = vld [vmem:[%s819] sm:$0xf]
        %v2880 = vld [vmem:[%s819 + $0x4] sm:$0xf]
        %v2881 = vld [vmem:[%s819 + $0x8] sm:$0xf]
        %v2882 = vld [vmem:[%s819 + $0xc] sm:$0xf]
        %v2883 = vld [vmem:[%s819 + $0x10] sm:$0xf]
        %v2884 = vld [vmem:[%s819 + $0x14] sm:$0xf]
        %v2885 = vld [vmem:[%s819 + $0x18] sm:$0xf]
        %v2886 = vld [vmem:[%s819 + $0x1c] sm:$0xf]
        %v2887 = vld [vmem:[%s819 + $0x20] sm:$0xf]
        %v2888 = vld [vmem:[%s819 + $0x24] sm:$0xf]
        %v2889 = vld [vmem:[%s819 + $0x28] sm:$0xf]
        %v2890 = vld [vmem:[%s819 + $0x2c] sm:$0xf]
        %v2891 = vld [vmem:[%s819 + $0x30] sm:$0xf]
        %v2892 = vld [vmem:[%s819 + $0x34] sm:$0xf]
        %v2893 = vld [vmem:[%s819 + $0x38] sm:$0xf]
        %v2894 = vld [vmem:[%s819 + $0x3c] sm:$0xf]
        %v2895 = vld [vmem:[%s819 + $0x40] sm:$0xf]
        %v2896 = vld [vmem:[%s819 + $0x44] sm:$0xf]
        %v2897 = vld [vmem:[%s819 + $0x48] sm:$0xf]
        %v2898 = vld [vmem:[%s819 + $0x4c] sm:$0xf]
        %v2899 = vld [vmem:[%s819 + $0x50] sm:$0xf]
        %v2900 = vld [vmem:[%s819 + $0x54] sm:$0xf]
        %v2901 = vld [vmem:[%s819 + $0x58] sm:$0xf]
        %v2902 = vld [vmem:[%s819 + $0x5c] sm:$0xf]
        %v2903 = vld [vmem:[%s819 + $0x60] sm:$0xf]
        %v2904 = vld [vmem:[%s819 + $0x64] sm:$0xf]
        %v2905 = vld [vmem:[%s819 + $0x68] sm:$0xf]
        %v2906 = vld [vmem:[%s819 + $0x6c] sm:$0xf]
        %v2907 = vld [vmem:[%s819 + $0x70] sm:$0xf]
        %v2908 = vld [vmem:[%s819 + $0x74] sm:$0xf]
        %v2909 = vld [vmem:[%s819 + $0x78] sm:$0xf]
        %v2910 = vld [vmem:[%s819 + $0x7c] sm:$0xf]
        %v2911 = vld [vmem:[%s819 + $0x80] sm:$0xf]
        %v2912 = vld [vmem:[%s819 + $0x84] sm:$0xf]
        %v2913 = vld [vmem:[%s819 + $0x88] sm:$0xf]
        %v2914 = vld [vmem:[%s819 + $0x8c] sm:$0xf]
        %v2915 = vld [vmem:[%s819 + $0x90] sm:$0xf]
        %v2916 = vld [vmem:[%s819 + $0x94] sm:$0xf]
        %v2917 = vld [vmem:[%s819 + $0x98] sm:$0xf]
        %v2918 = vld [vmem:[%s819 + $0x9c] sm:$0xf]
        %v2919 = vld [vmem:[%s819 + $0xa0] sm:$0xf]
        %v2920 = vld [vmem:[%s819 + $0xa4] sm:$0xf]
        %v2921 = vld [vmem:[%s819 + $0xa8] sm:$0xf]
        %v2922 = vld [vmem:[%s819 + $0xac] sm:$0xf]
        %v2923 = vld [vmem:[%s819 + $0xb0] sm:$0xf]
        %v2924 = vld [vmem:[%s819 + $0xb4] sm:$0xf]
        %v2925 = vld [vmem:[%s819 + $0xb8] sm:$0xf]
        %v2926 = vld [vmem:[%s819 + $0xbc] sm:$0xf]
        %v2927 = vld [vmem:[%s819 + $0xc0] sm:$0xf]
        %v2928 = vld [vmem:[%s819 + $0xc4] sm:$0xf]
        %v2929 = vld [vmem:[%s819 + $0xc8] sm:$0xf]
        %v2930 = vld [vmem:[%s819 + $0xcc] sm:$0xf]
        %v2931 = vld [vmem:[%s819 + $0xd0] sm:$0xf]
        %v2932 = vld [vmem:[%s819 + $0xd4] sm:$0xf]
        %v2933 = vld [vmem:[%s819 + $0xd8] sm:$0xf]
        %v2934 = vld [vmem:[%s819 + $0xdc] sm:$0xf]
        %v2935 = vld [vmem:[%s819 + $0xe0] sm:$0xf]
        %v2936 = vld [vmem:[%s819 + $0xe4] sm:$0xf]
        %v2937 = vld [vmem:[%s819 + $0xe8] sm:$0xf]
        %v2938 = vld [vmem:[%s819 + $0xec] sm:$0xf]
        %v2939 = vld [vmem:[%s819 + $0xf0] sm:$0xf]
        %v2940 = vld [vmem:[%s819 + $0xf4] sm:$0xf]
        %v2941 = vld [vmem:[%s819 + $0xf8] sm:$0xf]
        %v2942 = vld [vmem:[%s819 + $0xfc] sm:$0xf]
        %v3007 = vunpack.c.l.b16 %v2879
        %v3008 = vunpack.c.l.b16 %v2880
        %v3009 = vunpack.c.l.b16 %v2881
        %v3010 = vunpack.c.l.b16 %v2882
        %v3011 = vunpack.c.l.b16 %v2883
        %v3012 = vunpack.c.l.b16 %v2884
        %v3013 = vunpack.c.l.b16 %v2885
        %v3014 = vunpack.c.l.b16 %v2886
        %v3015 = vunpack.c.l.b16 %v2887
        %v3016 = vunpack.c.l.b16 %v2888
        %v3017 = vunpack.c.l.b16 %v2889
        %v3018 = vunpack.c.l.b16 %v2890
        %v3019 = vunpack.c.l.b16 %v2891
        %v3020 = vunpack.c.l.b16 %v2892
        %v3021 = vunpack.c.l.b16 %v2893
        %v3022 = vunpack.c.l.b16 %v2894
        %v3023 = vunpack.c.l.b16 %v2895
        %v3024 = vunpack.c.l.b16 %v2896
        %v3025 = vunpack.c.l.b16 %v2897
        %v3026 = vunpack.c.l.b16 %v2898
        %v3027 = vunpack.c.l.b16 %v2899
        %v3028 = vunpack.c.l.b16 %v2900
        %v3029 = vunpack.c.l.b16 %v2901
        %v3030 = vunpack.c.l.b16 %v2902
        %v3031 = vunpack.c.l.b16 %v2903
        %v3032 = vunpack.c.l.b16 %v2904
        %v3033 = vunpack.c.l.b16 %v2905
        %v3034 = vunpack.c.l.b16 %v2906
        %v3035 = vunpack.c.l.b16 %v2907
        %v3036 = vunpack.c.l.b16 %v2908
        %v3037 = vunpack.c.l.b16 %v2909
        %v3038 = vunpack.c.l.b16 %v2910
        %v3039 = vunpack.c.l.b16 %v2911
        %v3040 = vunpack.c.l.b16 %v2912
        %v3041 = vunpack.c.l.b16 %v2913
        %v3042 = vunpack.c.l.b16 %v2914
        %v3043 = vunpack.c.l.b16 %v2915
        %v3044 = vunpack.c.l.b16 %v2916
        %v3045 = vunpack.c.l.b16 %v2917
        %v3046 = vunpack.c.l.b16 %v2918
        %v3047 = vunpack.c.l.b16 %v2919
        %v3048 = vunpack.c.l.b16 %v2920
        %v3049 = vunpack.c.l.b16 %v2921
        %v3050 = vunpack.c.l.b16 %v2922
        %v3051 = vunpack.c.l.b16 %v2923
        %v3052 = vunpack.c.l.b16 %v2924
        %v3053 = vunpack.c.l.b16 %v2925
        %v3054 = vunpack.c.l.b16 %v2926
        %v3055 = vunpack.c.l.b16 %v2927
        %v3056 = vunpack.c.l.b16 %v2928
        %v3057 = vunpack.c.l.b16 %v2929
        %v3058 = vunpack.c.l.b16 %v2930
        %v3059 = vunpack.c.l.b16 %v2931
        %v3060 = vunpack.c.l.b16 %v2932
        %v3061 = vunpack.c.l.b16 %v2933
        %v3062 = vunpack.c.l.b16 %v2934
        %v3063 = vunpack.c.l.b16 %v2935
        %v3064 = vunpack.c.l.b16 %v2936
        %v3065 = vunpack.c.l.b16 %v2937
        %v3066 = vunpack.c.l.b16 %v2938
        %v3067 = vunpack.c.l.b16 %v2939
        %v3068 = vunpack.c.l.b16 %v2940
        %v3069 = vunpack.c.l.b16 %v2941
        %v3070 = vunpack.c.l.b16 %v2942
        %v3071 = vpack.c.b16 %v3008, %v3007
        %v3072 = vpack.c.b16 %v3010, %v3009
        %v3073 = vpack.c.b16 %v3012, %v3011
        %v3074 = vpack.c.b16 %v3014, %v3013
        %v3075 = vpack.c.b16 %v3016, %v3015
        %v3076 = vpack.c.b16 %v3018, %v3017
        %v3077 = vpack.c.b16 %v3020, %v3019
        %v3078 = vpack.c.b16 %v3022, %v3021
        %v3079 = vpack.c.b16 %v3024, %v3023
        %v3080 = vpack.c.b16 %v3026, %v3025
        %v3081 = vpack.c.b16 %v3028, %v3027
        %v3082 = vpack.c.b16 %v3030, %v3029
        %v3083 = vpack.c.b16 %v3032, %v3031
        %v3084 = vpack.c.b16 %v3034, %v3033
        %v3085 = vpack.c.b16 %v3036, %v3035
        %v3086 = vpack.c.b16 %v3038, %v3037
        %v3087 = vpack.c.b16 %v3040, %v3039
        %v3088 = vpack.c.b16 %v3042, %v3041
        %v3089 = vpack.c.b16 %v3044, %v3043
        %v3090 = vpack.c.b16 %v3046, %v3045
        %v3091 = vpack.c.b16 %v3048, %v3047
        %v3092 = vpack.c.b16 %v3050, %v3049
        %v3093 = vpack.c.b16 %v3052, %v3051
        %v3094 = vpack.c.b16 %v3054, %v3053
        %v3095 = vpack.c.b16 %v3056, %v3055
        %v3096 = vpack.c.b16 %v3058, %v3057
        %v3097 = vpack.c.b16 %v3060, %v3059
        %v3098 = vpack.c.b16 %v3062, %v3061
        %v3099 = vpack.c.b16 %v3064, %v3063
        %v3100 = vpack.c.b16 %v3066, %v3065
        %v3101 = vpack.c.b16 %v3068, %v3067
        %v3102 = vpack.c.b16 %v3070, %v3069
        %3135 = vmatprep.subr.bf16.mxu0 0
        %3136 = vmatpush1.bf16.msra.mxu0 %v3071
        %3137 = vmatprep.subr.bf16.mxu0 0
        %3138 = vmatpush1.bf16.msra.mxu0 %v3072
        %3139 = vmatprep.subr.bf16.mxu0 0
        %3140 = vmatpush1.bf16.msra.mxu0 %v3073
        %3141 = vmatprep.subr.bf16.mxu0 0
        %3142 = vmatpush1.bf16.msra.mxu0 %v3074
        %3143 = vmatprep.subr.bf16.mxu0 0
        %3144 = vmatpush1.bf16.msra.mxu0 %v3075
        %3145 = vmatprep.subr.bf16.mxu0 0
        %3146 = vmatpush1.bf16.msra.mxu0 %v3076
        %3147 = vmatprep.subr.bf16.mxu0 0
        %3148 = vmatpush1.bf16.msra.mxu0 %v3077
        %3149 = vmatprep.subr.bf16.mxu0 0
        %3150 = vmatpush1.bf16.msra.mxu0 %v3078
        %3151 = vmatprep.subr.bf16.mxu0 0
        %3152 = vmatpush1.bf16.msra.mxu0 %v3079
        %3153 = vmatprep.subr.bf16.mxu0 0
        %3154 = vmatpush1.bf16.msra.mxu0 %v3080
        %3155 = vmatprep.subr.bf16.mxu0 0
        %3156 = vmatpush1.bf16.msra.mxu0 %v3081
        %3157 = vmatprep.subr.bf16.mxu0 0
        %3158 = vmatpush1.bf16.msra.mxu0 %v3082
        %3159 = vmatprep.subr.bf16.mxu0 0
        %3160 = vmatpush1.bf16.msra.mxu0 %v3083
        %3161 = vmatprep.subr.bf16.mxu0 0
        %3162 = vmatpush1.bf16.msra.mxu0 %v3084
        %3163 = vmatprep.subr.bf16.mxu0 0
        %3164 = vmatpush1.bf16.msra.mxu0 %v3085
        %3165 = vmatprep.subr.bf16.mxu0 0
        %3166 = vmatpush1.bf16.msra.mxu0 %v3086
        %3167 = vmatprep.mubr.bf16.mxu0 %v2876
        %3168 = vmatmul.mubr.bf16.gmra.mrb[0].mxu0 %v2875
        %v3169 = vpop.f32.mrb[0].mxu0
        %v3170 = vadd.f32 0.0, %v3169
        %v3171 = vpop.f32.mrb[0].mxu0
        %v3172 = vpop.f32.mrb[0].mxu0
        %v3173 = vadd.f32 0.0, %v3172
        %v3174 = vpop.f32.mrb[0].mxu0
        %3175 = vdwg.mxu0
        %3176 = vmatprep.subr.bf16.mxu0 0
        %3177 = vmatpush1.bf16.msra.mxu0 %v3087
        %3178 = vmatprep.subr.bf16.mxu0 0
        %3179 = vmatpush1.bf16.msra.mxu0 %v3088
        %3180 = vmatprep.subr.bf16.mxu0 0
        %3181 = vmatpush1.bf16.msra.mxu0 %v3089
        %3182 = vmatprep.subr.bf16.mxu0 0
        %3183 = vmatpush1.bf16.msra.mxu0 %v3090
        %3184 = vmatprep.subr.bf16.mxu0 0
        %3185 = vmatpush1.bf16.msra.mxu0 %v3091
        %3186 = vmatprep.subr.bf16.mxu0 0
        %3187 = vmatpush1.bf16.msra.mxu0 %v3092
        %3188 = vmatprep.subr.bf16.mxu0 0
        %3189 = vmatpush1.bf16.msra.mxu0 %v3093
        %3190 = vmatprep.subr.bf16.mxu0 0
        %3191 = vmatpush1.bf16.msra.mxu0 %v3094
        %3192 = vmatprep.subr.bf16.mxu0 0
        %3193 = vmatpush1.bf16.msra.mxu0 %v3095
        %3194 = vmatprep.subr.bf16.mxu0 0
        %3195 = vmatpush1.bf16.msra.mxu0 %v3096
        %3196 = vmatprep.subr.bf16.mxu0 0
        %3197 = vmatpush1.bf16.msra.mxu0 %v3097
        %3198 = vmatprep.subr.bf16.mxu0 0
        %3199 = vmatpush1.bf16.msra.mxu0 %v3098
        %3200 = vmatprep.subr.bf16.mxu0 0
        %3201 = vmatpush1.bf16.msra.mxu0 %v3099
        %3202 = vmatprep.subr.bf16.mxu0 0
        %3203 = vmatpush1.bf16.msra.mxu0 %v3100
        %3204 = vmatprep.subr.bf16.mxu0 0
        %3205 = vmatpush1.bf16.msra.mxu0 %v3101
        %3206 = vmatprep.subr.bf16.mxu0 0
        %3207 = vmatpush1.bf16.msra.mxu0 %v3102
        %3208 = vmatprep.mubr.bf16.mxu0 %v2878
        %3209 = vmatmul.mubr.bf16.gmra.mrb[0].mxu0 %v2877
        %v3210 = vpop.f32.mrb[0].mxu0
        %v3211 = vadd.f32 %v3170, %v3210
        %v3212 = vpop.f32.mrb[0].mxu0
        %v3213 = vpop.f32.mrb[0].mxu0
        %v3214 = vadd.f32 %v3173, %v3213
        %v3215 = vpop.f32.mrb[0].mxu0
        %3216 = vdwg.mxu0
        %v3217 = vadd.f32 %v2492, %v3211
        %v3218 = vadd.f32 %v2493, %v3214
        %v3219 = vld [vmem:[%s822] sm:$0x1]
        %v3221 = vlaneseq
        %v3222 = vshrl.u32 %v3221, 7
        %v3223 = vsub.s32 0, %v3222
        %v3224 = vrot.slane %v3219, %v3223
        %v3226 = vadd.f32 %v3217, %v3224
        %v3227 = vadd.f32 %v3218, %v3224
        %3228 = vst [vmem:[#allocation2] sm:$0xff] %v3226
        %3229 = vst [vmem:[#allocation2 + $0x8] sm:$0xff] %v3227
        %p3230 = scmp.eq.s32.totalorder %s29, 1
        // Predicated region
        $region125: #{tpu_custom_call.1} parent=79 // pred_check
          %p3231 = pneg %p3230
        $region126: #{tpu_custom_call.1} parent=79 // pred_check_branch
          %3233 = sbr.rel (%p3231) target = $region128
        $region127: #{tpu_custom_call.1} parent=79 // pred_region
          %3234 = vst [vmem:[#allocation16] sm:$0xff] %v3226
          %3235 = vst [vmem:[#allocation16 + $0x8] sm:$0xff] %v3227
        $region128: #{tpu_custom_call.1} parent=79 // pred_fallthru
          _
        // Predicated region
        $region129: #{tpu_custom_call.1} parent=79 // pred_check
          %p3236 = pneg %p417
        $region130: #{tpu_custom_call.1} parent=79 // pred_check_branch
          %3238 = sbr.rel (%p3236) target = $region132
        $region131: #{tpu_custom_call.1} parent=79 // pred_region
          %s3240 = ssub.s32 256, 256
          %3241 = vsyncadd [#allocation5], %s3240
          %s3242 = sshll.u32 [#allocation16], 4
          %s3243 = int_to_ptr.vmem [resolvable:$true] %s3242
          %3248 = dma.vmem_to_hbm [thread:$0]  %s3243, 256, %s15, [#allocation5], 128, 128, 8
        $region132: #{tpu_custom_call.1} parent=79 // pred_fallthru
          _
        // Predicated region
        $region133: #{tpu_custom_call.1} parent=79 // pred_check
          %p3249 = pneg %p417
        $region134: #{tpu_custom_call.1} parent=79 // pred_check_branch
          %3251 = sbr.rel (%p3249) target = $region136
        $region135: #{tpu_custom_call.1} parent=79 // pred_region
          %3252 = dma.done [#allocation5], 256
        $region136: #{tpu_custom_call.1} parent=79 // pred_fallthru
          _
      $region80: #{tpu_custom_call.1} parent=5 // pred_fallthru
        _
      %p3253 = scmp.le.s32.totalorder 2, %s24
      // Predicated region
      $region137: #{tpu_custom_call.1} parent=5 // pred_check
        %p3254 = pneg %p3253
      $region138: #{tpu_custom_call.1} parent=5 // pred_check_branch
        %3256 = sbr.rel (%p3254) target = $region140
      $region139: #{tpu_custom_call.1} parent=5 // pred_region
        %s3257 = ssub.s32 %s24, 2
      $region140: #{tpu_custom_call.1} parent=5 // pred_fallthru
        _
    $region6: #{tpu_custom_call.1} parent=1 // loop_footer
      %s28 = sadd.s32 1, %s24
    $region7: #{tpu_custom_call.1} parent=1 // loop_footer_branch
      %23 = sbr.rel target = $region3
    $region8: #{tpu_custom_call.1} parent=1 // loop_exit
      _
    %3258 = vsyncpa [#allocation4], 1
    %s3259 = scalar_lea.sflag [#allocation4], 1
    %3260 = vsyncpa %s3259, 1
    %3261 = vsyncpa [#allocation7], 1
    %3262 = vsyncpa [#allocation5], 1
    %s3263 = scalar_lea.sflag [#allocation5], 1
    %3264 = vsyncpa %s3263, 1

</llo_original>
